<compile_context>
chip_gen: v5e
topology: v5e:2x2
jax: 0.10.0
libtpu: 0.0.40
codegen_flags: <defaults>
</compile_context>

<pallas_src>
import numpy as np
import jax
import jax.numpy as jnp
from jax.experimental import pallas as pl
from jax.experimental.pallas import tpu as pltpu

EPS = 1e-5
MXU_DTYPE = jnp.float32   # set to jnp.bfloat16 on v6e/v7x for ~1.5-2x on the matmul stages


# ------------------------------ small helpers -------------------------------

def pad_to(n, m=128):
    return max(m, ((n + m - 1) // m) * m)


def pad_cols(a, c):
    return a if a.shape[1] == c else jnp.pad(a, ((0, 0), (0, c - a.shape[1])))


def pad_mat(a, r, c):
    return jnp.pad(a, ((0, r - a.shape[0]), (0, c - a.shape[1])))


def pick_row_tile(m, max_tile=512):
    """Largest tile <= max_tile that divides m (keeps BN stats exact and edges unmasked)."""
    for t in (max_tile, 256, 128, 64, 32, 16, 8):
        if m % t == 0:
            return t
    return m


# ----------------------------- Pallas kernels ------------------------------

def make_bn_stats_kernel(m_rows):
    """Row-tiled accumulation of sum / sum-of-squares; finalizes per-channel scale/shift
    such that bn(x) = x * scale + shift (train-mode batch stats over all m_rows rows)."""
    inv_m = 1.0 / float(m_rows)

    def kernel(x_ref, gamma_ref, beta_ref, scale_ref, shift_ref, s_ref, q_ref):
        @pl.when(pl.program_id(0) == 0)
        def _():
            s_ref[...] = jnp.zeros_like(s_ref)
            q_ref[...] = jnp.zeros_like(q_ref)

        x = x_ref[...]
        s_ref[...] += jnp.sum(x, axis=0, keepdims=True)
        q_ref[...] += jnp.sum(x * x, axis=0, keepdims=True)

        @pl.when(pl.program_id(0) == pl.num_programs(0) - 1)
        def _():
            mean = s_ref[...] * inv_m
            var = jnp.maximum(q_ref[...] * inv_m - mean * mean, 0.0)   # biased (train-mode) var
            a = gamma_ref[...] * jax.lax.rsqrt(var + EPS)
            scale_ref[...] = a
            shift_ref[...] = beta_ref[...] - mean * a

    return kernel


def bn_relu_matmul_kernel(x_ref, scale_ref, shift_ref, w_ref, o_ref):
    """relu(x*scale + shift) @ w for one row tile (weights resident across the grid)."""
    act = jnp.maximum(x_ref[...] * scale_ref[...] + shift_ref[...], 0.0)
    o_ref[...] = jnp.dot(act.astype(w_ref.dtype), w_ref[...],
                         preferred_element_type=jnp.float32)


def bn_relu_matmul2_kernel(x_ref, scale_ref, shift_ref, w1_ref, w2_ref, o1_ref, o2_ref):
    """Fused conv1 + 1x1-shortcut: activation is read and BN+ReLU'd once, two matmuls."""
    act = jnp.maximum(x_ref[...] * scale_ref[...] + shift_ref[...], 0.0)
    a = act.astype(w1_ref.dtype)
    o1_ref[...] = jnp.dot(a, w1_ref[...], preferred_element_type=jnp.float32)
    o2_ref[...] = jnp.dot(a, w2_ref[...], preferred_element_type=jnp.float32)


def make_conv3x3_kernel(h, w):
    """3x3 conv (pad=1, stride=1) without im2col: BN2+ReLU+border-mask in-register, then
    9 shifted matmuls accumulated on the MXU.  One grid step per batch element."""
    hw = h * w

    def kernel(x_ref, scale_ref, shift_ref, mask_ref, w_ref, o_ref):
        x = x_ref[0]                                                  # (h+2, w+2, P) padded plane
        act = jnp.maximum(x * scale_ref[...] + shift_ref[...], 0.0) * mask_ref[...]
        p = act.shape[-1]
        cout = w_ref.shape[2]
        acc = jnp.zeros((hw, cout), jnp.float32)
        for u in range(3):
            for v in range(3):
                patch = act[u:u + h, v:v + w, :].reshape(hw, p)
                acc = acc + jnp.dot(patch.astype(w_ref.dtype), w_ref[u * 3 + v],
                                    preferred_element_type=jnp.float32)
        o_ref[0] = acc

    return kernel


def se_gate_kernel(x_ref, sev_ref, fc1_ref, fc2_ref, gate_ref, s_ref):
    """ENSE squeeze (folded pools+ShareGroupConvs = (1,HW) vector) + excitation, batched over B.
    Grid tiles the HW axis; the squeeze is accumulated, the fc's run once at the last step."""
    @pl.when(pl.program_id(0) == 0)
    def _():
        s_ref[...] = jnp.zeros_like(s_ref)

    s_ref[...] += jnp.sum(x_ref[...] * sev_ref[...], axis=1)          # (B, C)

    @pl.when(pl.program_id(0) == pl.num_programs(0) - 1)
    def _():
        s = s_ref[...].astype(fc1_ref.dtype)
        h = jnp.maximum(jnp.dot(s, fc1_ref[...], preferred_element_type=jnp.float32), 0.0)
        gate_ref[...] = jax.nn.sigmoid(
            jnp.dot(h.astype(fc2_ref.dtype), fc2_ref[...], preferred_element_type=jnp.float32))


def se_apply_kernel(x_ref, sc_ref, gate_ref, o_ref):
    """out = x * gate(broadcast over rows) + shortcut, row-tiled elementwise."""
    o_ref[...] = x_ref[...] * gate_ref[...] + sc_ref[...]


# ------------------------------ kernel wrappers -----------------------------

def bn_scale_shift(x, gamma, beta):
    m, c = x.shape
    tm = pick_row_tile(m)
    return pl.pallas_call(
        make_bn_stats_kernel(m),
        out_shape=(jax.ShapeDtypeStruct((1, c), jnp.float32),
                   jax.ShapeDtypeStruct((1, c), jnp.float32)),
        grid=(m // tm,),
        in_specs=[pl.BlockSpec((tm, c), lambda i: (i, 0)),
                  pl.BlockSpec((1, c), lambda i: (0, 0)),
                  pl.BlockSpec((1, c), lambda i: (0, 0))],
        out_specs=(pl.BlockSpec((1, c), lambda i: (0, 0)),
                   pl.BlockSpec((1, c), lambda i: (0, 0))),
        scratch_shapes=[pltpu.VMEM((1, c), jnp.float32),
                        pltpu.VMEM((1, c), jnp.float32)],
        compiler_params=pltpu.CompilerParams(dimension_semantics=("arbitrary",)),
    )(x, gamma, beta)


def bn_relu_matmul(x, scale, shift, w):
    m, cin = x.shape
    cout = w.shape[1]
    tm = pick_row_tile(m)
    return pl.pallas_call(
        bn_relu_matmul_kernel,
        out_shape=jax.ShapeDtypeStruct((m, cout), jnp.float32),
        grid=(m // tm,),
        in_specs=[pl.BlockSpec((tm, cin), lambda i: (i, 0)),
                  pl.BlockSpec((1, cin), lambda i: (0, 0)),
                  pl.BlockSpec((1, cin), lambda i: (0, 0)),
                  pl.BlockSpec((cin, cout), lambda i: (0, 0))],
        out_specs=pl.BlockSpec((tm, cout), lambda i: (i, 0)),
        compiler_params=pltpu.CompilerParams(dimension_semantics=("parallel",)),
    )(x, scale, shift, w)


def bn_relu_matmul2(x, scale, shift, w1, w2):
    m, cin = x.shape
    c1, c2 = w1.shape[1], w2.shape[1]
    tm = pick_row_tile(m)
    return pl.pallas_call(
        bn_relu_matmul2_kernel,
        out_shape=(jax.ShapeDtypeStruct((m, c1), jnp.float32),
                   jax.ShapeDtypeStruct((m, c2), jnp.float32)),
        grid=(m // tm,),
        in_specs=[pl.BlockSpec((tm, cin), lambda i: (i, 0)),
                  pl.BlockSpec((1, cin), lambda i: (0, 0)),
                  pl.BlockSpec((1, cin), lambda i: (0, 0)),
                  pl.BlockSpec((cin, c1), lambda i: (0, 0)),
                  pl.BlockSpec((cin, c2), lambda i: (0, 0))],
        out_specs=(pl.BlockSpec((tm, c1), lambda i: (i, 0)),
                   pl.BlockSpec((tm, c2), lambda i: (i, 0))),
        compiler_params=pltpu.CompilerParams(dimension_semantics=("parallel",)),
    )(x, scale, shift, w1, w2)


def conv3x3_bn_relu(x_pad, scale, shift, mask, w_taps):
    b, hp, wp, p = x_pad.shape
    h, w = hp - 2, wp - 2
    cout = w_taps.shape[2]
    hw = h * w
    return pl.pallas_call(
        make_conv3x3_kernel(h, w),
        out_shape=jax.ShapeDtypeStruct((b, hw, cout), jnp.float32),
        grid=(b,),
        in_specs=[pl.BlockSpec((1, hp, wp, p), lambda i: (i, 0, 0, 0)),
                  pl.BlockSpec((1, p), lambda i: (0, 0)),
                  pl.BlockSpec((1, p), lambda i: (0, 0)),
                  pl.BlockSpec((hp, wp, 1), lambda i: (0, 0, 0)),
                  pl.BlockSpec((9, p, cout), lambda i: (0, 0, 0))],
        out_specs=pl.BlockSpec((1, hw, cout), lambda i: (i, 0, 0)),
        compiler_params=pltpu.CompilerParams(dimension_semantics=("parallel",)),
    )(x_pad, scale, shift, mask, w_taps)


def se_gate(x3, se_vec, fc1, fc2):
    b, hw, c = x3.shape
    cr = fc1.shape[1]
    th = pick_row_tile(hw)
    return pl.pallas_call(
        se_gate_kernel,
        out_shape=jax.ShapeDtypeStruct((b, c), jnp.float32),
        grid=(hw // th,),
        in_specs=[pl.BlockSpec((b, th, c), lambda t: (0, t, 0)),
                  pl.BlockSpec((1, th, 1), lambda t: (0, t, 0)),
                  pl.BlockSpec((c, cr), lambda t: (0, 0)),
                  pl.BlockSpec((cr, c), lambda t: (0, 0))],
        out_specs=pl.BlockSpec((b, c), lambda t: (0, 0)),
        scratch_shapes=[pltpu.VMEM((b, c), jnp.float32)],
        compiler_params=pltpu.CompilerParams(dimension_semantics=("arbitrary",)),
    )(x3, se_vec, fc1, fc2)


def se_apply(x3, sc3, gate3):
    b, hw, c = x3.shape
    th = pick_row_tile(hw)
    return pl.pallas_call(
        se_apply_kernel,
        out_shape=jax.ShapeDtypeStruct((b, hw, c), jnp.float32),
        grid=(b, hw // th),
        in_specs=[pl.BlockSpec((1, th, c), lambda i, t: (i, t, 0)),
                  pl.BlockSpec((1, th, c), lambda i, t: (i, t, 0)),
                  pl.BlockSpec((1, 1, c), lambda i, t: (i, 0, 0))],
        out_specs=pl.BlockSpec((1, th, c), lambda i, t: (i, t, 0)),
        compiler_params=pltpu.CompilerParams(dimension_semantics=("parallel", "parallel")),
    )(x3, sc3, gate3)


# ------------------------------ glue (JAX / numpy) ---------------------------

def adaptive_pool_matrix(H, W, k):
    """Exact nn.AdaptiveAvgPool2d(k) expressed as a (k*k, H*W) averaging matrix."""
    def bins(n, kk):
        m = np.zeros((kk, n), dtype=np.float32)
        for i in range(kk):
            s = (i * n) // kk
            e = -((-(i + 1) * n) // kk)
            m[i, s:e] = 1.0 / (e - s)
        return m
    rh, rw = bins(H, k), bins(W, k)
    return np.einsum('ih,jw->ijhw', rh, rw).reshape(k * k, H * W)


def fold_sharegroupconv1(w1):
    """ShareGroupConv(3C->C, k=3, pad=0) on cat(up4(y1), up2(y2), y4) -> exact (4, 21) operator
    mapping [y1(1) | y2(2x2) | y4(4x4)] pooled rows to the 2x2 conv output (per channel)."""
    w1 = np.asarray(w1, dtype=np.float32)                    # (3, 3, 3): (group, ku, kv)
    A = np.zeros((4, 21), dtype=np.float32)
    for p_ in range(2):
        for q_ in range(2):
            r = p_ * 2 + q_
            A[r, 0] += float(w1[0].sum())                    # y1 map is constant over 4x4
            for u in range(3):
                for v in range(3):
                    A[r, 1 + ((p_ + u) // 2) * 2 + (q_ + v) // 2] += w1[1, u, v]   # nearest-up y2
                    A[r, 5 + (p_ + u) * 4 + (q_ + v)] += w1[2, u, v]               # y4
    return A


def fold_sharegroupconv2(w2):
    """ShareGroupConv(C->C, k=3, pad=1, stride=3) on a 2x2 map -> exact (1, 4) operator."""
    w2 = np.asarray(w2, dtype=np.float32)                    # (3, 3)
    return np.asarray([[w2[1, 1], w2[1, 2], w2[2, 1], w2[2, 2]]], dtype=np.float32)


def init_params(key, in_planes, planes, reduction=16):
    expansion = 4
    C4 = expansion * planes
    Cr = C4 // reduction
    ks = jax.random.split(key, 14)
    r = lambda k, shape, s=0.1: s * jax.random.normal(k, shape, dtype=jnp.float32)
    p = {
        'bn1_gamma': 1.0 + r(ks[0], (1, in_planes)),
        'bn1_beta': r(ks[1], (1, in_planes)),
        'conv1_w': r(ks[2], (planes, in_planes)),            # Conv2d(in_planes, planes, 1).weight squeezed
        'bn2_gamma': 1.0 + r(ks[3], (1, planes)),
        'bn2_beta': r(ks[4], (1, planes)),
        'conv2_w': r(ks[5], (planes, planes, 3, 3)),          # Conv2d(planes, planes, 3, pad=1).weight
        'bn3_gamma': 1.0 + r(ks[6], (1, planes)),
        'bn3_beta': r(ks[7], (1, planes)),
        'conv3_w': r(ks[8], (C4, planes)),                    # Conv2d(planes, 4*planes, 1).weight squeezed
        'shortcut_w': r(ks[9], (C4, in_planes)),              # Conv2d(in_planes, 4*planes, 1).weight squeezed
        'se_fc1_w': r(ks[10], (Cr, C4)),                      # Linear(C4, C4//16, bias=False).weight
        'se_fc2_w': r(ks[11], (C4, Cr)),                      # Linear(C4//16, C4, bias=False).weight
    }
    sgc1_w = r(ks[12], (3, 3, 3))                             # ShareGroupConv(3*C4, C4) kernel
    sgc2_w = r(ks[13], (3, 3))                                # ShareGroupConv(C4, C4) kernel
    p['se_sgc1_op'] = jnp.asarray(fold_sharegroupconv1(sgc1_w))   # (4, 21)
    p['se_sgc2_op'] = jnp.asarray(fold_sharegroupconv2(sgc2_w))   # (1, 4)
    return p


def preact_bottleneck_forward(x_nchw, p, stride=1):
    assert stride == 1  # TODO(synk): stride != 1 (strided conv2 + strided shortcut) not implemented
    B, Cin, H, W = x_nchw.shape
    planes = p['conv1_w'].shape[0]
    C4 = p['conv3_w'].shape[0]
    Cr = p['se_fc1_w'].shape[0]
    Cin_p, Pp, C4p, Crp = pad_to(Cin), pad_to(planes), pad_to(C4), pad_to(Cr)
    M, HW = B * H * W, H * W

    # channels-last activation matrix, channel-padded to a lane-dense 128 multiple
    x_mat = jnp.transpose(x_nchw, (0, 2, 3, 1)).reshape(M, Cin).astype(jnp.float32)
    x_mat = pad_cols(x_mat, Cin_p)

    # lane-dense padded weights (MXU operand dtype; zero padding keeps padded lanes exactly 0)
    w1 = pad_mat(p['conv1_w'].T.astype(MXU_DTYPE), Cin_p, Pp)
    w3 = pad_mat(p['conv3_w'].T.astype(MXU_DTYPE), Pp, C4p)
    w2_taps = jnp.stack([pad_mat(p['conv2_w'][:, :, u, v].T.astype(MXU_DTYPE), Pp, Pp)
                         for u in range(3) for v in range(3)], axis=0)           # (9, Pp, Pp)
    fc1 = pad_mat(p['se_fc1_w'].T.astype(MXU_DTYPE), C4p, Crp)
    fc2 = pad_mat(p['se_fc2_w'].T.astype(MXU_DTYPE), Crp, C4p)
    g1, b1 = pad_cols(p['bn1_gamma'], Cin_p), pad_cols(p['bn1_beta'], Cin_p)
    g2, b2 = pad_cols(p['bn2_gamma'], Pp), pad_cols(p['bn2_beta'], Pp)
    g3, b3 = pad_cols(p['bn3_gamma'], Pp), pad_cols(p['bn3_beta'], Pp)

    # stage 1: bn1 stats pass, then fused relu(bn1) -> {conv1, 1x1 shortcut} (x read once)
    s1, t1 = bn_scale_shift(x_mat, g1, b1)
    if Cin != C4:                                     # shortcut conv present (stride==1 here)
        wsc = pad_mat(p['shortcut_w'].T.astype(MXU_DTYPE), Cin_p, C4p)
        out1, shortcut = bn_relu_matmul2(x_mat, s1, t1, w1, wsc)
    else:                                             # identity shortcut (in_planes == 4*planes)
        out1 = bn_relu_matmul(x_mat, s1, t1, w1)
        shortcut = x_mat

    # stage 2: bn2 stats, then im2col-free 3x3 conv (bn2+relu+mask fused, 9 shifted matmuls)
    s2, t2 = bn_scale_shift(out1, g2, b2)
    x1p = jnp.pad(out1.reshape(B, H, W, Pp), ((0, 0), (1, 1), (1, 1), (0, 0)))
    mask = np.zeros((H + 2, W + 2, 1), np.float32)
    mask[1:H + 1, 1:W + 1, 0] = 1.0                   # padding is applied AFTER relu(bn2(.))
    out2 = conv3x3_bn_relu(x1p, s2, t2, jnp.asarray(mask), w2_taps).reshape(M, Pp)

    # stage 3: bn3 stats + fused relu(bn3) -> conv3
    s3, t3 = bn_scale_shift(out2, g3, b3)
    out3 = bn_relu_matmul(out2, s3, t3, w3)                                       # (M, C4p)

    # ENSE: fold avg-pools + both ShareGroupConvs into one exact (1, HW) squeeze vector
    pool = np.concatenate([adaptive_pool_matrix(H, W, 1),
                           adaptive_pool_matrix(H, W, 2),
                           adaptive_pool_matrix(H, W, 4)], axis=0)                # (21, HW)
    se_vec = (p['se_sgc2_op'] @ p['se_sgc1_op'] @ jnp.asarray(pool)).reshape(1, HW, 1)

    x3 = out3.reshape(B, HW, C4p)
    gate = se_gate(x3, se_vec, fc1, fc2)                                          # (B, C4p)
    out = se_apply(x3, shortcut.reshape(B, HW, C4p), gate.reshape(B, 1, C4p))     # (B, HW, C4p)

    out = out[:, :, :C4].reshape(B, H, W, C4)
    return jnp.transpose(out, (0, 3, 1, 2))                                       # back to NCHW


if __name__ == "__main__":
    key = jax.random.PRNGKey(0)
    k_param, k_x = jax.random.split(key)

    in_planes, planes, stride = 16, 8, 1          # PreActBottleneck(16, 8): expansion 4 -> 32 out channels
    B, H, W = 2, 8, 8

    params = init_params(k_param, in_planes, planes)
    x = jax.random.normal(k_x, (B, in_planes, H, W), dtype=jnp.float32)

    @jax.jit
    def run(xx, pp):
        return preact_bottleneck_forward(xx, pp, stride=1)

    y = jax.block_until_ready(run(x, params))

    assert y.shape == (B, 4 * planes, H, W), y.shape
    assert bool(jnp.isfinite(y).all())
    print("KERNEL_OK")
</pallas_src>

<mosaic_0001>
module attributes {stable_mosaic.version = 11 : i64} {
  func.func @kernel(%arg0: i32, %arg1: memref<128x128xf32, #tpu.memory_space<vmem>>, %arg2: memref<1x128xf32, #tpu.memory_space<vmem>>, %arg3: memref<1x128xf32, #tpu.memory_space<vmem>>, %arg4: memref<1x128xf32, #tpu.memory_space<vmem>>, %arg5: memref<1x128xf32, #tpu.memory_space<vmem>>, %arg6: memref<1x128xf32, #tpu.memory_space<vmem>>, %arg7: memref<1x128xf32, #tpu.memory_space<vmem>>) attributes {dimension_semantics = [#tpu.dimension_semantics<arbitrary>], iteration_bounds = array<i64: 1>, scalar_prefetch = 0 : i64, scratch_operands = 2 : i64, tpu.core_type = #tpu.core_type<tc>, window_params = [{transform_indices = @transform_0, window_bounds = array<i64: 128, 128>}, {pipeline_mode = #tpu.pipeline_mode<synchronous>, transform_indices = @transform_1, window_bounds = array<i64: 1, 128>}, {pipeline_mode = #tpu.pipeline_mode<synchronous>, transform_indices = @transform_2, window_bounds = array<i64: 1, 128>}, {pipeline_mode = #tpu.pipeline_mode<synchronous>, transform_indices = @transform_3, window_bounds = array<i64: 1, 128>}, {pipeline_mode = #tpu.pipeline_mode<synchronous>, transform_indices = @transform_4, window_bounds = array<i64: 1, 128>}]} {
    %c0_i32 = arith.constant 0 : i32
    %0 = arith.cmpi eq, %arg0, %c0_i32 : i32
    %1 = arith.extui %0 : i1 to i32
    %c0_i32_0 = arith.constant 0 : i32
    %2 = arith.cmpi ne, %1, %c0_i32_0 : i32
    scf.if %2 {
      %cst_13 = arith.constant 0.000000e+00 : f32
      %18 = vector.broadcast %cst_13 : f32 to vector<1x128xf32>
      %c0_14 = arith.constant 0 : index
      %c0_15 = arith.constant 0 : index
      %19 = vector.load %arg6[%c0_14, %c0_15] : memref<1x128xf32, #tpu.memory_space<vmem>>, vector<1x128xf32>
      tpu.vector_store %arg6[%c0_14, %c0_15], %18 {strides = array<i32>} : memref<1x128xf32, #tpu.memory_space<vmem>>, vector<1x128xf32>,
      %cst_16 = arith.constant 0.000000e+00 : f32
      %20 = vector.broadcast %cst_16 : f32 to vector<1x128xf32>
      %c0_17 = arith.constant 0 : index
      %c0_18 = arith.constant 0 : index
      %21 = vector.load %arg7[%c0_17, %c0_18] : memref<1x128xf32, #tpu.memory_space<vmem>>, vector<1x128xf32>
      tpu.vector_store %arg7[%c0_17, %c0_18], %20 {strides = array<i32>} : memref<1x128xf32, #tpu.memory_space<vmem>>, vector<1x128xf32>,
    } else {
    }
    %c0 = arith.constant 0 : index
    %c0_1 = arith.constant 0 : index
    %3 = vector.load %arg1[%c0, %c0_1] : memref<128x128xf32, #tpu.memory_space<vmem>>, vector<128x128xf32>
    %c0_2 = arith.constant 0 : index
    %c0_3 = arith.constant 0 : index
    %4 = vector.load %arg6[%c0_2, %c0_3] : memref<1x128xf32, #tpu.memory_space<vmem>>, vector<1x128xf32>
    %cst = arith.constant dense<0.000000e+00> : vector<128xf32>
    %5 = vector.multi_reduction <add>, %3, %cst [0] : vector<128x128xf32> to vector<128xf32>
    %6 = vector.shape_cast %5 : vector<128xf32> to vector<1x128xf32>
    %7 = arith.addf %4, %6 : vector<1x128xf32>
    %c0_4 = arith.constant 0 : index
    %c0_5 = arith.constant 0 : index
    %8 = vector.load %arg6[%c0_4, %c0_5] : memref<1x128xf32, #tpu.memory_space<vmem>>, vector<1x128xf32>
    tpu.vector_store %arg6[%c0_4, %c0_5], %7 {strides = array<i32>} : memref<1x128xf32, #tpu.memory_space<vmem>>, vector<1x128xf32>,
    %c0_6 = arith.constant 0 : index
    %c0_7 = arith.constant 0 : index
    %9 = vector.load %arg7[%c0_6, %c0_7] : memref<1x128xf32, #tpu.memory_space<vmem>>, vector<1x128xf32>
    %10 = arith.mulf %3, %3 : vector<128x128xf32>
    %cst_8 = arith.constant dense<0.000000e+00> : vector<128xf32>
    %11 = vector.multi_reduction <add>, %10, %cst_8 [0] : vector<128x128xf32> to vector<128xf32>
    %12 = vector.shape_cast %11 : vector<128xf32> to vector<1x128xf32>
    %13 = arith.addf %9, %12 : vector<1x128xf32>
    %c0_9 = arith.constant 0 : index
    %c0_10 = arith.constant 0 : index
    %14 = vector.load %arg7[%c0_9, %c0_10] : memref<1x128xf32, #tpu.memory_space<vmem>>, vector<1x128xf32>
    tpu.vector_store %arg7[%c0_9, %c0_10], %13 {strides = array<i32>} : memref<1x128xf32, #tpu.memory_space<vmem>>, vector<1x128xf32>,
    %c0_i32_11 = arith.constant 0 : i32
    %15 = arith.cmpi eq, %arg0, %c0_i32_11 : i32
    %16 = arith.extui %15 : i1 to i32
    %c0_i32_12 = arith.constant 0 : i32
    %17 = arith.cmpi ne, %16, %c0_i32_12 : i32
    scf.if %17 {
      %c0_13 = arith.constant 0 : index
      %c0_14 = arith.constant 0 : index
      %18 = vector.load %arg6[%c0_13, %c0_14] : memref<1x128xf32, #tpu.memory_space<vmem>>, vector<1x128xf32>
      %cst_15 = arith.constant 7.812500e-03 : f32
      %19 = vector.broadcast %cst_15 : f32 to vector<1x128xf32>
      %20 = arith.mulf %18, %19 : vector<1x128xf32>
      %c0_16 = arith.constant 0 : index
      %c0_17 = arith.constant 0 : index
      %21 = vector.load %arg7[%c0_16, %c0_17] : memref<1x128xf32, #tpu.memory_space<vmem>>, vector<1x128xf32>
      %cst_18 = arith.constant 7.812500e-03 : f32
      %22 = vector.broadcast %cst_18 : f32 to vector<1x128xf32>
      %23 = arith.mulf %21, %22 : vector<1x128xf32>
      %24 = arith.mulf %20, %20 : vector<1x128xf32>
      %25 = arith.subf %23, %24 : vector<1x128xf32>
      %cst_19 = arith.constant 0.000000e+00 : f32
      %26 = vector.broadcast %cst_19 : f32 to vector<1x128xf32>
      %27 = arith.maximumf %25, %26 : vector<1x128xf32>
      %c0_20 = arith.constant 0 : index
      %c0_21 = arith.constant 0 : index
      %28 = vector.load %arg2[%c0_20, %c0_21] : memref<1x128xf32, #tpu.memory_space<vmem>>, vector<1x128xf32>
      %cst_22 = arith.constant 9.99999974E-6 : f32
      %29 = vector.broadcast %cst_22 : f32 to vector<1x128xf32>
      %30 = arith.addf %27, %29 : vector<1x128xf32>
      %31 = math.rsqrt %30 : vector<1x128xf32>
      %32 = arith.mulf %28, %31 : vector<1x128xf32>
      %c0_23 = arith.constant 0 : index
      %c0_24 = arith.constant 0 : index
      %33 = vector.load %arg4[%c0_23, %c0_24] : memref<1x128xf32, #tpu.memory_space<vmem>>, vector<1x128xf32>
      tpu.vector_store %arg4[%c0_23, %c0_24], %32 {strides = array<i32>} : memref<1x128xf32, #tpu.memory_space<vmem>>, vector<1x128xf32>,
      %c0_25 = arith.constant 0 : index
      %c0_26 = arith.constant 0 : index
      %34 = vector.load %arg3[%c0_25, %c0_26] : memref<1x128xf32, #tpu.memory_space<vmem>>, vector<1x128xf32>
      %35 = arith.mulf %20, %32 : vector<1x128xf32>
      %36 = arith.subf %34, %35 : vector<1x128xf32>
      %c0_27 = arith.constant 0 : index
      %c0_28 = arith.constant 0 : index
      %37 = vector.load %arg5[%c0_27, %c0_28] : memref<1x128xf32, #tpu.memory_space<vmem>>, vector<1x128xf32>
      tpu.vector_store %arg5[%c0_27, %c0_28], %36 {strides = array<i32>} : memref<1x128xf32, #tpu.memory_space<vmem>>, vector<1x128xf32>,
    } else {
    }
    return
  }
  func.func @transform_0(%arg0: i32) -> (i32, i32) {
    %c0_i32 = arith.constant 0 : i32
    %c0_i32_0 = arith.constant 0 : i32
    return %arg0, %c0_i32 : i32, i32
  }
  func.func @transform_1(%arg0: i32) -> (i32, i32) {
    %c0_i32 = arith.constant 0 : i32
    %c0_i32_0 = arith.constant 0 : i32
    %c0_i32_1 = arith.constant 0 : i32
    return %c0_i32, %c0_i32_0 : i32, i32
  }
  func.func @transform_2(%arg0: i32) -> (i32, i32) {
    %c0_i32 = arith.constant 0 : i32
    %c0_i32_0 = arith.constant 0 : i32
    %c0_i32_1 = arith.constant 0 : i32
    return %c0_i32, %c0_i32_0 : i32, i32
  }
  func.func @transform_3(%arg0: i32) -> (i32, i32) {
    %c0_i32 = arith.constant 0 : i32
    %c0_i32_0 = arith.constant 0 : i32
    %c0_i32_1 = arith.constant 0 : i32
    return %c0_i32, %c0_i32_0 : i32, i32
  }
  func.func @transform_4(%arg0: i32) -> (i32, i32) {
    %c0_i32 = arith.constant 0 : i32
    %c0_i32_0 = arith.constant 0 : i32
    %c0_i32_1 = arith.constant 0 : i32
    return %c0_i32, %c0_i32_0 : i32, i32
  }
}

module attributes {stable_mosaic.version = 11 : i64} {
  func.func @bn_relu_matmul2_kernel(%arg0: i32, %arg1: memref<128x128xf32, #tpu.memory_space<vmem>>, %arg2: memref<1x128xf32, #tpu.memory_space<vmem>>, %arg3: memref<1x128xf32, #tpu.memory_space<vmem>>, %arg4: memref<128x128xf32, #tpu.memory_space<vmem>>, %arg5: memref<128x128xf32, #tpu.memory_space<vmem>>, %arg6: memref<128x128xf32, #tpu.memory_space<vmem>>, %arg7: memref<128x128xf32, #tpu.memory_space<vmem>>) attributes {dimension_semantics = [#tpu.dimension_semantics<parallel>], iteration_bounds = array<i64: 1>, scalar_prefetch = 0 : i64, scratch_operands = 0 : i64, tpu.core_type = #tpu.core_type<tc>, window_params = [{transform_indices = @transform_0, window_bounds = array<i64: 128, 128>}, {pipeline_mode = #tpu.pipeline_mode<synchronous>, transform_indices = @transform_1, window_bounds = array<i64: 1, 128>}, {pipeline_mode = #tpu.pipeline_mode<synchronous>, transform_indices = @transform_2, window_bounds = array<i64: 1, 128>}, {pipeline_mode = #tpu.pipeline_mode<synchronous>, transform_indices = @transform_3, window_bounds = array<i64: 128, 128>}, {pipeline_mode = #tpu.pipeline_mode<synchronous>, transform_indices = @transform_4, window_bounds = array<i64: 128, 128>}, {transform_indices = @transform_5, window_bounds = array<i64: 128, 128>}, {transform_indices = @transform_6, window_bounds = array<i64: 128, 128>}]} {
    %c0 = arith.constant 0 : index
    %c0_0 = arith.constant 0 : index
    %0 = vector.load %arg1[%c0, %c0_0] : memref<128x128xf32, #tpu.memory_space<vmem>>, vector<128x128xf32>
    %c0_1 = arith.constant 0 : index
    %c0_2 = arith.constant 0 : index
    %1 = vector.load %arg2[%c0_1, %c0_2] : memref<1x128xf32, #tpu.memory_space<vmem>>, vector<1x128xf32>
    %2 = vector.broadcast %1 : vector<1x128xf32> to vector<128x128xf32>
    %3 = arith.mulf %0, %2 : vector<128x128xf32>
    %c0_3 = arith.constant 0 : index
    %c0_4 = arith.constant 0 : index
    %4 = vector.load %arg3[%c0_3, %c0_4] : memref<1x128xf32, #tpu.memory_space<vmem>>, vector<1x128xf32>
    %5 = vector.broadcast %4 : vector<1x128xf32> to vector<128x128xf32>
    %6 = arith.addf %3, %5 : vector<128x128xf32>
    %cst = arith.constant 0.000000e+00 : f32
    %7 = vector.broadcast %cst : f32 to vector<128x128xf32>
    %8 = arith.maximumf %6, %7 : vector<128x128xf32>
    %c0_5 = arith.constant 0 : index
    %c0_6 = arith.constant 0 : index
    %9 = vector.load %arg4[%c0_5, %c0_6] : memref<128x128xf32, #tpu.memory_space<vmem>>, vector<128x128xf32>
    %cst_7 = arith.constant dense<0.000000e+00> : vector<128x128xf32>
    %10 = tpu.matmul %8, %9, %cst_7 {dimension_numbers = #tpu.dot_dimension_numbers<[1], [0], [0], [1], [0, 0, 1, 1], [], []>} : vector<128x128xf32>, vector<128x128xf32>, vector<128x128xf32> -> vector<128x128xf32>
    %c0_8 = arith.constant 0 : index
    %c0_9 = arith.constant 0 : index
    %11 = vector.load %arg6[%c0_8, %c0_9] : memref<128x128xf32, #tpu.memory_space<vmem>>, vector<128x128xf32>
    tpu.vector_store %arg6[%c0_8, %c0_9], %10 {strides = array<i32>} : memref<128x128xf32, #tpu.memory_space<vmem>>, vector<128x128xf32>,
    %c0_10 = arith.constant 0 : index
    %c0_11 = arith.constant 0 : index
    %12 = vector.load %arg5[%c0_10, %c0_11] : memref<128x128xf32, #tpu.memory_space<vmem>>, vector<128x128xf32>
    %cst_12 = arith.constant dense<0.000000e+00> : vector<128x128xf32>
    %13 = tpu.matmul %8, %12, %cst_12 {dimension_numbers = #tpu.dot_dimension_numbers<[1], [0], [0], [1], [0, 0, 1, 1], [], []>} : vector<128x128xf32>, vector<128x128xf32>, vector<128x128xf32> -> vector<128x128xf32>
    %c0_13 = arith.constant 0 : index
    %c0_14 = arith.constant 0 : index
    %14 = vector.load %arg7[%c0_13, %c0_14] : memref<128x128xf32, #tpu.memory_space<vmem>>, vector<128x128xf32>
    tpu.vector_store %arg7[%c0_13, %c0_14], %13 {strides = array<i32>} : memref<128x128xf32, #tpu.memory_space<vmem>>, vector<128x128xf32>,
    return
  }
  func.func @transform_0(%arg0: i32) -> (i32, i32) {
    %c0_i32 = arith.constant 0 : i32
    %c0_i32_0 = arith.constant 0 : i32
    return %arg0, %c0_i32 : i32, i32
  }
  func.func @transform_1(%arg0: i32) -> (i32, i32) {
    %c0_i32 = arith.constant 0 : i32
    %c0_i32_0 = arith.constant 0 : i32
    %c0_i32_1 = arith.constant 0 : i32
    return %c0_i32, %c0_i32_0 : i32, i32
  }
  func.func @transform_2(%arg0: i32) -> (i32, i32) {
    %c0_i32 = arith.constant 0 : i32
    %c0_i32_0 = arith.constant 0 : i32
    %c0_i32_1 = arith.constant 0 : i32
    return %c0_i32, %c0_i32_0 : i32, i32
  }
  func.func @transform_3(%arg0: i32) -> (i32, i32) {
    %c0_i32 = arith.constant 0 : i32
    %c0_i32_0 = arith.constant 0 : i32
    %c0_i32_1 = arith.constant 0 : i32
    return %c0_i32, %c0_i32_0 : i32, i32
  }
  func.func @transform_4(%arg0: i32) -> (i32, i32) {
    %c0_i32 = arith.constant 0 : i32
    %c0_i32_0 = arith.constant 0 : i32
    %c0_i32_1 = arith.constant 0 : i32
    return %c0_i32, %c0_i32_0 : i32, i32
  }
  func.func @transform_5(%arg0: i32) -> (i32, i32) {
    %c0_i32 = arith.constant 0 : i32
    %c0_i32_0 = arith.constant 0 : i32
    return %arg0, %c0_i32 : i32, i32
  }
  func.func @transform_6(%arg0: i32) -> (i32, i32) {
    %c0_i32 = arith.constant 0 : i32
    %c0_i32_0 = arith.constant 0 : i32
    return %arg0, %c0_i32 : i32, i32
  }
}

module attributes {stable_mosaic.version = 11 : i64} {
  func.func @kernel(%arg0: i32, %arg1: memref<1x10x10x128xf32, #tpu.memory_space<vmem>>, %arg2: memref<1x128xf32, #tpu.memory_space<vmem>>, %arg3: memref<1x128xf32, #tpu.memory_space<vmem>>, %arg4: memref<10x10x1xf32, #tpu.memory_space<vmem>>, %arg5: memref<9x128x128xf32, #tpu.memory_space<vmem>>, %arg6: memref<1x64x128xf32, #tpu.memory_space<vmem>>) attributes {dimension_semantics = [#tpu.dimension_semantics<parallel>], iteration_bounds = array<i64: 2>, scalar_prefetch = 0 : i64, scratch_operands = 0 : i64, tpu.core_type = #tpu.core_type<tc>, window_params = [{transform_indices = @transform_0, window_bounds = array<i64: 1, 10, 10, 128>}, {pipeline_mode = #tpu.pipeline_mode<synchronous>, transform_indices = @transform_1, window_bounds = array<i64: 1, 128>}, {pipeline_mode = #tpu.pipeline_mode<synchronous>, transform_indices = @transform_2, window_bounds = array<i64: 1, 128>}, {pipeline_mode = #tpu.pipeline_mode<synchronous>, transform_indices = @transform_3, window_bounds = array<i64: 10, 10, 1>}, {pipeline_mode = #tpu.pipeline_mode<synchronous>, transform_indices = @transform_4, window_bounds = array<i64: 9, 128, 128>}, {transform_indices = @transform_5, window_bounds = array<i64: 1, 64, 128>}]} {
    %c0 = arith.constant 0 : index
    %c0_0 = arith.constant 0 : index
    %c0_1 = arith.constant 0 : index
    %c0_2 = arith.constant 0 : index
    %0 = vector.load %arg1[%c0, %c0_0, %c0_1, %c0_2] : memref<1x10x10x128xf32, #tpu.memory_space<vmem>>, vector<1x10x10x128xf32>
    %1 = vector.shape_cast %0 : vector<1x10x10x128xf32> to vector<10x10x128xf32>
    %c0_3 = arith.constant 0 : index
    %c0_4 = arith.constant 0 : index
    %2 = vector.load %arg2[%c0_3, %c0_4] : memref<1x128xf32, #tpu.memory_space<vmem>>, vector<1x128xf32>
    %3 = vector.shape_cast %2 : vector<1x128xf32> to vector<1x1x128xf32>
    %4 = vector.broadcast %3 : vector<1x1x128xf32> to vector<10x10x128xf32>
    %5 = arith.mulf %1, %4 : vector<10x10x128xf32>
    %c0_5 = arith.constant 0 : index
    %c0_6 = arith.constant 0 : index
    %6 = vector.load %arg3[%c0_5, %c0_6] : memref<1x128xf32, #tpu.memory_space<vmem>>, vector<1x128xf32>
    %7 = vector.shape_cast %6 : vector<1x128xf32> to vector<1x1x128xf32>
    %8 = vector.broadcast %7 : vector<1x1x128xf32> to vector<10x10x128xf32>
    %9 = arith.addf %5, %8 : vector<10x10x128xf32>
    %cst = arith.constant 0.000000e+00 : f32
    %10 = vector.broadcast %cst : f32 to vector<10x10x128xf32>
    %11 = arith.maximumf %9, %10 : vector<10x10x128xf32>
    %c0_7 = arith.constant 0 : index
    %c0_8 = arith.constant 0 : index
    %c0_9 = arith.constant 0 : index
    %12 = vector.load %arg4[%c0_7, %c0_8, %c0_9] : memref<10x10x1xf32, #tpu.memory_space<vmem>>, vector<10x10x1xf32>
    %13 = vector.broadcast %12 : vector<10x10x1xf32> to vector<10x10x128xf32>
    %14 = arith.mulf %11, %13 : vector<10x10x128xf32>
    %cst_10 = arith.constant 0.000000e+00 : f32
    %15 = vector.broadcast %cst_10 : f32 to vector<64x128xf32>
    %16 = vector.extract_strided_slice %14 {offsets = [0, 0, 0], sizes = [8, 8, 128], strides = [1, 1, 1]} : vector<10x10x128xf32> to vector<8x8x128xf32>
    %17 = vector.shape_cast %16 : vector<8x8x128xf32> to vector<64x128xf32>
    %c0_11 = arith.constant 0 : index
    %c0_12 = arith.constant 0 : index
    %c0_13 = arith.constant 0 : index
    %18 = vector.load %arg5[%c0_11, %c0_12, %c0_13] : memref<9x128x128xf32, #tpu.memory_space<vmem>>, vector<1x128x128xf32>
    %19 = vector.shape_cast %18 : vector<1x128x128xf32> to vector<128x128xf32>
    %cst_14 = arith.constant dense<0.000000e+00> : vector<64x128xf32>
    %20 = tpu.matmul %17, %19, %cst_14 {dimension_numbers = #tpu.dot_dimension_numbers<[1], [0], [0], [1], [0, 0, 1, 1], [], []>} : vector<64x128xf32>, vector<128x128xf32>, vector<64x128xf32> -> vector<64x128xf32>
    %21 = arith.addf %15, %20 : vector<64x128xf32>
    %22 = vector.extract_strided_slice %14 {offsets = [0, 1, 0], sizes = [8, 8, 128], strides = [1, 1, 1]} : vector<10x10x128xf32> to vector<8x8x128xf32>
    %23 = vector.shape_cast %22 : vector<8x8x128xf32> to vector<64x128xf32>
    %c1 = arith.constant 1 : index
    %c0_15 = arith.constant 0 : index
    %c0_16 = arith.constant 0 : index
    %24 = vector.load %arg5[%c1, %c0_15, %c0_16] : memref<9x128x128xf32, #tpu.memory_space<vmem>>, vector<1x128x128xf32>
    %25 = vector.shape_cast %24 : vector<1x128x128xf32> to vector<128x128xf32>
    %cst_17 = arith.constant dense<0.000000e+00> : vector<64x128xf32>
    %26 = tpu.matmul %23, %25, %cst_17 {dimension_numbers = #tpu.dot_dimension_numbers<[1], [0], [0], [1], [0, 0, 1, 1], [], []>} : vector<64x128xf32>, vector<128x128xf32>, vector<64x128xf32> -> vector<64x128xf32>
    %27 = arith.addf %21, %26 : vector<64x128xf32>
    %28 = vector.extract_strided_slice %14 {offsets = [0, 2, 0], sizes = [8, 8, 128], strides = [1, 1, 1]} : vector<10x10x128xf32> to vector<8x8x128xf32>
    %29 = vector.shape_cast %28 : vector<8x8x128xf32> to vector<64x128xf32>
    %c2 = arith.constant 2 : index
    %c0_18 = arith.constant 0 : index
    %c0_19 = arith.constant 0 : index
    %30 = vector.load %arg5[%c2, %c0_18, %c0_19] : memref<9x128x128xf32, #tpu.memory_space<vmem>>, vector<1x128x128xf32>
    %31 = vector.shape_cast %30 : vector<1x128x128xf32> to vector<128x128xf32>
    %cst_20 = arith.constant dense<0.000000e+00> : vector<64x128xf32>
    %32 = tpu.matmul %29, %31, %cst_20 {dimension_numbers = #tpu.dot_dimension_numbers<[1], [0], [0], [1], [0, 0, 1, 1], [], []>} : vector<64x128xf32>, vector<128x128xf32>, vector<64x128xf32> -> vector<64x128xf32>
    %33 = arith.addf %27, %32 : vector<64x128xf32>
    %34 = vector.extract_strided_slice %14 {offsets = [1, 0, 0], sizes = [8, 8, 128], strides = [1, 1, 1]} : vector<10x10x128xf32> to vector<8x8x128xf32>
    %35 = vector.shape_cast %34 : vector<8x8x128xf32> to vector<64x128xf32>
    %c3 = arith.constant 3 : index
    %c0_21 = arith.constant 0 : index
    %c0_22 = arith.constant 0 : index
    %36 = vector.load %arg5[%c3, %c0_21, %c0_22] : memref<9x128x128xf32, #tpu.memory_space<vmem>>, vector<1x128x128xf32>
    %37 = vector.shape_cast %36 : vector<1x128x128xf32> to vector<128x128xf32>
    %cst_23 = arith.constant dense<0.000000e+00> : vector<64x128xf32>
    %38 = tpu.matmul %35, %37, %cst_23 {dimension_numbers = #tpu.dot_dimension_numbers<[1], [0], [0], [1], [0, 0, 1, 1], [], []>} : vector<64x128xf32>, vector<128x128xf32>, vector<64x128xf32> -> vector<64x128xf32>
    %39 = arith.addf %33, %38 : vector<64x128xf32>
    %40 = vector.extract_strided_slice %14 {offsets = [1, 1, 0], sizes = [8, 8, 128], strides = [1, 1, 1]} : vector<10x10x128xf32> to vector<8x8x128xf32>
    %41 = vector.shape_cast %40 : vector<8x8x128xf32> to vector<64x128xf32>
    %c4 = arith.constant 4 : index
    %c0_24 = arith.constant 0 : index
    %c0_25 = arith.constant 0 : index
    %42 = vector.load %arg5[%c4, %c0_24, %c0_25] : memref<9x128x128xf32, #tpu.memory_space<vmem>>, vector<1x128x128xf32>
    %43 = vector.shape_cast %42 : vector<1x128x128xf32> to vector<128x128xf32>
    %cst_26 = arith.constant dense<0.000000e+00> : vector<64x128xf32>
    %44 = tpu.matmul %41, %43, %cst_26 {dimension_numbers = #tpu.dot_dimension_numbers<[1], [0], [0], [1], [0, 0, 1, 1], [], []>} : vector<64x128xf32>, vector<128x128xf32>, vector<64x128xf32> -> vector<64x128xf32>
    %45 = arith.addf %39, %44 : vector<64x128xf32>
    %46 = vector.extract_strided_slice %14 {offsets = [1, 2, 0], sizes = [8, 8, 128], strides = [1, 1, 1]} : vector<10x10x128xf32> to vector<8x8x128xf32>
    %47 = vector.shape_cast %46 : vector<8x8x128xf32> to vector<64x128xf32>
    %c5 = arith.constant 5 : index
    %c0_27 = arith.constant 0 : index
    %c0_28 = arith.constant 0 : index
    %48 = vector.load %arg5[%c5, %c0_27, %c0_28] : memref<9x128x128xf32, #tpu.memory_space<vmem>>, vector<1x128x128xf32>
    %49 = vector.shape_cast %48 : vector<1x128x128xf32> to vector<128x128xf32>
    %cst_29 = arith.constant dense<0.000000e+00> : vector<64x128xf32>
    %50 = tpu.matmul %47, %49, %cst_29 {dimension_numbers = #tpu.dot_dimension_numbers<[1], [0], [0], [1], [0, 0, 1, 1], [], []>} : vector<64x128xf32>, vector<128x128xf32>, vector<64x128xf32> -> vector<64x128xf32>
    %51 = arith.addf %45, %50 : vector<64x128xf32>
    %52 = vector.extract_strided_slice %14 {offsets = [2, 0, 0], sizes = [8, 8, 128], strides = [1, 1, 1]} : vector<10x10x128xf32> to vector<8x8x128xf32>
    %53 = vector.shape_cast %52 : vector<8x8x128xf32> to vector<64x128xf32>
    %c6 = arith.constant 6 : index
    %c0_30 = arith.constant 0 : index
    %c0_31 = arith.constant 0 : index
    %54 = vector.load %arg5[%c6, %c0_30, %c0_31] : memref<9x128x128xf32, #tpu.memory_space<vmem>>, vector<1x128x128xf32>
    %55 = vector.shape_cast %54 : vector<1x128x128xf32> to vector<128x128xf32>
    %cst_32 = arith.constant dense<0.000000e+00> : vector<64x128xf32>
    %56 = tpu.matmul %53, %55, %cst_32 {dimension_numbers = #tpu.dot_dimension_numbers<[1], [0], [0], [1], [0, 0, 1, 1], [], []>} : vector<64x128xf32>, vector<128x128xf32>, vector<64x128xf32> -> vector<64x128xf32>
    %57 = arith.addf %51, %56 : vector<64x128xf32>
    %58 = vector.extract_strided_slice %14 {offsets = [2, 1, 0], sizes = [8, 8, 128], strides = [1, 1, 1]} : vector<10x10x128xf32> to vector<8x8x128xf32>
    %59 = vector.shape_cast %58 : vector<8x8x128xf32> to vector<64x128xf32>
    %c7 = arith.constant 7 : index
    %c0_33 = arith.constant 0 : index
    %c0_34 = arith.constant 0 : index
    %60 = vector.load %arg5[%c7, %c0_33, %c0_34] : memref<9x128x128xf32, #tpu.memory_space<vmem>>, vector<1x128x128xf32>
    %61 = vector.shape_cast %60 : vector<1x128x128xf32> to vector<128x128xf32>
    %cst_35 = arith.constant dense<0.000000e+00> : vector<64x128xf32>
    %62 = tpu.matmul %59, %61, %cst_35 {dimension_numbers = #tpu.dot_dimension_numbers<[1], [0], [0], [1], [0, 0, 1, 1], [], []>} : vector<64x128xf32>, vector<128x128xf32>, vector<64x128xf32> -> vector<64x128xf32>
    %63 = arith.addf %57, %62 : vector<64x128xf32>
    %64 = vector.extract_strided_slice %14 {offsets = [2, 2, 0], sizes = [8, 8, 128], strides = [1, 1, 1]} : vector<10x10x128xf32> to vector<8x8x128xf32>
    %65 = vector.shape_cast %64 : vector<8x8x128xf32> to vector<64x128xf32>
    %c8 = arith.constant 8 : index
    %c0_36 = arith.constant 0 : index
    %c0_37 = arith.constant 0 : index
    %66 = vector.load %arg5[%c8, %c0_36, %c0_37] : memref<9x128x128xf32, #tpu.memory_space<vmem>>, vector<1x128x128xf32>
    %67 = vector.shape_cast %66 : vector<1x128x128xf32> to vector<128x128xf32>
    %cst_38 = arith.constant dense<0.000000e+00> : vector<64x128xf32>
    %68 = tpu.matmul %65, %67, %cst_38 {dimension_numbers = #tpu.dot_dimension_numbers<[1], [0], [0], [1], [0, 0, 1, 1], [], []>} : vector<64x128xf32>, vector<128x128xf32>, vector<64x128xf32> -> vector<64x128xf32>
    %69 = arith.addf %63, %68 : vector<64x128xf32>
    %c0_39 = arith.constant 0 : index
    %c0_40 = arith.constant 0 : index
    %c0_41 = arith.constant 0 : index
    %70 = vector.load %arg6[%c0_39, %c0_40, %c0_41] : memref<1x64x128xf32, #tpu.memory_space<vmem>>, vector<1x64x128xf32>
    %71 = vector.shape_cast %70 : vector<1x64x128xf32> to vector<64x128xf32>
    %72 = vector.shape_cast %69 : vector<64x128xf32> to vector<1x64x128xf32>
    tpu.vector_store %arg6[%c0_39, %c0_40, %c0_41], %72 {strides = array<i32>} : memref<1x64x128xf32, #tpu.memory_space<vmem>>, vector<1x64x128xf32>,
    return
  }
  func.func @transform_0(%arg0: i32) -> (i32, i32, i32, i32) {
    %c0_i32 = arith.constant 0 : i32
    %c0_i32_0 = arith.constant 0 : i32
    %c0_i32_1 = arith.constant 0 : i32
    %c0_i32_2 = arith.constant 0 : i32
    return %arg0, %c0_i32, %c0_i32_0, %c0_i32_1 : i32, i32, i32, i32
  }
  func.func @transform_1(%arg0: i32) -> (i32, i32) {
    %c0_i32 = arith.constant 0 : i32
    %c0_i32_0 = arith.constant 0 : i32
    %c0_i32_1 = arith.constant 0 : i32
    return %c0_i32, %c0_i32_0 : i32, i32
  }
  func.func @transform_2(%arg0: i32) -> (i32, i32) {
    %c0_i32 = arith.constant 0 : i32
    %c0_i32_0 = arith.constant 0 : i32
    %c0_i32_1 = arith.constant 0 : i32
    return %c0_i32, %c0_i32_0 : i32, i32
  }
  func.func @transform_3(%arg0: i32) -> (i32, i32, i32) {
    %c0_i32 = arith.constant 0 : i32
    %c0_i32_0 = arith.constant 0 : i32
    %c0_i32_1 = arith.constant 0 : i32
    %c0_i32_2 = arith.constant 0 : i32
    return %c0_i32, %c0_i32_0, %c0_i32_1 : i32, i32, i32
  }
  func.func @transform_4(%arg0: i32) -> (i32, i32, i32) {
    %c0_i32 = arith.constant 0 : i32
    %c0_i32_0 = arith.constant 0 : i32
    %c0_i32_1 = arith.constant 0 : i32
    %c0_i32_2 = arith.constant 0 : i32
    return %c0_i32, %c0_i32_0, %c0_i32_1 : i32, i32, i32
  }
  func.func @transform_5(%arg0: i32) -> (i32, i32, i32) {
    %c0_i32 = arith.constant 0 : i32
    %c0_i32_0 = arith.constant 0 : i32
    %c0_i32_1 = arith.constant 0 : i32
    return %arg0, %c0_i32, %c0_i32_0 : i32, i32, i32
  }
}

module attributes {stable_mosaic.version = 11 : i64} {
  func.func @bn_relu_matmul_kernel(%arg0: i32, %arg1: memref<128x128xf32, #tpu.memory_space<vmem>>, %arg2: memref<1x128xf32, #tpu.memory_space<vmem>>, %arg3: memref<1x128xf32, #tpu.memory_space<vmem>>, %arg4: memref<128x128xf32, #tpu.memory_space<vmem>>, %arg5: memref<128x128xf32, #tpu.memory_space<vmem>>) attributes {dimension_semantics = [#tpu.dimension_semantics<parallel>], iteration_bounds = array<i64: 1>, scalar_prefetch = 0 : i64, scratch_operands = 0 : i64, tpu.core_type = #tpu.core_type<tc>, window_params = [{transform_indices = @transform_0, window_bounds = array<i64: 128, 128>}, {pipeline_mode = #tpu.pipeline_mode<synchronous>, transform_indices = @transform_1, window_bounds = array<i64: 1, 128>}, {pipeline_mode = #tpu.pipeline_mode<synchronous>, transform_indices = @transform_2, window_bounds = array<i64: 1, 128>}, {pipeline_mode = #tpu.pipeline_mode<synchronous>, transform_indices = @transform_3, window_bounds = array<i64: 128, 128>}, {transform_indices = @transform_4, window_bounds = array<i64: 128, 128>}]} {
    %c0 = arith.constant 0 : index
    %c0_0 = arith.constant 0 : index
    %0 = vector.load %arg1[%c0, %c0_0] : memref<128x128xf32, #tpu.memory_space<vmem>>, vector<128x128xf32>
    %c0_1 = arith.constant 0 : index
    %c0_2 = arith.constant 0 : index
    %1 = vector.load %arg2[%c0_1, %c0_2] : memref<1x128xf32, #tpu.memory_space<vmem>>, vector<1x128xf32>
    %2 = vector.broadcast %1 : vector<1x128xf32> to vector<128x128xf32>
    %3 = arith.mulf %0, %2 : vector<128x128xf32>
    %c0_3 = arith.constant 0 : index
    %c0_4 = arith.constant 0 : index
    %4 = vector.load %arg3[%c0_3, %c0_4] : memref<1x128xf32, #tpu.memory_space<vmem>>, vector<1x128xf32>
    %5 = vector.broadcast %4 : vector<1x128xf32> to vector<128x128xf32>
    %6 = arith.addf %3, %5 : vector<128x128xf32>
    %cst = arith.constant 0.000000e+00 : f32
    %7 = vector.broadcast %cst : f32 to vector<128x128xf32>
    %8 = arith.maximumf %6, %7 : vector<128x128xf32>
    %c0_5 = arith.constant 0 : index
    %c0_6 = arith.constant 0 : index
    %9 = vector.load %arg4[%c0_5, %c0_6] : memref<128x128xf32, #tpu.memory_space<vmem>>, vector<128x128xf32>
    %cst_7 = arith.constant dense<0.000000e+00> : vector<128x128xf32>
    %10 = tpu.matmul %8, %9, %cst_7 {dimension_numbers = #tpu.dot_dimension_numbers<[1], [0], [0], [1], [0, 0, 1, 1], [], []>} : vector<128x128xf32>, vector<128x128xf32>, vector<128x128xf32> -> vector<128x128xf32>
    %c0_8 = arith.constant 0 : index
    %c0_9 = arith.constant 0 : index
    %11 = vector.load %arg5[%c0_8, %c0_9] : memref<128x128xf32, #tpu.memory_space<vmem>>, vector<128x128xf32>
    tpu.vector_store %arg5[%c0_8, %c0_9], %10 {strides = array<i32>} : memref<128x128xf32, #tpu.memory_space<vmem>>, vector<128x128xf32>,
    return
  }
  func.func @transform_0(%arg0: i32) -> (i32, i32) {
    %c0_i32 = arith.constant 0 : i32
    %c0_i32_0 = arith.constant 0 : i32
    return %arg0, %c0_i32 : i32, i32
  }
  func.func @transform_1(%arg0: i32) -> (i32, i32) {
    %c0_i32 = arith.constant 0 : i32
    %c0_i32_0 = arith.constant 0 : i32
    %c0_i32_1 = arith.constant 0 : i32
    return %c0_i32, %c0_i32_0 : i32, i32
  }
  func.func @transform_2(%arg0: i32) -> (i32, i32) {
    %c0_i32 = arith.constant 0 : i32
    %c0_i32_0 = arith.constant 0 : i32
    %c0_i32_1 = arith.constant 0 : i32
    return %c0_i32, %c0_i32_0 : i32, i32
  }
  func.func @transform_3(%arg0: i32) -> (i32, i32) {
    %c0_i32 = arith.constant 0 : i32
    %c0_i32_0 = arith.constant 0 : i32
    %c0_i32_1 = arith.constant 0 : i32
    return %c0_i32, %c0_i32_0 : i32, i32
  }
  func.func @transform_4(%arg0: i32) -> (i32, i32) {
    %c0_i32 = arith.constant 0 : i32
    %c0_i32_0 = arith.constant 0 : i32
    return %arg0, %c0_i32 : i32, i32
  }
}

module attributes {stable_mosaic.version = 11 : i64} {
  func.func @se_apply_kernel(%arg0: i32, %arg1: i32, %arg2: memref<1x64x128xf32, #tpu.memory_space<vmem>>, %arg3: memref<1x64x128xf32, #tpu.memory_space<vmem>>, %arg4: memref<1x1x128xf32, #tpu.memory_space<vmem>>, %arg5: memref<1x64x128xf32, #tpu.memory_space<vmem>>) attributes {dimension_semantics = [#tpu.dimension_semantics<parallel>, #tpu.dimension_semantics<parallel>], iteration_bounds = array<i64: 2, 1>, scalar_prefetch = 0 : i64, scratch_operands = 0 : i64, tpu.core_type = #tpu.core_type<tc>, window_params = [{transform_indices = @transform_0, window_bounds = array<i64: 1, 64, 128>}, {transform_indices = @transform_1, window_bounds = array<i64: 1, 64, 128>}, {transform_indices = @transform_2, window_bounds = array<i64: 1, 1, 128>}, {transform_indices = @transform_3, window_bounds = array<i64: 1, 64, 128>}]} {
    %c0 = arith.constant 0 : index
    %c0_0 = arith.constant 0 : index
    %c0_1 = arith.constant 0 : index
    %0 = vector.load %arg2[%c0, %c0_0, %c0_1] : memref<1x64x128xf32, #tpu.memory_space<vmem>>, vector<1x64x128xf32>
    %c0_2 = arith.constant 0 : index
    %c0_3 = arith.constant 0 : index
    %c0_4 = arith.constant 0 : index
    %1 = vector.load %arg4[%c0_2, %c0_3, %c0_4] : memref<1x1x128xf32, #tpu.memory_space<vmem>>, vector<1x1x128xf32>
    %2 = vector.broadcast %1 : vector<1x1x128xf32> to vector<1x64x128xf32>
    %3 = arith.mulf %0, %2 : vector<1x64x128xf32>
    %c0_5 = arith.constant 0 : index
    %c0_6 = arith.constant 0 : index
    %c0_7 = arith.constant 0 : index
    %4 = vector.load %arg3[%c0_5, %c0_6, %c0_7] : memref<1x64x128xf32, #tpu.memory_space<vmem>>, vector<1x64x128xf32>
    %5 = arith.addf %3, %4 : vector<1x64x128xf32>
    %c0_8 = arith.constant 0 : index
    %c0_9 = arith.constant 0 : index
    %c0_10 = arith.constant 0 : index
    %6 = vector.load %arg5[%c0_8, %c0_9, %c0_10] : memref<1x64x128xf32, #tpu.memory_space<vmem>>, vector<1x64x128xf32>
    tpu.vector_store %arg5[%c0_8, %c0_9, %c0_10], %5 {strides = array<i32>} : memref<1x64x128xf32, #tpu.memory_space<vmem>>, vector<1x64x128xf32>,
    return
  }
  func.func @transform_0(%arg0: i32, %arg1: i32) -> (i32, i32, i32) {
    %c0_i32 = arith.constant 0 : i32
    %c0_i32_0 = arith.constant 0 : i32
    return %arg0, %arg1, %c0_i32 : i32, i32, i32
  }
  func.func @transform_1(%arg0: i32, %arg1: i32) -> (i32, i32, i32) {
    %c0_i32 = arith.constant 0 : i32
    %c0_i32_0 = arith.constant 0 : i32
    return %arg0, %arg1, %c0_i32 : i32, i32, i32
  }
  func.func @transform_2(%arg0: i32, %arg1: i32) -> (i32, i32, i32) {
    %c0_i32 = arith.constant 0 : i32
    %c0_i32_0 = arith.constant 0 : i32
    %c0_i32_1 = arith.constant 0 : i32
    return %arg0, %c0_i32, %c0_i32_0 : i32, i32, i32
  }
  func.func @transform_3(%arg0: i32, %arg1: i32) -> (i32, i32, i32) {
    %c0_i32 = arith.constant 0 : i32
    %c0_i32_0 = arith.constant 0 : i32
    return %arg0, %arg1, %c0_i32 : i32, i32, i32
  }
}

module attributes {stable_mosaic.version = 11 : i64} {
  func.func @se_gate_kernel(%arg0: i32, %arg1: memref<2x64x128xf32, #tpu.memory_space<vmem>>, %arg2: memref<1x64x1xf32, #tpu.memory_space<vmem>>, %arg3: memref<128x128xf32, #tpu.memory_space<vmem>>, %arg4: memref<128x128xf32, #tpu.memory_space<vmem>>, %arg5: memref<2x128xf32, #tpu.memory_space<vmem>>, %arg6: memref<2x128xf32, #tpu.memory_space<vmem>>) attributes {dimension_semantics = [#tpu.dimension_semantics<arbitrary>], iteration_bounds = array<i64: 1>, scalar_prefetch = 0 : i64, scratch_operands = 1 : i64, tpu.core_type = #tpu.core_type<tc>, window_params = [{transform_indices = @transform_0, window_bounds = array<i64: 2, 64, 128>}, {transform_indices = @transform_1, window_bounds = array<i64: 1, 64, 1>}, {pipeline_mode = #tpu.pipeline_mode<synchronous>, transform_indices = @transform_2, window_bounds = array<i64: 128, 128>}, {pipeline_mode = #tpu.pipeline_mode<synchronous>, transform_indices = @transform_3, window_bounds = array<i64: 128, 128>}, {pipeline_mode = #tpu.pipeline_mode<synchronous>, transform_indices = @transform_4, window_bounds = array<i64: 2, 128>}]} {
    %c0_i32 = arith.constant 0 : i32
    %0 = arith.cmpi eq, %arg0, %c0_i32 : i32
    %1 = arith.extui %0 : i1 to i32
    %c0_i32_0 = arith.constant 0 : i32
    %2 = arith.cmpi ne, %1, %c0_i32_0 : i32
    scf.if %2 {
      %cst_12 = arith.constant 0.000000e+00 : f32
      %14 = vector.broadcast %cst_12 : f32 to vector<2x128xf32>
      %c0_13 = arith.constant 0 : index
      %c0_14 = arith.constant 0 : index
      %15 = vector.load %arg6[%c0_13, %c0_14] : memref<2x128xf32, #tpu.memory_space<vmem>>, vector<2x128xf32>
      tpu.vector_store %arg6[%c0_13, %c0_14], %14 {strides = array<i32>} : memref<2x128xf32, #tpu.memory_space<vmem>>, vector<2x128xf32>,
    } else {
    }
    %c0 = arith.constant 0 : index
    %c0_1 = arith.constant 0 : index
    %3 = vector.load %arg6[%c0, %c0_1] : memref<2x128xf32, #tpu.memory_space<vmem>>, vector<2x128xf32>
    %c0_2 = arith.constant 0 : index
    %c0_3 = arith.constant 0 : index
    %c0_4 = arith.constant 0 : index
    %4 = vector.load %arg1[%c0_2, %c0_3, %c0_4] : memref<2x64x128xf32, #tpu.memory_space<vmem>>, vector<2x64x128xf32>
    %c0_5 = arith.constant 0 : index
    %c0_6 = arith.constant 0 : index
    %c0_7 = arith.constant 0 : index
    %5 = vector.load %arg2[%c0_5, %c0_6, %c0_7] : memref<1x64x1xf32, #tpu.memory_space<vmem>>, vector<1x64x1xf32>
    %6 = vector.broadcast %5 : vector<1x64x1xf32> to vector<2x64x128xf32>
    %7 = arith.mulf %4, %6 : vector<2x64x128xf32>
    %cst = arith.constant dense<0.000000e+00> : vector<2x128xf32>
    %8 = vector.multi_reduction <add>, %7, %cst [1] : vector<2x64x128xf32> to vector<2x128xf32>
    %9 = arith.addf %3, %8 : vector<2x128xf32>
    %c0_8 = arith.constant 0 : index
    %c0_9 = arith.constant 0 : index
    %10 = vector.load %arg6[%c0_8, %c0_9] : memref<2x128xf32, #tpu.memory_space<vmem>>, vector<2x128xf32>
    tpu.vector_store %arg6[%c0_8, %c0_9], %9 {strides = array<i32>} : memref<2x128xf32, #tpu.memory_space<vmem>>, vector<2x128xf32>,
    %c0_i32_10 = arith.constant 0 : i32
    %11 = arith.cmpi eq, %arg0, %c0_i32_10 : i32
    %12 = arith.extui %11 : i1 to i32
    %c0_i32_11 = arith.constant 0 : i32
    %13 = arith.cmpi ne, %12, %c0_i32_11 : i32
    scf.if %13 {
      %c0_12 = arith.constant 0 : index
      %c0_13 = arith.constant 0 : index
      %14 = vector.load %arg6[%c0_12, %c0_13] : memref<2x128xf32, #tpu.memory_space<vmem>>, vector<2x128xf32>
      %c0_14 = arith.constant 0 : index
      %c0_15 = arith.constant 0 : index
      %15 = vector.load %arg3[%c0_14, %c0_15] : memref<128x128xf32, #tpu.memory_space<vmem>>, vector<128x128xf32>
      %cst_16 = arith.constant dense<0.000000e+00> : vector<2x128xf32>
      %16 = tpu.matmul %14, %15, %cst_16 {dimension_numbers = #tpu.dot_dimension_numbers<[1], [0], [0], [1], [0, 0, 1, 1], [], []>} : vector<2x128xf32>, vector<128x128xf32>, vector<2x128xf32> -> vector<2x128xf32>
      %cst_17 = arith.constant 0.000000e+00 : f32
      %17 = vector.broadcast %cst_17 : f32 to vector<2x128xf32>
      %18 = arith.maximumf %16, %17 : vector<2x128xf32>
      %c0_18 = arith.constant 0 : index
      %c0_19 = arith.constant 0 : index
      %19 = vector.load %arg4[%c0_18, %c0_19] : memref<128x128xf32, #tpu.memory_space<vmem>>, vector<128x128xf32>
      %cst_20 = arith.constant dense<0.000000e+00> : vector<2x128xf32>
      %20 = tpu.matmul %18, %19, %cst_20 {dimension_numbers = #tpu.dot_dimension_numbers<[1], [0], [0], [1], [0, 0, 1, 1], [], []>} : vector<2x128xf32>, vector<128x128xf32>, vector<2x128xf32> -> vector<2x128xf32>
      %21 = arith.negf %20 : vector<2x128xf32>
      %22 = math.exp %21 : vector<2x128xf32>
      %cst_21 = arith.constant 1.000000e+00 : f32
      %23 = vector.broadcast %cst_21 : f32 to vector<2x128xf32>
      %24 = arith.addf %23, %22 : vector<2x128xf32>
      %25 = arith.divf %23, %24 : vector<2x128xf32>
      %c0_22 = arith.constant 0 : index
      %c0_23 = arith.constant 0 : index
      %26 = vector.load %arg5[%c0_22, %c0_23] : memref<2x128xf32, #tpu.memory_space<vmem>>, vector<2x128xf32>
      tpu.vector_store %arg5[%c0_22, %c0_23], %25 {strides = array<i32>} : memref<2x128xf32, #tpu.memory_space<vmem>>, vector<2x128xf32>,
    } else {
    }
    return
  }
  func.func @transform_0(%arg0: i32) -> (i32, i32, i32) {
    %c0_i32 = arith.constant 0 : i32
    %c0_i32_0 = arith.constant 0 : i32
    %c0_i32_1 = arith.constant 0 : i32
    return %c0_i32, %arg0, %c0_i32_0 : i32, i32, i32
  }
  func.func @transform_1(%arg0: i32) -> (i32, i32, i32) {
    %c0_i32 = arith.constant 0 : i32
    %c0_i32_0 = arith.constant 0 : i32
    %c0_i32_1 = arith.constant 0 : i32
    return %c0_i32, %arg0, %c0_i32_0 : i32, i32, i32
  }
  func.func @transform_2(%arg0: i32) -> (i32, i32) {
    %c0_i32 = arith.constant 0 : i32
    %c0_i32_0 = arith.constant 0 : i32
    %c0_i32_1 = arith.constant 0 : i32
    return %c0_i32, %c0_i32_0 : i32, i32
  }
  func.func @transform_3(%arg0: i32) -> (i32, i32) {
    %c0_i32 = arith.constant 0 : i32
    %c0_i32_0 = arith.constant 0 : i32
    %c0_i32_1 = arith.constant 0 : i32
    return %c0_i32, %c0_i32_0 : i32, i32
  }
  func.func @transform_4(%arg0: i32) -> (i32, i32) {
    %c0_i32 = arith.constant 0 : i32
    %c0_i32_0 = arith.constant 0 : i32
    %c0_i32_1 = arith.constant 0 : i32
    return %c0_i32, %c0_i32_0 : i32, i32
  }
}

</mosaic_0001>

<llo_original>
// kernel: run.8
$region0: #{run.8}
  #allocation0 [shape = 'u32[]', space=smem, size = 0x4, offset = 0x4, fixed_abs, tag = 'smem constant byte address 0x4 - core index']
  #allocation1 [shape = 'u32[72,128]{1,0:T(1,128)}', space=vmem, size = 0x9000, scoped, tag = 'internal scratch']
  #allocation2 [shape = 'f32[1,128]{1,0:T(1,128)}', space=vmem, size = 0x200, scoped, tag = 'scratch operand']
  #allocation3 [shape = 'f32[1,128]{1,0:T(1,128)}', space=vmem, size = 0x200, scoped, tag = 'scratch operand']
  %s0 = inlined_call_operand.vmem [shape: f32[128,128], index: 0, kind: input, shape index: {}]
  %s1 = inlined_call_operand.vmem [shape: f32[1,128], index: 1, kind: input, shape index: {}]
  %s2 = inlined_call_operand.vmem [shape: f32[1,128], index: 2, kind: input, shape index: {}]
  %s3 = inlined_call_operand.vmem [shape: f32[1,128], index: 3, kind: output, shape index: {0}]
  %s4 = inlined_call_operand.vmem [shape: f32[1,128], index: 4, kind: output, shape index: {1}]
  %5 = xla_tuple %s3, %s4
  %s6 = sld [smem:[#allocation0]]
  $region38: #{run.8} parent=0
    _
  %s8 = ssub.s32 1, %s6
  %s9 = scalar_select 0, %s8, %s6
  // Predicated region
  $region2: #{run.8} parent=0 // pred_check
    _
  $region3: #{run.8} parent=0 // pred_check_branch
    %11 = sbr.rel (0) target = $region5
  $region4: #{run.8} parent=0 // pred_region
    _
  $region5: #{run.8} parent=0 // pred_fallthru
    _
  // Predicated region
  $region6: #{run.8} parent=0 // pred_check
    _
  $region7: #{run.8} parent=0 // pred_check_branch
    %13 = sbr.rel (0) target = $region9
  $region8: #{run.8} parent=0 // pred_region
    _
  $region9: #{run.8} parent=0 // pred_fallthru
    _
  // Predicated region
  $region10: #{run.8} parent=0 // pred_check
    _
  $region11: #{run.8} parent=0 // pred_check_branch
    %15 = sbr.rel (0) target = $region13
  $region12: #{run.8} parent=0 // pred_region
    _
  $region13: #{run.8} parent=0 // pred_fallthru
    _
  %p16 = scmp.eq.s32.totalorder 0, 0
  // Predicated region
  $region14: #{run.8} parent=0 // pred_check
    %p17 = pneg %p16
  $region15: #{run.8} parent=0 // pred_check_branch
    %19 = sbr.rel (%p17) target = $region17
  $region16: #{run.8} parent=0 // pred_region
    %20 = vst [vmem:[#allocation2] sm:$0x1] 0.0
    %21 = vst [vmem:[#allocation3] sm:$0x1] 0.0
  $region17: #{run.8} parent=0 // pred_fallthru
    _
  %v22 = vld [vmem:[%s0] sm:$0xff]
  %v23 = vld [vmem:[%s0 + $0x8] sm:$0xff]
  %v24 = vld [vmem:[%s0 + $0x10] sm:$0xff]
  %v25 = vld [vmem:[%s0 + $0x18] sm:$0xff]
  %v26 = vld [vmem:[%s0 + $0x20] sm:$0xff]
  %v27 = vld [vmem:[%s0 + $0x28] sm:$0xff]
  %v28 = vld [vmem:[%s0 + $0x30] sm:$0xff]
  %v29 = vld [vmem:[%s0 + $0x38] sm:$0xff]
  %v30 = vld [vmem:[%s0 + $0x40] sm:$0xff]
  %v31 = vld [vmem:[%s0 + $0x48] sm:$0xff]
  %v32 = vld [vmem:[%s0 + $0x50] sm:$0xff]
  %v33 = vld [vmem:[%s0 + $0x58] sm:$0xff]
  %v34 = vld [vmem:[%s0 + $0x60] sm:$0xff]
  %v35 = vld [vmem:[%s0 + $0x68] sm:$0xff]
  %v36 = vld [vmem:[%s0 + $0x70] sm:$0xff]
  %v37 = vld [vmem:[%s0 + $0x78] sm:$0xff]
  %v38 = vld [vmem:[#allocation2] sm:$0x1]
  %v39 = vadd.f32 %v22, %v23
  %v40 = vadd.f32 %v39, %v24
  %v41 = vadd.f32 %v40, %v25
  %v42 = vadd.f32 %v41, %v26
  %v43 = vadd.f32 %v42, %v27
  %v44 = vadd.f32 %v43, %v28
  %v45 = vadd.f32 %v44, %v29
  %v46 = vadd.f32 %v45, %v30
  %v47 = vadd.f32 %v46, %v31
  %v48 = vadd.f32 %v47, %v32
  %v49 = vadd.f32 %v48, %v33
  %v50 = vadd.f32 %v49, %v34
  %v51 = vadd.f32 %v50, %v35
  %v52 = vadd.f32 %v51, %v36
  %v53 = vadd.f32 %v52, %v37
  %v54 = vrot.slane %v53, 4
  %v55 = vadd.f32 %v53, %v54
  %v56 = vrot.slane %v55, 2
  %v57 = vadd.f32 %v55, %v56
  %v58 = vrot.slane %v57, 1
  %v59 = vadd.f32 %v57, %v58
  %v60 = vadd.f32 %v38, %v59
  %61 = vst [vmem:[#allocation2] sm:$0x1] %v60
  %v62 = vld [vmem:[#allocation3] sm:$0x1]
  %v63 = vmul.f32 %v22, %v22
  %v64 = vmul.f32 %v23, %v23
  %v65 = vmul.f32 %v24, %v24
  %v66 = vmul.f32 %v25, %v25
  %v67 = vmul.f32 %v26, %v26
  %v68 = vmul.f32 %v27, %v27
  %v69 = vmul.f32 %v28, %v28
  %v70 = vmul.f32 %v29, %v29
  %v71 = vmul.f32 %v30, %v30
  %v72 = vmul.f32 %v31, %v31
  %v73 = vmul.f32 %v32, %v32
  %v74 = vmul.f32 %v33, %v33
  %v75 = vmul.f32 %v34, %v34
  %v76 = vmul.f32 %v35, %v35
  %v77 = vmul.f32 %v36, %v36
  %v78 = vmul.f32 %v37, %v37
  %v79 = vadd.f32 %v63, %v64
  %v80 = vadd.f32 %v79, %v65
  %v81 = vadd.f32 %v80, %v66
  %v82 = vadd.f32 %v81, %v67
  %v83 = vadd.f32 %v82, %v68
  %v84 = vadd.f32 %v83, %v69
  %v85 = vadd.f32 %v84, %v70
  %v86 = vadd.f32 %v85, %v71
  %v87 = vadd.f32 %v86, %v72
  %v88 = vadd.f32 %v87, %v73
  %v89 = vadd.f32 %v88, %v74
  %v90 = vadd.f32 %v89, %v75
  %v91 = vadd.f32 %v90, %v76
  %v92 = vadd.f32 %v91, %v77
  %v93 = vadd.f32 %v92, %v78
  %v94 = vrot.slane %v93, 4
  %v95 = vadd.f32 %v93, %v94
  %v96 = vrot.slane %v95, 2
  %v97 = vadd.f32 %v95, %v96
  %v98 = vrot.slane %v97, 1
  %v99 = vadd.f32 %v97, %v98
  %v100 = vadd.f32 %v62, %v99
  %101 = vst [vmem:[#allocation3] sm:$0x1] %v100
  // Predicated region
  $region18: #{run.8} parent=0 // pred_check
    %p102 = pneg %p16
  $region19: #{run.8} parent=0 // pred_check_branch
    %104 = sbr.rel (%p102) target = $region21
  $region20: #{run.8} parent=0 // pred_region
    %v105 = vld [vmem:[#allocation2] sm:$0x1]
    %v106 = vmul.f32 %v105, 0.0078125
    %v107 = vld [vmem:[#allocation3] sm:$0x1]
    %v108 = vmul.f32 %v107, 0.0078125
    %v109 = vmul.f32 %v106, %v106
    %v110 = vsub.f32 %v108, %v109
    %v111 = vmax.f32 %v110, 0.0
    %v112 = vld [vmem:[%s1] sm:$0x1]
    %v113 = vadd.f32 %v111, 1e-05
    %v114 = vrsqrt.pop %v113
    %v115 = vmul.f32 %v114, %v113
    %v116 = vmul.f32 %v115, %v114
    %v117 = vmul.f32 0.5, %v116
    %v118 = vsub.f32 1.5, %v117
    %v119 = vmul.f32 %v114, %v118
    %vm120 = vweird.f32 %v113
    %vm121 = vweird.f32 %v114
    %vm122 = vmor %vm120, %vm121
    %v123 = vsel %vm122, %v114, %v119
    %v124 = vmul.f32 %v112, %v123
    %125 = vst [vmem:[%s3] sm:$0x1] %v124
    %v126 = vld [vmem:[%s2] sm:$0x1]
    %v127 = vmul.f32 %v106, %v124
    %v128 = vsub.f32 %v126, %v127
    %129 = vst [vmem:[%s4] sm:$0x1] %v128
  $region21: #{run.8} parent=0 // pred_fallthru
    _
  // Predicated region
  $region22: #{run.8} parent=0 // pred_check
    _
  $region23: #{run.8} parent=0 // pred_check_branch
    %131 = sbr.rel (0) target = $region25
  $region24: #{run.8} parent=0 // pred_region
    _
  $region25: #{run.8} parent=0 // pred_fallthru
    _
  // Predicated region
  $region26: #{run.8} parent=0 // pred_check
    _
  $region27: #{run.8} parent=0 // pred_check_branch
    %133 = sbr.rel (0) target = $region29
  $region28: #{run.8} parent=0 // pred_region
    _
  $region29: #{run.8} parent=0 // pred_fallthru
    _
  // Predicated region
  $region30: #{run.8} parent=0 // pred_check
    _
  $region31: #{run.8} parent=0 // pred_check_branch
    %135 = sbr.rel (0) target = $region33
  $region32: #{run.8} parent=0 // pred_region
    _
  $region33: #{run.8} parent=0 // pred_fallthru
    _
  // Predicated region
  $region34: #{run.8} parent=0 // pred_check
    _
  $region35: #{run.8} parent=0 // pred_check_branch
    %137 = sbr.rel (0) target = $region37
  $region36: #{run.8} parent=0 // pred_region
    _
  $region37: #{run.8} parent=0 // pred_fallthru
    _

// kernel: run.9
$region0: #{run.9}
  #allocation0 [shape = 'u32[]', space=smem, size = 0x4, offset = 0x4, fixed_abs, tag = 'smem constant byte address 0x4 - core index']
  #allocation1 [shape = 'u32[72,128]{1,0:T(1,128)}', space=vmem, size = 0x9000, scoped, tag = 'internal scratch']
  %s0 = inlined_call_operand.vmem [shape: f32[128,128], index: 0, kind: input, shape index: {}]
  %s1 = inlined_call_operand.vmem [shape: f32[1,128], index: 1, kind: input, shape index: {}]
  %s2 = inlined_call_operand.vmem [shape: f32[1,128], index: 2, kind: input, shape index: {}]
  %s3 = inlined_call_operand.vmem [shape: f32[128,128], index: 3, kind: input, shape index: {}]
  %s4 = inlined_call_operand.vmem [shape: f32[128,128], index: 4, kind: input, shape index: {}]
  %s5 = inlined_call_operand.vmem [shape: f32[128,128], index: 5, kind: output, shape index: {0}]
  %s6 = inlined_call_operand.vmem [shape: f32[128,128], index: 6, kind: output, shape index: {1}]
  %7 = xla_tuple %s5, %s6
  %s8 = sld [smem:[#allocation0]]
  $region38: #{run.9} parent=0
    _
  %s10 = ssub.s32 1, %s8
  %s11 = scalar_select 0, %s10, %s8
  // Predicated region
  $region2: #{run.9} parent=0 // pred_check
    _
  $region3: #{run.9} parent=0 // pred_check_branch
    %13 = sbr.rel (0) target = $region5
  $region4: #{run.9} parent=0 // pred_region
    _
  $region5: #{run.9} parent=0 // pred_fallthru
    _
  // Predicated region
  $region6: #{run.9} parent=0 // pred_check
    _
  $region7: #{run.9} parent=0 // pred_check_branch
    %15 = sbr.rel (0) target = $region9
  $region8: #{run.9} parent=0 // pred_region
    _
  $region9: #{run.9} parent=0 // pred_fallthru
    _
  // Predicated region
  $region10: #{run.9} parent=0 // pred_check
    _
  $region11: #{run.9} parent=0 // pred_check_branch
    %17 = sbr.rel (0) target = $region13
  $region12: #{run.9} parent=0 // pred_region
    _
  $region13: #{run.9} parent=0 // pred_fallthru
    _
  // Predicated region
  $region14: #{run.9} parent=0 // pred_check
    _
  $region15: #{run.9} parent=0 // pred_check_branch
    %19 = sbr.rel (0) target = $region17
  $region16: #{run.9} parent=0 // pred_region
    _
  $region17: #{run.9} parent=0 // pred_fallthru
    _
  // Predicated region
  $region18: #{run.9} parent=0 // pred_check
    _
  $region19: #{run.9} parent=0 // pred_check_branch
    %21 = sbr.rel (0) target = $region21
  $region20: #{run.9} parent=0 // pred_region
    _
  $region21: #{run.9} parent=0 // pred_fallthru
    _
  %v22 = vld [vmem:[%s0] sm:$0xff]
  %v23 = vld [vmem:[%s0 + $0x8] sm:$0xff]
  %v24 = vld [vmem:[%s0 + $0x10] sm:$0xff]
  %v25 = vld [vmem:[%s0 + $0x18] sm:$0xff]
  %v26 = vld [vmem:[%s0 + $0x20] sm:$0xff]
  %v27 = vld [vmem:[%s0 + $0x28] sm:$0xff]
  %v28 = vld [vmem:[%s0 + $0x30] sm:$0xff]
  %v29 = vld [vmem:[%s0 + $0x38] sm:$0xff]
  %v30 = vld [vmem:[%s0 + $0x40] sm:$0xff]
  %v31 = vld [vmem:[%s0 + $0x48] sm:$0xff]
  %v32 = vld [vmem:[%s0 + $0x50] sm:$0xff]
  %v33 = vld [vmem:[%s0 + $0x58] sm:$0xff]
  %v34 = vld [vmem:[%s0 + $0x60] sm:$0xff]
  %v35 = vld [vmem:[%s0 + $0x68] sm:$0xff]
  %v36 = vld [vmem:[%s0 + $0x70] sm:$0xff]
  %v37 = vld [vmem:[%s0 + $0x78] sm:$0xff]
  %v38 = vld [vmem:[%s1] sm:$0x1]
  %v40 = vperm.slane %v38, 0
  %v42 = vmul.f32 %v22, %v40
  %v43 = vmul.f32 %v23, %v40
  %v44 = vmul.f32 %v24, %v40
  %v45 = vmul.f32 %v25, %v40
  %v46 = vmul.f32 %v26, %v40
  %v47 = vmul.f32 %v27, %v40
  %v48 = vmul.f32 %v28, %v40
  %v49 = vmul.f32 %v29, %v40
  %v50 = vmul.f32 %v30, %v40
  %v51 = vmul.f32 %v31, %v40
  %v52 = vmul.f32 %v32, %v40
  %v53 = vmul.f32 %v33, %v40
  %v54 = vmul.f32 %v34, %v40
  %v55 = vmul.f32 %v35, %v40
  %v56 = vmul.f32 %v36, %v40
  %v57 = vmul.f32 %v37, %v40
  %v58 = vld [vmem:[%s2] sm:$0x1]
  %v60 = vperm.slane %v58, 0
  %v62 = vadd.f32 %v42, %v60
  %v63 = vadd.f32 %v43, %v60
  %v64 = vadd.f32 %v44, %v60
  %v65 = vadd.f32 %v45, %v60
  %v66 = vadd.f32 %v46, %v60
  %v67 = vadd.f32 %v47, %v60
  %v68 = vadd.f32 %v48, %v60
  %v69 = vadd.f32 %v49, %v60
  %v70 = vadd.f32 %v50, %v60
  %v71 = vadd.f32 %v51, %v60
  %v72 = vadd.f32 %v52, %v60
  %v73 = vadd.f32 %v53, %v60
  %v74 = vadd.f32 %v54, %v60
  %v75 = vadd.f32 %v55, %v60
  %v76 = vadd.f32 %v56, %v60
  %v77 = vadd.f32 %v57, %v60
  %v78 = vmax.f32 %v62, 0.0
  %v79 = vmax.f32 %v63, 0.0
  %v80 = vmax.f32 %v64, 0.0
  %v81 = vmax.f32 %v65, 0.0
  %v82 = vmax.f32 %v66, 0.0
  %v83 = vmax.f32 %v67, 0.0
  %v84 = vmax.f32 %v68, 0.0
  %v85 = vmax.f32 %v69, 0.0
  %v86 = vmax.f32 %v70, 0.0
  %v87 = vmax.f32 %v71, 0.0
  %v88 = vmax.f32 %v72, 0.0
  %v89 = vmax.f32 %v73, 0.0
  %v90 = vmax.f32 %v74, 0.0
  %v91 = vmax.f32 %v75, 0.0
  %v92 = vmax.f32 %v76, 0.0
  %v93 = vmax.f32 %v77, 0.0
  %v94 = vld [vmem:[%s3] sm:$0xff]
  %v95 = vld [vmem:[%s3 + $0x8] sm:$0xff]
  %v96 = vld [vmem:[%s3 + $0x10] sm:$0xff]
  %v97 = vld [vmem:[%s3 + $0x18] sm:$0xff]
  %v98 = vld [vmem:[%s3 + $0x20] sm:$0xff]
  %v99 = vld [vmem:[%s3 + $0x28] sm:$0xff]
  %v100 = vld [vmem:[%s3 + $0x30] sm:$0xff]
  %v101 = vld [vmem:[%s3 + $0x38] sm:$0xff]
  %v102 = vld [vmem:[%s3 + $0x40] sm:$0xff]
  %v103 = vld [vmem:[%s3 + $0x48] sm:$0xff]
  %v104 = vld [vmem:[%s3 + $0x50] sm:$0xff]
  %v105 = vld [vmem:[%s3 + $0x58] sm:$0xff]
  %v106 = vld [vmem:[%s3 + $0x60] sm:$0xff]
  %v107 = vld [vmem:[%s3 + $0x68] sm:$0xff]
  %v108 = vld [vmem:[%s3 + $0x70] sm:$0xff]
  %v109 = vld [vmem:[%s3 + $0x78] sm:$0xff]
  %110 = vmatpush.msra.mxu0 %v109
  %111 = vmatpush.msra.mxu0 %v108
  %112 = vmatpush.msra.mxu0 %v107
  %113 = vmatpush.msra.mxu0 %v106
  %114 = vmatpush.msra.mxu0 %v105
  %115 = vmatpush.msra.mxu0 %v104
  %116 = vmatpush.msra.mxu0 %v103
  %117 = vmatpush.msra.mxu0 %v102
  %118 = vmatpush.msra.mxu0 %v101
  %119 = vmatpush.msra.mxu0 %v100
  %120 = vmatpush.msra.mxu0 %v99
  %121 = vmatpush.msra.mxu0 %v98
  %122 = vmatpush.msra.mxu0 %v97
  %123 = vmatpush.msra.mxu0 %v96
  %124 = vmatpush.msra.mxu0 %v95
  %125 = vmatpush.msra.mxu0 %v94
  %126 = vmatmul.f32.gmra.mxu0 %v78
  %v127 = vpop.f32.mrf.mxu0
  %v128 = vadd.f32 0.0, %v127
  %129 = vmatmul.f32.gmra.mxu0 %v79
  %v130 = vpop.f32.mrf.mxu0
  %v131 = vadd.f32 0.0, %v130
  %132 = vmatmul.f32.gmra.mxu0 %v80
  %v133 = vpop.f32.mrf.mxu0
  %v134 = vadd.f32 0.0, %v133
  %135 = vmatmul.f32.gmra.mxu0 %v81
  %v136 = vpop.f32.mrf.mxu0
  %v137 = vadd.f32 0.0, %v136
  %138 = vmatmul.f32.gmra.mxu0 %v82
  %v139 = vpop.f32.mrf.mxu0
  %v140 = vadd.f32 0.0, %v139
  %141 = vmatmul.f32.gmra.mxu0 %v83
  %v142 = vpop.f32.mrf.mxu0
  %v143 = vadd.f32 0.0, %v142
  %144 = vmatmul.f32.gmra.mxu0 %v84
  %v145 = vpop.f32.mrf.mxu0
  %v146 = vadd.f32 0.0, %v145
  %147 = vmatmul.f32.gmra.mxu0 %v85
  %v148 = vpop.f32.mrf.mxu0
  %v149 = vadd.f32 0.0, %v148
  %150 = vmatmul.f32.gmra.mxu0 %v86
  %v151 = vpop.f32.mrf.mxu0
  %v152 = vadd.f32 0.0, %v151
  %153 = vmatmul.f32.gmra.mxu0 %v87
  %v154 = vpop.f32.mrf.mxu0
  %v155 = vadd.f32 0.0, %v154
  %156 = vmatmul.f32.gmra.mxu0 %v88
  %v157 = vpop.f32.mrf.mxu0
  %v158 = vadd.f32 0.0, %v157
  %159 = vmatmul.f32.gmra.mxu0 %v89
  %v160 = vpop.f32.mrf.mxu0
  %v161 = vadd.f32 0.0, %v160
  %162 = vmatmul.f32.gmra.mxu0 %v90
  %v163 = vpop.f32.mrf.mxu0
  %v164 = vadd.f32 0.0, %v163
  %165 = vmatmul.f32.gmra.mxu0 %v91
  %v166 = vpop.f32.mrf.mxu0
  %v167 = vadd.f32 0.0, %v166
  %168 = vmatmul.f32.gmra.mxu0 %v92
  %v169 = vpop.f32.mrf.mxu0
  %v170 = vadd.f32 0.0, %v169
  %171 = vmatmul.f32.gmra.mxu0 %v93
  %v172 = vpop.f32.mrf.mxu0
  %v173 = vadd.f32 0.0, %v172
  %174 = vdwg.mxu0
  %175 = vst [vmem:[%s5] sm:$0xff] %v128
  %176 = vst [vmem:[%s5 + $0x8] sm:$0xff] %v131
  %177 = vst [vmem:[%s5 + $0x10] sm:$0xff] %v134
  %178 = vst [vmem:[%s5 + $0x18] sm:$0xff] %v137
  %179 = vst [vmem:[%s5 + $0x20] sm:$0xff] %v140
  %180 = vst [vmem:[%s5 + $0x28] sm:$0xff] %v143
  %181 = vst [vmem:[%s5 + $0x30] sm:$0xff] %v146
  %182 = vst [vmem:[%s5 + $0x38] sm:$0xff] %v149
  %183 = vst [vmem:[%s5 + $0x40] sm:$0xff] %v152
  %184 = vst [vmem:[%s5 + $0x48] sm:$0xff] %v155
  %185 = vst [vmem:[%s5 + $0x50] sm:$0xff] %v158
  %186 = vst [vmem:[%s5 + $0x58] sm:$0xff] %v161
  %187 = vst [vmem:[%s5 + $0x60] sm:$0xff] %v164
  %188 = vst [vmem:[%s5 + $0x68] sm:$0xff] %v167
  %189 = vst [vmem:[%s5 + $0x70] sm:$0xff] %v170
  %190 = vst [vmem:[%s5 + $0x78] sm:$0xff] %v173
  %v191 = vld [vmem:[%s4] sm:$0xff]
  %v192 = vld [vmem:[%s4 + $0x8] sm:$0xff]
  %v193 = vld [vmem:[%s4 + $0x10] sm:$0xff]
  %v194 = vld [vmem:[%s4 + $0x18] sm:$0xff]
  %v195 = vld [vmem:[%s4 + $0x20] sm:$0xff]
  %v196 = vld [vmem:[%s4 + $0x28] sm:$0xff]
  %v197 = vld [vmem:[%s4 + $0x30] sm:$0xff]
  %v198 = vld [vmem:[%s4 + $0x38] sm:$0xff]
  %v199 = vld [vmem:[%s4 + $0x40] sm:$0xff]
  %v200 = vld [vmem:[%s4 + $0x48] sm:$0xff]
  %v201 = vld [vmem:[%s4 + $0x50] sm:$0xff]
  %v202 = vld [vmem:[%s4 + $0x58] sm:$0xff]
  %v203 = vld [vmem:[%s4 + $0x60] sm:$0xff]
  %v204 = vld [vmem:[%s4 + $0x68] sm:$0xff]
  %v205 = vld [vmem:[%s4 + $0x70] sm:$0xff]
  %v206 = vld [vmem:[%s4 + $0x78] sm:$0xff]
  %207 = vmatpush.msra.mxu0 %v206
  %208 = vmatpush.msra.mxu0 %v205
  %209 = vmatpush.msra.mxu0 %v204
  %210 = vmatpush.msra.mxu0 %v203
  %211 = vmatpush.msra.mxu0 %v202
  %212 = vmatpush.msra.mxu0 %v201
  %213 = vmatpush.msra.mxu0 %v200
  %214 = vmatpush.msra.mxu0 %v199
  %215 = vmatpush.msra.mxu0 %v198
  %216 = vmatpush.msra.mxu0 %v197
  %217 = vmatpush.msra.mxu0 %v196
  %218 = vmatpush.msra.mxu0 %v195
  %219 = vmatpush.msra.mxu0 %v194
  %220 = vmatpush.msra.mxu0 %v193
  %221 = vmatpush.msra.mxu0 %v192
  %222 = vmatpush.msra.mxu0 %v191
  %223 = vmatmul.f32.gmra.mxu0 %v78
  %v224 = vpop.f32.mrf.mxu0
  %v225 = vadd.f32 0.0, %v224
  %226 = vmatmul.f32.gmra.mxu0 %v79
  %v227 = vpop.f32.mrf.mxu0
  %v228 = vadd.f32 0.0, %v227
  %229 = vmatmul.f32.gmra.mxu0 %v80
  %v230 = vpop.f32.mrf.mxu0
  %v231 = vadd.f32 0.0, %v230
  %232 = vmatmul.f32.gmra.mxu0 %v81
  %v233 = vpop.f32.mrf.mxu0
  %v234 = vadd.f32 0.0, %v233
  %235 = vmatmul.f32.gmra.mxu0 %v82
  %v236 = vpop.f32.mrf.mxu0
  %v237 = vadd.f32 0.0, %v236
  %238 = vmatmul.f32.gmra.mxu0 %v83
  %v239 = vpop.f32.mrf.mxu0
  %v240 = vadd.f32 0.0, %v239
  %241 = vmatmul.f32.gmra.mxu0 %v84
  %v242 = vpop.f32.mrf.mxu0
  %v243 = vadd.f32 0.0, %v242
  %244 = vmatmul.f32.gmra.mxu0 %v85
  %v245 = vpop.f32.mrf.mxu0
  %v246 = vadd.f32 0.0, %v245
  %247 = vmatmul.f32.gmra.mxu0 %v86
  %v248 = vpop.f32.mrf.mxu0
  %v249 = vadd.f32 0.0, %v248
  %250 = vmatmul.f32.gmra.mxu0 %v87
  %v251 = vpop.f32.mrf.mxu0
  %v252 = vadd.f32 0.0, %v251
  %253 = vmatmul.f32.gmra.mxu0 %v88
  %v254 = vpop.f32.mrf.mxu0
  %v255 = vadd.f32 0.0, %v254
  %256 = vmatmul.f32.gmra.mxu0 %v89
  %v257 = vpop.f32.mrf.mxu0
  %v258 = vadd.f32 0.0, %v257
  %259 = vmatmul.f32.gmra.mxu0 %v90
  %v260 = vpop.f32.mrf.mxu0
  %v261 = vadd.f32 0.0, %v260
  %262 = vmatmul.f32.gmra.mxu0 %v91
  %v263 = vpop.f32.mrf.mxu0
  %v264 = vadd.f32 0.0, %v263
  %265 = vmatmul.f32.gmra.mxu0 %v92
  %v266 = vpop.f32.mrf.mxu0
  %v267 = vadd.f32 0.0, %v266
  %268 = vmatmul.f32.gmra.mxu0 %v93
  %v269 = vpop.f32.mrf.mxu0
  %v270 = vadd.f32 0.0, %v269
  %271 = vdwg.mxu0
  %272 = vst [vmem:[%s6] sm:$0xff] %v225
  %273 = vst [vmem:[%s6 + $0x8] sm:$0xff] %v228
  %274 = vst [vmem:[%s6 + $0x10] sm:$0xff] %v231
  %275 = vst [vmem:[%s6 + $0x18] sm:$0xff] %v234
  %276 = vst [vmem:[%s6 + $0x20] sm:$0xff] %v237
  %277 = vst [vmem:[%s6 + $0x28] sm:$0xff] %v240
  %278 = vst [vmem:[%s6 + $0x30] sm:$0xff] %v243
  %279 = vst [vmem:[%s6 + $0x38] sm:$0xff] %v246
  %280 = vst [vmem:[%s6 + $0x40] sm:$0xff] %v249
  %281 = vst [vmem:[%s6 + $0x48] sm:$0xff] %v252
  %282 = vst [vmem:[%s6 + $0x50] sm:$0xff] %v255
  %283 = vst [vmem:[%s6 + $0x58] sm:$0xff] %v258
  %284 = vst [vmem:[%s6 + $0x60] sm:$0xff] %v261
  %285 = vst [vmem:[%s6 + $0x68] sm:$0xff] %v264
  %286 = vst [vmem:[%s6 + $0x70] sm:$0xff] %v267
  %287 = vst [vmem:[%s6 + $0x78] sm:$0xff] %v270
  // Predicated region
  $region22: #{run.9} parent=0 // pred_check
    _
  $region23: #{run.9} parent=0 // pred_check_branch
    %289 = sbr.rel (0) target = $region25
  $region24: #{run.9} parent=0 // pred_region
    _
  $region25: #{run.9} parent=0 // pred_fallthru
    _
  // Predicated region
  $region26: #{run.9} parent=0 // pred_check
    _
  $region27: #{run.9} parent=0 // pred_check_branch
    %291 = sbr.rel (0) target = $region29
  $region28: #{run.9} parent=0 // pred_region
    _
  $region29: #{run.9} parent=0 // pred_fallthru
    _
  // Predicated region
  $region30: #{run.9} parent=0 // pred_check
    _
  $region31: #{run.9} parent=0 // pred_check_branch
    %293 = sbr.rel (0) target = $region33
  $region32: #{run.9} parent=0 // pred_region
    _
  $region33: #{run.9} parent=0 // pred_fallthru
    _
  // Predicated region
  $region34: #{run.9} parent=0 // pred_check
    _
  $region35: #{run.9} parent=0 // pred_check_branch
    %295 = sbr.rel (0) target = $region37
  $region36: #{run.9} parent=0 // pred_region
    _
  $region37: #{run.9} parent=0 // pred_fallthru
    _

// kernel: run.13
$region0: #{run.13}
  #allocation0 [shape = 'u32[]', space=smem, size = 0x4, offset = 0x4, fixed_abs, tag = 'smem constant byte address 0x4 - core index']
  #allocation1 [shape = 'u32[72,128]{1,0:T(1,128)}', space=vmem, size = 0x9000, scoped, tag = 'internal scratch']
  %s0 = inlined_call_operand.vmem [shape: f32[128,128], index: 0, kind: input, shape index: {}]
  %s1 = inlined_call_operand.vmem [shape: f32[1,128], index: 1, kind: input, shape index: {}]
  %s2 = inlined_call_operand.vmem [shape: f32[1,128], index: 2, kind: input, shape index: {}]
  %s3 = inlined_call_operand.vmem [shape: f32[128,128], index: 3, kind: input, shape index: {}]
  %s4 = inlined_call_operand.vmem [shape: f32[128,128], index: 4, kind: output, shape index: {}]
  %s5 = sld [smem:[#allocation0]]
  $region26: #{run.13} parent=0
    _
  %s7 = ssub.s32 1, %s5
  %s8 = scalar_select 0, %s7, %s5
  // Predicated region
  $region2: #{run.13} parent=0 // pred_check
    _
  $region3: #{run.13} parent=0 // pred_check_branch
    %10 = sbr.rel (0) target = $region5
  $region4: #{run.13} parent=0 // pred_region
    _
  $region5: #{run.13} parent=0 // pred_fallthru
    _
  // Predicated region
  $region6: #{run.13} parent=0 // pred_check
    _
  $region7: #{run.13} parent=0 // pred_check_branch
    %12 = sbr.rel (0) target = $region9
  $region8: #{run.13} parent=0 // pred_region
    _
  $region9: #{run.13} parent=0 // pred_fallthru
    _
  // Predicated region
  $region10: #{run.13} parent=0 // pred_check
    _
  $region11: #{run.13} parent=0 // pred_check_branch
    %14 = sbr.rel (0) target = $region13
  $region12: #{run.13} parent=0 // pred_region
    _
  $region13: #{run.13} parent=0 // pred_fallthru
    _
  // Predicated region
  $region14: #{run.13} parent=0 // pred_check
    _
  $region15: #{run.13} parent=0 // pred_check_branch
    %16 = sbr.rel (0) target = $region17
  $region16: #{run.13} parent=0 // pred_region
    _
  $region17: #{run.13} parent=0 // pred_fallthru
    _
  %v17 = vld [vmem:[%s0] sm:$0xff]
  %v18 = vld [vmem:[%s0 + $0x8] sm:$0xff]
  %v19 = vld [vmem:[%s0 + $0x10] sm:$0xff]
  %v20 = vld [vmem:[%s0 + $0x18] sm:$0xff]
  %v21 = vld [vmem:[%s0 + $0x20] sm:$0xff]
  %v22 = vld [vmem:[%s0 + $0x28] sm:$0xff]
  %v23 = vld [vmem:[%s0 + $0x30] sm:$0xff]
  %v24 = vld [vmem:[%s0 + $0x38] sm:$0xff]
  %v25 = vld [vmem:[%s0 + $0x40] sm:$0xff]
  %v26 = vld [vmem:[%s0 + $0x48] sm:$0xff]
  %v27 = vld [vmem:[%s0 + $0x50] sm:$0xff]
  %v28 = vld [vmem:[%s0 + $0x58] sm:$0xff]
  %v29 = vld [vmem:[%s0 + $0x60] sm:$0xff]
  %v30 = vld [vmem:[%s0 + $0x68] sm:$0xff]
  %v31 = vld [vmem:[%s0 + $0x70] sm:$0xff]
  %v32 = vld [vmem:[%s0 + $0x78] sm:$0xff]
  %v33 = vld [vmem:[%s1] sm:$0x1]
  %v35 = vperm.slane %v33, 0
  %v37 = vmul.f32 %v17, %v35
  %v38 = vmul.f32 %v18, %v35
  %v39 = vmul.f32 %v19, %v35
  %v40 = vmul.f32 %v20, %v35
  %v41 = vmul.f32 %v21, %v35
  %v42 = vmul.f32 %v22, %v35
  %v43 = vmul.f32 %v23, %v35
  %v44 = vmul.f32 %v24, %v35
  %v45 = vmul.f32 %v25, %v35
  %v46 = vmul.f32 %v26, %v35
  %v47 = vmul.f32 %v27, %v35
  %v48 = vmul.f32 %v28, %v35
  %v49 = vmul.f32 %v29, %v35
  %v50 = vmul.f32 %v30, %v35
  %v51 = vmul.f32 %v31, %v35
  %v52 = vmul.f32 %v32, %v35
  %v53 = vld [vmem:[%s2] sm:$0x1]
  %v55 = vperm.slane %v53, 0
  %v57 = vadd.f32 %v37, %v55
  %v58 = vadd.f32 %v38, %v55
  %v59 = vadd.f32 %v39, %v55
  %v60 = vadd.f32 %v40, %v55
  %v61 = vadd.f32 %v41, %v55
  %v62 = vadd.f32 %v42, %v55
  %v63 = vadd.f32 %v43, %v55
  %v64 = vadd.f32 %v44, %v55
  %v65 = vadd.f32 %v45, %v55
  %v66 = vadd.f32 %v46, %v55
  %v67 = vadd.f32 %v47, %v55
  %v68 = vadd.f32 %v48, %v55
  %v69 = vadd.f32 %v49, %v55
  %v70 = vadd.f32 %v50, %v55
  %v71 = vadd.f32 %v51, %v55
  %v72 = vadd.f32 %v52, %v55
  %v73 = vmax.f32 %v57, 0.0
  %v74 = vmax.f32 %v58, 0.0
  %v75 = vmax.f32 %v59, 0.0
  %v76 = vmax.f32 %v60, 0.0
  %v77 = vmax.f32 %v61, 0.0
  %v78 = vmax.f32 %v62, 0.0
  %v79 = vmax.f32 %v63, 0.0
  %v80 = vmax.f32 %v64, 0.0
  %v81 = vmax.f32 %v65, 0.0
  %v82 = vmax.f32 %v66, 0.0
  %v83 = vmax.f32 %v67, 0.0
  %v84 = vmax.f32 %v68, 0.0
  %v85 = vmax.f32 %v69, 0.0
  %v86 = vmax.f32 %v70, 0.0
  %v87 = vmax.f32 %v71, 0.0
  %v88 = vmax.f32 %v72, 0.0
  %v89 = vld [vmem:[%s3] sm:$0xff]
  %v90 = vld [vmem:[%s3 + $0x8] sm:$0xff]
  %v91 = vld [vmem:[%s3 + $0x10] sm:$0xff]
  %v92 = vld [vmem:[%s3 + $0x18] sm:$0xff]
  %v93 = vld [vmem:[%s3 + $0x20] sm:$0xff]
  %v94 = vld [vmem:[%s3 + $0x28] sm:$0xff]
  %v95 = vld [vmem:[%s3 + $0x30] sm:$0xff]
  %v96 = vld [vmem:[%s3 + $0x38] sm:$0xff]
  %v97 = vld [vmem:[%s3 + $0x40] sm:$0xff]
  %v98 = vld [vmem:[%s3 + $0x48] sm:$0xff]
  %v99 = vld [vmem:[%s3 + $0x50] sm:$0xff]
  %v100 = vld [vmem:[%s3 + $0x58] sm:$0xff]
  %v101 = vld [vmem:[%s3 + $0x60] sm:$0xff]
  %v102 = vld [vmem:[%s3 + $0x68] sm:$0xff]
  %v103 = vld [vmem:[%s3 + $0x70] sm:$0xff]
  %v104 = vld [vmem:[%s3 + $0x78] sm:$0xff]
  %105 = vmatpush.msra.mxu0 %v104
  %106 = vmatpush.msra.mxu0 %v103
  %107 = vmatpush.msra.mxu0 %v102
  %108 = vmatpush.msra.mxu0 %v101
  %109 = vmatpush.msra.mxu0 %v100
  %110 = vmatpush.msra.mxu0 %v99
  %111 = vmatpush.msra.mxu0 %v98
  %112 = vmatpush.msra.mxu0 %v97
  %113 = vmatpush.msra.mxu0 %v96
  %114 = vmatpush.msra.mxu0 %v95
  %115 = vmatpush.msra.mxu0 %v94
  %116 = vmatpush.msra.mxu0 %v93
  %117 = vmatpush.msra.mxu0 %v92
  %118 = vmatpush.msra.mxu0 %v91
  %119 = vmatpush.msra.mxu0 %v90
  %120 = vmatpush.msra.mxu0 %v89
  %121 = vmatmul.f32.gmra.mxu0 %v73
  %v122 = vpop.f32.mrf.mxu0
  %v123 = vadd.f32 0.0, %v122
  %124 = vmatmul.f32.gmra.mxu0 %v74
  %v125 = vpop.f32.mrf.mxu0
  %v126 = vadd.f32 0.0, %v125
  %127 = vmatmul.f32.gmra.mxu0 %v75
  %v128 = vpop.f32.mrf.mxu0
  %v129 = vadd.f32 0.0, %v128
  %130 = vmatmul.f32.gmra.mxu0 %v76
  %v131 = vpop.f32.mrf.mxu0
  %v132 = vadd.f32 0.0, %v131
  %133 = vmatmul.f32.gmra.mxu0 %v77
  %v134 = vpop.f32.mrf.mxu0
  %v135 = vadd.f32 0.0, %v134
  %136 = vmatmul.f32.gmra.mxu0 %v78
  %v137 = vpop.f32.mrf.mxu0
  %v138 = vadd.f32 0.0, %v137
  %139 = vmatmul.f32.gmra.mxu0 %v79
  %v140 = vpop.f32.mrf.mxu0
  %v141 = vadd.f32 0.0, %v140
  %142 = vmatmul.f32.gmra.mxu0 %v80
  %v143 = vpop.f32.mrf.mxu0
  %v144 = vadd.f32 0.0, %v143
  %145 = vmatmul.f32.gmra.mxu0 %v81
  %v146 = vpop.f32.mrf.mxu0
  %v147 = vadd.f32 0.0, %v146
  %148 = vmatmul.f32.gmra.mxu0 %v82
  %v149 = vpop.f32.mrf.mxu0
  %v150 = vadd.f32 0.0, %v149
  %151 = vmatmul.f32.gmra.mxu0 %v83
  %v152 = vpop.f32.mrf.mxu0
  %v153 = vadd.f32 0.0, %v152
  %154 = vmatmul.f32.gmra.mxu0 %v84
  %v155 = vpop.f32.mrf.mxu0
  %v156 = vadd.f32 0.0, %v155
  %157 = vmatmul.f32.gmra.mxu0 %v85
  %v158 = vpop.f32.mrf.mxu0
  %v159 = vadd.f32 0.0, %v158
  %160 = vmatmul.f32.gmra.mxu0 %v86
  %v161 = vpop.f32.mrf.mxu0
  %v162 = vadd.f32 0.0, %v161
  %163 = vmatmul.f32.gmra.mxu0 %v87
  %v164 = vpop.f32.mrf.mxu0
  %v165 = vadd.f32 0.0, %v164
  %166 = vmatmul.f32.gmra.mxu0 %v88
  %v167 = vpop.f32.mrf.mxu0
  %v168 = vadd.f32 0.0, %v167
  %169 = vdwg.mxu0
  %170 = vst [vmem:[%s4] sm:$0xff] %v123
  %171 = vst [vmem:[%s4 + $0x8] sm:$0xff] %v126
  %172 = vst [vmem:[%s4 + $0x10] sm:$0xff] %v129
  %173 = vst [vmem:[%s4 + $0x18] sm:$0xff] %v132
  %174 = vst [vmem:[%s4 + $0x20] sm:$0xff] %v135
  %175 = vst [vmem:[%s4 + $0x28] sm:$0xff] %v138
  %176 = vst [vmem:[%s4 + $0x30] sm:$0xff] %v141
  %177 = vst [vmem:[%s4 + $0x38] sm:$0xff] %v144
  %178 = vst [vmem:[%s4 + $0x40] sm:$0xff] %v147
  %179 = vst [vmem:[%s4 + $0x48] sm:$0xff] %v150
  %180 = vst [vmem:[%s4 + $0x50] sm:$0xff] %v153
  %181 = vst [vmem:[%s4 + $0x58] sm:$0xff] %v156
  %182 = vst [vmem:[%s4 + $0x60] sm:$0xff] %v159
  %183 = vst [vmem:[%s4 + $0x68] sm:$0xff] %v162
  %184 = vst [vmem:[%s4 + $0x70] sm:$0xff] %v165
  %185 = vst [vmem:[%s4 + $0x78] sm:$0xff] %v168
  // Predicated region
  $region18: #{run.13} parent=0 // pred_check
    _
  $region19: #{run.13} parent=0 // pred_check_branch
    %187 = sbr.rel (0) target = $region21
  $region20: #{run.13} parent=0 // pred_region
    _
  $region21: #{run.13} parent=0 // pred_fallthru
    _
  // Predicated region
  $region22: #{run.13} parent=0 // pred_check
    _
  $region23: #{run.13} parent=0 // pred_check_branch
    %189 = sbr.rel (0) target = $region25
  $region24: #{run.13} parent=0 // pred_region
    _
  $region25: #{run.13} parent=0 // pred_fallthru
    _

// kernel: run.11
$region0: #{run.11}
  #allocation0 [shape = 'u32[]', space=smem, size = 0x4, offset = 0x4, fixed_abs, tag = 'smem constant byte address 0x4 - core index']
  #allocation1 [shape = 'u32[72,128]{1,0:T(1,128)}', space=vmem, size = 0x9000, scoped, tag = 'internal scratch']
  %s0 = inlined_call_operand.vmem [shape: f32[2,10,10,128], index: 0, kind: input, shape index: {}]
  %s1 = inlined_call_operand.vmem [shape: f32[1,128], index: 1, kind: input, shape index: {}]
  %s2 = inlined_call_operand.vmem [shape: f32[1,128], index: 2, kind: input, shape index: {}]
  %s3 = inlined_call_operand.vmem [shape: f32[10,10,1], index: 3, kind: input, shape index: {}]
  %s4 = inlined_call_operand.vmem [shape: f32[9,128,128], index: 4, kind: input, shape index: {}]
  %s5 = inlined_call_operand.vmem [shape: f32[2,64,128], index: 5, kind: output, shape index: {}]
  %s6 = sld [smem:[#allocation0]]
  $region53: #{run.11} parent=0
    _
  %s8 = ssub.s32 1, %s6
  %s9 = scalar_select 0, %s8, %s6
  loop: start=0, step=1, limit=4
  $region2: #{run.11} parent=0 // loop_pre_header
    _
  $region3: #{run.11} parent=0 // loop_header
    %s11 = sphi 0, %s15
    %p12 = scmp.ge.s32.totalorder %s11, 4
    %s21 = sphi 0, %s23
    %s24 = sphi 0, %s21
    %s25 = sphi 0, %s24
    %s41 = sphi 0, %s25
    %s45 = sphi 0, %s45
    %s47 = sphi 0, %s45
    %s48 = sphi 0, %s47
    %s62 = sphi 0, %s48
    %s66 = sphi 0, %s66
    %s68 = sphi 0, %s66
    %s69 = sphi 0, %s68
    %s83 = sphi 0, %s69
    %s87 = sphi 0, %s87
    %s89 = sphi 0, %s87
    %s90 = sphi 0, %s89
    %s104 = sphi 0, %s90
    %s108 = sphi 0, %s108
    %s110 = sphi 0, %s108
    %s111 = sphi 0, %s110
    %s125 = sphi 0, %s111
    %s131 = sphi 0, %s133
    %s134 = sphi 0, %s131
    %s135 = sphi 0, %s134
    %s151 = sphi 0, %s135
  $region4: #{run.11} parent=0 // loop_header_branch
    %14 = sbr.rel (%p12) target = $region8
  $region5: #{run.11} parent=0 // loop_body
    %s16 = ssub.s32 %s11, 1
    %s17 = ssub.s32 %s11, 2
    %s18 = sadd.s32 %s11, 1
    %s19 = ssub.s32 %s11, %s18
    %p20 = scmp.eq.s32.totalorder %s19, 0
    %s22 = sadd.s32 %s21, 1
    %s23 = scalar_select %p20, %s21, %s22
    %p26 = pneg %p20
    %p27 = scmp.eq.s32.totalorder %s11, 1
    %p28 = por %p26, %p27
    %p29 = scmp.ne.s32.totalorder %s21, %s24
    %p30 = scmp.eq.s32.totalorder %s11, 0
    %p31 = por %p29, %p30
    %p32 = scmp.ne.s32.totalorder %s21, %s24
    %p33 = scmp.eq.s32.totalorder %s16, 1
    %p34 = por %p32, %p33
    %p35 = scmp.ne.s32.totalorder %s24, %s25
    %p36 = scmp.eq.s32.totalorder %s16, 0
    %p37 = por %p35, %p36
    %p38 = scmp.ne.s32.totalorder %s24, %s25
    %p39 = scmp.eq.s32.totalorder %s17, 1
    %p40 = por %p38, %p39
    %p42 = scmp.ne.s32.totalorder %s25, %s41
    %p43 = scmp.eq.s32.totalorder %s17, 0
    %p44 = por %p42, %p43
    %s46 = sadd.s32 %s45, 1
    %p49 = scmp.eq.s32.totalorder %s11, 1
    %p50 = scmp.ne.s32.totalorder %s45, %s47
    %p51 = scmp.eq.s32.totalorder %s11, 0
    %p52 = por %p50, %p51
    %p53 = scmp.ne.s32.totalorder %s45, %s47
    %p54 = scmp.eq.s32.totalorder %s16, 1
    %p55 = por %p53, %p54
    %p56 = scmp.ne.s32.totalorder %s47, %s48
    %p57 = scmp.eq.s32.totalorder %s16, 0
    %p58 = por %p56, %p57
    %p59 = scmp.ne.s32.totalorder %s47, %s48
    %p60 = scmp.eq.s32.totalorder %s17, 1
    %p61 = por %p59, %p60
    %p63 = scmp.ne.s32.totalorder %s48, %s62
    %p64 = scmp.eq.s32.totalorder %s17, 0
    %p65 = por %p63, %p64
    %s67 = sadd.s32 %s66, 1
    %p70 = scmp.eq.s32.totalorder %s11, 1
    %p71 = scmp.ne.s32.totalorder %s66, %s68
    %p72 = scmp.eq.s32.totalorder %s11, 0
    %p73 = por %p71, %p72
    %p74 = scmp.ne.s32.totalorder %s66, %s68
    %p75 = scmp.eq.s32.totalorder %s16, 1
    %p76 = por %p74, %p75
    %p77 = scmp.ne.s32.totalorder %s68, %s69
    %p78 = scmp.eq.s32.totalorder %s16, 0
    %p79 = por %p77, %p78
    %p80 = scmp.ne.s32.totalorder %s68, %s69
    %p81 = scmp.eq.s32.totalorder %s17, 1
    %p82 = por %p80, %p81
    %p84 = scmp.ne.s32.totalorder %s69, %s83
    %p85 = scmp.eq.s32.totalorder %s17, 0
    %p86 = por %p84, %p85
    %s88 = sadd.s32 %s87, 1
    %p91 = scmp.eq.s32.totalorder %s11, 1
    %p92 = scmp.ne.s32.totalorder %s87, %s89
    %p93 = scmp.eq.s32.totalorder %s11, 0
    %p94 = por %p92, %p93
    %p95 = scmp.ne.s32.totalorder %s87, %s89
    %p96 = scmp.eq.s32.totalorder %s16, 1
    %p97 = por %p95, %p96
    %p98 = scmp.ne.s32.totalorder %s89, %s90
    %p99 = scmp.eq.s32.totalorder %s16, 0
    %p100 = por %p98, %p99
    %p101 = scmp.ne.s32.totalorder %s89, %s90
    %p102 = scmp.eq.s32.totalorder %s17, 1
    %p103 = por %p101, %p102
    %p105 = scmp.ne.s32.totalorder %s90, %s104
    %p106 = scmp.eq.s32.totalorder %s17, 0
    %p107 = por %p105, %p106
    %s109 = sadd.s32 %s108, 1
    %p112 = scmp.eq.s32.totalorder %s11, 1
    %p113 = scmp.ne.s32.totalorder %s108, %s110
    %p114 = scmp.eq.s32.totalorder %s11, 0
    %p115 = por %p113, %p114
    %p116 = scmp.ne.s32.totalorder %s108, %s110
    %p117 = scmp.eq.s32.totalorder %s16, 1
    %p118 = por %p116, %p117
    %p119 = scmp.ne.s32.totalorder %s110, %s111
    %p120 = scmp.eq.s32.totalorder %s16, 0
    %p121 = por %p119, %p120
    %p122 = scmp.ne.s32.totalorder %s110, %s111
    %p123 = scmp.eq.s32.totalorder %s17, 1
    %p124 = por %p122, %p123
    %p126 = scmp.ne.s32.totalorder %s111, %s125
    %p127 = scmp.eq.s32.totalorder %s17, 0
    %p128 = por %p126, %p127
    %s129 = ssub.s32 %s11, %s18
    %p130 = scmp.eq.s32.totalorder %s129, 0
    %s132 = sadd.s32 %s131, 1
    %s133 = scalar_select %p130, %s131, %s132
    %p136 = pneg %p130
    %p137 = scmp.eq.s32.totalorder %s11, 1
    %p138 = por %p136, %p137
    %p139 = scmp.ne.s32.totalorder %s131, %s134
    %p140 = scmp.eq.s32.totalorder %s11, 0
    %p141 = por %p139, %p140
    %p142 = scmp.ne.s32.totalorder %s131, %s134
    %p143 = scmp.eq.s32.totalorder %s16, 1
    %p144 = por %p142, %p143
    %p145 = scmp.ne.s32.totalorder %s134, %s135
    %p146 = scmp.eq.s32.totalorder %s16, 0
    %p147 = por %p145, %p146
    %p148 = scmp.ne.s32.totalorder %s134, %s135
    %p149 = scmp.eq.s32.totalorder %s17, 1
    %p150 = por %p148, %p149
    %p152 = scmp.ne.s32.totalorder %s135, %s151
    %p153 = scmp.eq.s32.totalorder %s17, 0
    %p154 = por %p152, %p153
    %p155 = scmp.le.s32.totalorder 1, %s11
    %p156 = scmp.lt.s32.totalorder %s11, 3
    %p157 = pnand %p155, %p156
    %p158 = pneg %p157
    // Predicated region
    $region9: #{run.11} parent=5 // pred_check
      _
    $region10: #{run.11} parent=5 // pred_check_branch
      %160 = sbr.rel (%p157) target = $region12
    $region11: #{run.11} parent=5 // pred_region
      %s161 = ssub.s32 %s11, 1
      // Predicated region
      $region13: #{run.11} parent=11 // pred_check
        %p162 = pneg %p58
      $region14: #{run.11} parent=11 // pred_check_branch
        %164 = sbr.rel (%p162) target = $region16
      $region15: #{run.11} parent=11 // pred_region
        _
      $region16: #{run.11} parent=11 // pred_fallthru
        _
      // Predicated region
      $region17: #{run.11} parent=11 // pred_check
        %p165 = pneg %p79
      $region18: #{run.11} parent=11 // pred_check_branch
        %167 = sbr.rel (%p165) target = $region20
      $region19: #{run.11} parent=11 // pred_region
        _
      $region20: #{run.11} parent=11 // pred_fallthru
        _
      // Predicated region
      $region21: #{run.11} parent=11 // pred_check
        %p168 = pneg %p100
      $region22: #{run.11} parent=11 // pred_check_branch
        %170 = sbr.rel (%p168) target = $region24
      $region23: #{run.11} parent=11 // pred_region
        _
      $region24: #{run.11} parent=11 // pred_fallthru
        _
      // Predicated region
      $region25: #{run.11} parent=11 // pred_check
        %p171 = pneg %p121
      $region26: #{run.11} parent=11 // pred_check_branch
        %173 = sbr.rel (%p171) target = $region28
      $region27: #{run.11} parent=11 // pred_region
        _
      $region28: #{run.11} parent=11 // pred_fallthru
        _
    $region12: #{run.11} parent=5 // pred_fallthru
      _
    %p174 = scmp.lt.s32.totalorder %s11, 2
    // Predicated region
    $region29: #{run.11} parent=5 // pred_check
      %p175 = pneg %p174
    $region30: #{run.11} parent=5 // pred_check_branch
      %177 = sbr.rel (%p175) target = $region32
    $region31: #{run.11} parent=5 // pred_region
      // Predicated region
      $region33: #{run.11} parent=31 // pred_check
        %p178 = pneg %p31
      $region34: #{run.11} parent=31 // pred_check_branch
        %180 = sbr.rel (%p178) target = $region36
      $region35: #{run.11} parent=31 // pred_region
        %p181 = scmp.lt.s32.totalorder %s11, 1
        %s182 = scalar_select %p181, %s11, 1
        %s183 = smul.addr %s182, 20
        %s184 = smul.addr %s183, 8
        %s185 = scalar_lea.vmem %s0, %s184
      $region36: #{run.11} parent=31 // pred_fallthru
        _
    $region32: #{run.11} parent=5 // pred_fallthru
      _
    %p186 = scmp.le.s32.totalorder 1, %s11
    %p187 = scmp.lt.s32.totalorder %s11, 3
    %p188 = pnand %p186, %p187
    %p189 = pneg %p188
    // Predicated region
    $region37: #{run.11} parent=5 // pred_check
      _
    $region38: #{run.11} parent=5 // pred_check_branch
      %191 = sbr.rel (%p188) target = $region40
    $region39: #{run.11} parent=5 // pred_region
      %s192 = ssub.s32 %s11, 1
      %p193 = scmp.lt.s32.totalorder %s16, 1
      %s194 = scalar_select %p193, %s16, 1
      %s195 = smul.addr %s194, 20
      %s196 = smul.addr %s195, 8
      %s197 = scalar_lea.vmem %s0, %s196
      %p198 = pneg %p37
      %p199 = pneg %p34
      %p200 = pneg %p58
      %p201 = pneg %p55
      %p202 = pneg %p79
      %p203 = pneg %p76
      %p204 = pneg %p100
      %p205 = pneg %p97
      %p206 = pneg %p121
      %p207 = pneg %p118
      %p208 = pneg %p147
      %p209 = pneg %p144
      %p210 = scmp.lt.s32.totalorder %s16, 1
      %s211 = scalar_select %p210, %s16, 1
      %s212 = smul.addr %s211, 8
      %s213 = smul.addr %s212, 8
      %s214 = scalar_lea.vmem %s5, %s213
      %p215 = scmp.lt.s32.totalorder %s16, 1
      %s216 = scalar_select %p215, %s16, 1
      %s217 = smul.addr %s216, 20
      %s218 = smul.addr %s217, 8
      %s219 = scalar_lea.vmem %s0, %s218
      %p220 = scmp.lt.s32.totalorder %s16, 1
      %s221 = scalar_select %p220, %s16, 1
      %s222 = smul.addr %s221, 8
      %s223 = smul.addr %s222, 8
      %s224 = scalar_lea.vmem %s5, %s223
      %v225 = vld [vmem:[%s219] sm:$0xff]
      %v226 = vld [vmem:[%s219 + $0x8] sm:$0x3]
      %v227 = vld [vmem:[%s219 + $0x10] sm:$0xff]
      %v228 = vld [vmem:[%s219 + $0x18] sm:$0x3]
      %v229 = vld [vmem:[%s219 + $0x20] sm:$0xff]
      %v230 = vld [vmem:[%s219 + $0x28] sm:$0x3]
      %v231 = vld [vmem:[%s219 + $0x30] sm:$0xff]
      %v232 = vld [vmem:[%s219 + $0x38] sm:$0x3]
      %v233 = vld [vmem:[%s219 + $0x40] sm:$0xff]
      %v234 = vld [vmem:[%s219 + $0x48] sm:$0x3]
      %v235 = vld [vmem:[%s219 + $0x50] sm:$0xff]
      %v236 = vld [vmem:[%s219 + $0x58] sm:$0x3]
      %v237 = vld [vmem:[%s219 + $0x60] sm:$0xff]
      %v238 = vld [vmem:[%s219 + $0x68] sm:$0x3]
      %v239 = vld [vmem:[%s219 + $0x70] sm:$0xff]
      %v240 = vld [vmem:[%s219 + $0x78] sm:$0x3]
      %v241 = vld [vmem:[%s219 + $0x80] sm:$0xff]
      %v242 = vld [vmem:[%s219 + $0x88] sm:$0x3]
      %v243 = vld [vmem:[%s219 + $0x90] sm:$0xff]
      %v244 = vld [vmem:[%s219 + $0x98] sm:$0x3]
      %v245 = vld [vmem:[%s1] sm:$0x1]
      %v247 = vperm.slane %v245, 0
      %v249 = vmul.f32 %v225, %v247
      %v250 = vmul.f32 %v226, %v247
      %v251 = vmul.f32 %v227, %v247
      %v252 = vmul.f32 %v228, %v247
      %v253 = vmul.f32 %v229, %v247
      %v254 = vmul.f32 %v230, %v247
      %v255 = vmul.f32 %v231, %v247
      %v256 = vmul.f32 %v232, %v247
      %v257 = vmul.f32 %v233, %v247
      %v258 = vmul.f32 %v234, %v247
      %v259 = vmul.f32 %v235, %v247
      %v260 = vmul.f32 %v236, %v247
      %v261 = vmul.f32 %v237, %v247
      %v262 = vmul.f32 %v238, %v247
      %v263 = vmul.f32 %v239, %v247
      %v264 = vmul.f32 %v240, %v247
      %v265 = vmul.f32 %v241, %v247
      %v266 = vmul.f32 %v242, %v247
      %v267 = vmul.f32 %v243, %v247
      %v268 = vmul.f32 %v244, %v247
      %v269 = vld [vmem:[%s2] sm:$0x1]
      %v271 = vperm.slane %v269, 0
      %v273 = vadd.f32 %v249, %v271
      %v274 = vadd.f32 %v250, %v271
      %v275 = vadd.f32 %v251, %v271
      %v276 = vadd.f32 %v252, %v271
      %v277 = vadd.f32 %v253, %v271
      %v278 = vadd.f32 %v254, %v271
      %v279 = vadd.f32 %v255, %v271
      %v280 = vadd.f32 %v256, %v271
      %v281 = vadd.f32 %v257, %v271
      %v282 = vadd.f32 %v258, %v271
      %v283 = vadd.f32 %v259, %v271
      %v284 = vadd.f32 %v260, %v271
      %v285 = vadd.f32 %v261, %v271
      %v286 = vadd.f32 %v262, %v271
      %v287 = vadd.f32 %v263, %v271
      %v288 = vadd.f32 %v264, %v271
      %v289 = vadd.f32 %v265, %v271
      %v290 = vadd.f32 %v266, %v271
      %v291 = vadd.f32 %v267, %v271
      %v292 = vadd.f32 %v268, %v271
      %v293 = vmax.f32 %v273, 0.0
      %v294 = vmax.f32 %v274, 0.0
      %v295 = vmax.f32 %v275, 0.0
      %v296 = vmax.f32 %v276, 0.0
      %v297 = vmax.f32 %v277, 0.0
      %v298 = vmax.f32 %v278, 0.0
      %v299 = vmax.f32 %v279, 0.0
      %v300 = vmax.f32 %v280, 0.0
      %v301 = vmax.f32 %v281, 0.0
      %v302 = vmax.f32 %v282, 0.0
      %v303 = vmax.f32 %v283, 0.0
      %v304 = vmax.f32 %v284, 0.0
      %v305 = vmax.f32 %v285, 0.0
      %v306 = vmax.f32 %v286, 0.0
      %v307 = vmax.f32 %v287, 0.0
      %v308 = vmax.f32 %v288, 0.0
      %v309 = vmax.f32 %v289, 0.0
      %v310 = vmax.f32 %v290, 0.0
      %v311 = vmax.f32 %v291, 0.0
      %v312 = vmax.f32 %v292, 0.0
      %v313 = vld [vmem:[%s3] sm:$0xff]
      %v314 = vld [vmem:[%s3 + $0x8] sm:$0x3]
      %v315 = vld [vmem:[%s3 + $0x10] sm:$0xff]
      %v316 = vld [vmem:[%s3 + $0x18] sm:$0x3]
      %v317 = vld [vmem:[%s3 + $0x20] sm:$0xff]
      %v318 = vld [vmem:[%s3 + $0x28] sm:$0x3]
      %v319 = vld [vmem:[%s3 + $0x30] sm:$0xff]
      %v320 = vld [vmem:[%s3 + $0x38] sm:$0x3]
      %v321 = vld [vmem:[%s3 + $0x40] sm:$0xff]
      %v322 = vld [vmem:[%s3 + $0x48] sm:$0x3]
      %v323 = vld [vmem:[%s3 + $0x50] sm:$0xff]
      %v324 = vld [vmem:[%s3 + $0x58] sm:$0x3]
      %v325 = vld [vmem:[%s3 + $0x60] sm:$0xff]
      %v326 = vld [vmem:[%s3 + $0x68] sm:$0x3]
      %v327 = vld [vmem:[%s3 + $0x70] sm:$0xff]
      %v328 = vld [vmem:[%s3 + $0x78] sm:$0x3]
      %v329 = vld [vmem:[%s3 + $0x80] sm:$0xff]
      %v330 = vld [vmem:[%s3 + $0x88] sm:$0x3]
      %v331 = vld [vmem:[%s3 + $0x90] sm:$0xff]
      %v332 = vld [vmem:[%s3 + $0x98] sm:$0x3]
      %334 = vset.pattern.permute.xlu0 0
      %335 = vperm.xlu0 %334, %v313
      %v336 = vpop.permute.xlu0 %335
      %339 = vset.pattern.permute.xlu0 0
      %340 = vperm.xlu0 %339, %v314
      %v341 = vpop.permute.xlu0 %340
      %344 = vset.pattern.permute.xlu0 0
      %345 = vperm.xlu0 %344, %v315
      %v346 = vpop.permute.xlu0 %345
      %349 = vset.pattern.permute.xlu0 0
      %350 = vperm.xlu0 %349, %v316
      %v351 = vpop.permute.xlu0 %350
      %354 = vset.pattern.permute.xlu0 0
      %355 = vperm.xlu0 %354, %v317
      %v356 = vpop.permute.xlu0 %355
      %359 = vset.pattern.permute.xlu0 0
      %360 = vperm.xlu0 %359, %v318
      %v361 = vpop.permute.xlu0 %360
      %364 = vset.pattern.permute.xlu0 0
      %365 = vperm.xlu0 %364, %v319
      %v366 = vpop.permute.xlu0 %365
      %369 = vset.pattern.permute.xlu0 0
      %370 = vperm.xlu0 %369, %v320
      %v371 = vpop.permute.xlu0 %370
      %374 = vset.pattern.permute.xlu0 0
      %375 = vperm.xlu0 %374, %v321
      %v376 = vpop.permute.xlu0 %375
      %379 = vset.pattern.permute.xlu0 0
      %380 = vperm.xlu0 %379, %v322
      %v381 = vpop.permute.xlu0 %380
      %384 = vset.pattern.permute.xlu0 0
      %385 = vperm.xlu0 %384, %v323
      %v386 = vpop.permute.xlu0 %385
      %389 = vset.pattern.permute.xlu0 0
      %390 = vperm.xlu0 %389, %v324
      %v391 = vpop.permute.xlu0 %390
      %394 = vset.pattern.permute.xlu0 0
      %395 = vperm.xlu0 %394, %v325
      %v396 = vpop.permute.xlu0 %395
      %399 = vset.pattern.permute.xlu0 0
      %400 = vperm.xlu0 %399, %v326
      %v401 = vpop.permute.xlu0 %400
      %404 = vset.pattern.permute.xlu0 0
      %405 = vperm.xlu0 %404, %v327
      %v406 = vpop.permute.xlu0 %405
      %409 = vset.pattern.permute.xlu0 0
      %410 = vperm.xlu0 %409, %v328
      %v411 = vpop.permute.xlu0 %410
      %414 = vset.pattern.permute.xlu0 0
      %415 = vperm.xlu0 %414, %v329
      %v416 = vpop.permute.xlu0 %415
      %419 = vset.pattern.permute.xlu0 0
      %420 = vperm.xlu0 %419, %v330
      %v421 = vpop.permute.xlu0 %420
      %424 = vset.pattern.permute.xlu0 0
      %425 = vperm.xlu0 %424, %v331
      %v426 = vpop.permute.xlu0 %425
      %429 = vset.pattern.permute.xlu0 0
      %430 = vperm.xlu0 %429, %v332
      %v431 = vpop.permute.xlu0 %430
      %v433 = vmul.f32 %v293, %v336
      %v434 = vmul.f32 %v294, %v341
      %v435 = vmul.f32 %v295, %v346
      %v436 = vmul.f32 %v296, %v351
      %v437 = vmul.f32 %v297, %v356
      %v438 = vmul.f32 %v298, %v361
      %v439 = vmul.f32 %v299, %v366
      %v440 = vmul.f32 %v300, %v371
      %v441 = vmul.f32 %v301, %v376
      %v442 = vmul.f32 %v302, %v381
      %v443 = vmul.f32 %v303, %v386
      %v444 = vmul.f32 %v304, %v391
      %v445 = vmul.f32 %v305, %v396
      %v446 = vmul.f32 %v306, %v401
      %v447 = vmul.f32 %v307, %v406
      %v448 = vmul.f32 %v308, %v411
      %v449 = vmul.f32 %v309, %v416
      %v450 = vmul.f32 %v310, %v421
      %v451 = vmul.f32 %v311, %v426
      %v452 = vmul.f32 %v312, %v431
      %v453 = vld [vmem:[%s4] sm:$0xff]
      %v454 = vld [vmem:[%s4 + $0x8] sm:$0xff]
      %v455 = vld [vmem:[%s4 + $0x10] sm:$0xff]
      %v456 = vld [vmem:[%s4 + $0x18] sm:$0xff]
      %v457 = vld [vmem:[%s4 + $0x20] sm:$0xff]
      %v458 = vld [vmem:[%s4 + $0x28] sm:$0xff]
      %v459 = vld [vmem:[%s4 + $0x30] sm:$0xff]
      %v460 = vld [vmem:[%s4 + $0x38] sm:$0xff]
      %v461 = vld [vmem:[%s4 + $0x40] sm:$0xff]
      %v462 = vld [vmem:[%s4 + $0x48] sm:$0xff]
      %v463 = vld [vmem:[%s4 + $0x50] sm:$0xff]
      %v464 = vld [vmem:[%s4 + $0x58] sm:$0xff]
      %v465 = vld [vmem:[%s4 + $0x60] sm:$0xff]
      %v466 = vld [vmem:[%s4 + $0x68] sm:$0xff]
      %v467 = vld [vmem:[%s4 + $0x70] sm:$0xff]
      %v468 = vld [vmem:[%s4 + $0x78] sm:$0xff]
      %vm485 = vcmask 1046528
      %v486 = vrot.slane %v433, 1
      %v487 = vrot.slane %v434, 1
      %v488 = vsel %vm485, %v486, %v487
      %v489 = vrot.slane %v435, 1
      %v490 = vrot.slane %v436, 1
      %v491 = vsel %vm485, %v489, %v490
      %v492 = vrot.slane %v437, 1
      %v493 = vrot.slane %v438, 1
      %v494 = vsel %vm485, %v492, %v493
      %v495 = vrot.slane %v439, 1
      %v496 = vrot.slane %v440, 1
      %v497 = vsel %vm485, %v495, %v496
      %v498 = vrot.slane %v441, 1
      %v499 = vrot.slane %v442, 1
      %v500 = vsel %vm485, %v498, %v499
      %v501 = vrot.slane %v443, 1
      %v502 = vrot.slane %v444, 1
      %v503 = vsel %vm485, %v501, %v502
      %v504 = vrot.slane %v445, 1
      %v505 = vrot.slane %v446, 1
      %v506 = vsel %vm485, %v504, %v505
      %v507 = vrot.slane %v447, 1
      %v508 = vrot.slane %v448, 1
      %v509 = vsel %vm485, %v507, %v508
      %s518 = scalar_lea.vmem %s4, 128
      %v519 = vld [vmem:[%s518] sm:$0xff]
      %v520 = vld [vmem:[%s518 + $0x8] sm:$0xff]
      %v521 = vld [vmem:[%s518 + $0x10] sm:$0xff]
      %v522 = vld [vmem:[%s518 + $0x18] sm:$0xff]
      %v523 = vld [vmem:[%s518 + $0x20] sm:$0xff]
      %v524 = vld [vmem:[%s518 + $0x28] sm:$0xff]
      %v525 = vld [vmem:[%s518 + $0x30] sm:$0xff]
      %v526 = vld [vmem:[%s518 + $0x38] sm:$0xff]
      %v527 = vld [vmem:[%s518 + $0x40] sm:$0xff]
      %v528 = vld [vmem:[%s518 + $0x48] sm:$0xff]
      %v529 = vld [vmem:[%s518 + $0x50] sm:$0xff]
      %v530 = vld [vmem:[%s518 + $0x58] sm:$0xff]
      %v531 = vld [vmem:[%s518 + $0x60] sm:$0xff]
      %v532 = vld [vmem:[%s518 + $0x68] sm:$0xff]
      %v533 = vld [vmem:[%s518 + $0x70] sm:$0xff]
      %v534 = vld [vmem:[%s518 + $0x78] sm:$0xff]
      %535 = vmatpush.msra.mxu0 %v534
      %536 = vmatpush.msra.mxu0 %v533
      %537 = vmatpush.msra.mxu0 %v532
      %538 = vmatpush.msra.mxu0 %v531
      %539 = vmatpush.msra.mxu0 %v530
      %540 = vmatpush.msra.mxu0 %v529
      %541 = vmatpush.msra.mxu0 %v528
      %542 = vmatpush.msra.mxu0 %v527
      %543 = vmatpush.msra.mxu0 %v526
      %544 = vmatpush.msra.mxu0 %v525
      %545 = vmatpush.msra.mxu0 %v524
      %546 = vmatpush.msra.mxu0 %v523
      %547 = vmatpush.msra.mxu0 %v522
      %548 = vmatpush.msra.mxu0 %v521
      %549 = vmatpush.msra.mxu0 %v520
      %550 = vmatpush.msra.mxu0 %v519
      %551 = vmatmul.f32.gmra.mxu0 %v488
      %v552 = vpop.f32.mrf.mxu0
      %v553 = vadd.f32 0.0, %v552
      %554 = vmatmul.f32.gmra.mxu0 %v491
      %v555 = vpop.f32.mrf.mxu0
      %v556 = vadd.f32 0.0, %v555
      %557 = vmatmul.f32.gmra.mxu0 %v494
      %v558 = vpop.f32.mrf.mxu0
      %v559 = vadd.f32 0.0, %v558
      %560 = vmatmul.f32.gmra.mxu0 %v497
      %v561 = vpop.f32.mrf.mxu0
      %v562 = vadd.f32 0.0, %v561
      %563 = vmatmul.f32.gmra.mxu0 %v500
      %v564 = vpop.f32.mrf.mxu0
      %v565 = vadd.f32 0.0, %v564
      %566 = vmatmul.f32.gmra.mxu0 %v503
      %v567 = vpop.f32.mrf.mxu0
      %v568 = vadd.f32 0.0, %v567
      %569 = vmatmul.f32.gmra.mxu0 %v506
      %v570 = vpop.f32.mrf.mxu0
      %v571 = vadd.f32 0.0, %v570
      %572 = vmatmul.f32.gmra.mxu0 %v509
      %v573 = vpop.f32.mrf.mxu0
      %v574 = vadd.f32 0.0, %v573
      %575 = vdwg.mxu0
      %576 = vmatpush.msra.mxu0 %v468
      %577 = vmatpush.msra.mxu0 %v467
      %578 = vmatpush.msra.mxu0 %v466
      %579 = vmatpush.msra.mxu0 %v465
      %580 = vmatpush.msra.mxu0 %v464
      %581 = vmatpush.msra.mxu0 %v463
      %582 = vmatpush.msra.mxu0 %v462
      %583 = vmatpush.msra.mxu0 %v461
      %584 = vmatpush.msra.mxu0 %v460
      %585 = vmatpush.msra.mxu0 %v459
      %586 = vmatpush.msra.mxu0 %v458
      %587 = vmatpush.msra.mxu0 %v457
      %588 = vmatpush.msra.mxu0 %v456
      %589 = vmatpush.msra.mxu0 %v455
      %590 = vmatpush.msra.mxu0 %v454
      %591 = vmatpush.msra.mxu0 %v453
      %592 = vmatmul.f32.gmra.mxu0 %v433
      %v593 = vpop.f32.mrf.mxu0
      %v594 = vadd.f32 %v553, %v593
      %595 = vmatmul.f32.gmra.mxu0 %v435
      %v596 = vpop.f32.mrf.mxu0
      %v597 = vadd.f32 %v556, %v596
      %598 = vmatmul.f32.gmra.mxu0 %v437
      %v599 = vpop.f32.mrf.mxu0
      %v600 = vadd.f32 %v559, %v599
      %601 = vmatmul.f32.gmra.mxu0 %v439
      %v602 = vpop.f32.mrf.mxu0
      %v603 = vadd.f32 %v562, %v602
      %604 = vmatmul.f32.gmra.mxu0 %v441
      %v605 = vpop.f32.mrf.mxu0
      %v606 = vadd.f32 %v565, %v605
      %607 = vmatmul.f32.gmra.mxu0 %v443
      %v608 = vpop.f32.mrf.mxu0
      %v609 = vadd.f32 %v568, %v608
      %610 = vmatmul.f32.gmra.mxu0 %v445
      %v611 = vpop.f32.mrf.mxu0
      %v612 = vadd.f32 %v571, %v611
      %613 = vmatmul.f32.gmra.mxu0 %v447
      %v614 = vpop.f32.mrf.mxu0
      %v615 = vadd.f32 %v574, %v614
      %616 = vdwg.mxu0
      %vm617 = vcmask 1045504
      %v618 = vrot.slane %v433, 2
      %v619 = vrot.slane %v434, 2
      %v620 = vsel %vm617, %v618, %v619
      %v621 = vrot.slane %v435, 2
      %v622 = vrot.slane %v436, 2
      %v623 = vsel %vm617, %v621, %v622
      %v624 = vrot.slane %v437, 2
      %v625 = vrot.slane %v438, 2
      %v626 = vsel %vm617, %v624, %v625
      %v627 = vrot.slane %v439, 2
      %v628 = vrot.slane %v440, 2
      %v629 = vsel %vm617, %v627, %v628
      %v630 = vrot.slane %v441, 2
      %v631 = vrot.slane %v442, 2
      %v632 = vsel %vm617, %v630, %v631
      %v633 = vrot.slane %v443, 2
      %v634 = vrot.slane %v444, 2
      %v635 = vsel %vm617, %v633, %v634
      %v636 = vrot.slane %v445, 2
      %v637 = vrot.slane %v446, 2
      %v638 = vsel %vm617, %v636, %v637
      %v639 = vrot.slane %v447, 2
      %v640 = vrot.slane %v448, 2
      %v641 = vsel %vm617, %v639, %v640
      %s650 = scalar_lea.vmem %s4, 256
      %v651 = vld [vmem:[%s650] sm:$0xff]
      %v652 = vld [vmem:[%s650 + $0x8] sm:$0xff]
      %v653 = vld [vmem:[%s650 + $0x10] sm:$0xff]
      %v654 = vld [vmem:[%s650 + $0x18] sm:$0xff]
      %v655 = vld [vmem:[%s650 + $0x20] sm:$0xff]
      %v656 = vld [vmem:[%s650 + $0x28] sm:$0xff]
      %v657 = vld [vmem:[%s650 + $0x30] sm:$0xff]
      %v658 = vld [vmem:[%s650 + $0x38] sm:$0xff]
      %v659 = vld [vmem:[%s650 + $0x40] sm:$0xff]
      %v660 = vld [vmem:[%s650 + $0x48] sm:$0xff]
      %v661 = vld [vmem:[%s650 + $0x50] sm:$0xff]
      %v662 = vld [vmem:[%s650 + $0x58] sm:$0xff]
      %v663 = vld [vmem:[%s650 + $0x60] sm:$0xff]
      %v664 = vld [vmem:[%s650 + $0x68] sm:$0xff]
      %v665 = vld [vmem:[%s650 + $0x70] sm:$0xff]
      %v666 = vld [vmem:[%s650 + $0x78] sm:$0xff]
      %667 = vmatpush.msra.mxu0 %v666
      %668 = vmatpush.msra.mxu0 %v665
      %669 = vmatpush.msra.mxu0 %v664
      %670 = vmatpush.msra.mxu0 %v663
      %671 = vmatpush.msra.mxu0 %v662
      %672 = vmatpush.msra.mxu0 %v661
      %673 = vmatpush.msra.mxu0 %v660
      %674 = vmatpush.msra.mxu0 %v659
      %675 = vmatpush.msra.mxu0 %v658
      %676 = vmatpush.msra.mxu0 %v657
      %677 = vmatpush.msra.mxu0 %v656
      %678 = vmatpush.msra.mxu0 %v655
      %679 = vmatpush.msra.mxu0 %v654
      %680 = vmatpush.msra.mxu0 %v653
      %681 = vmatpush.msra.mxu0 %v652
      %682 = vmatpush.msra.mxu0 %v651
      %683 = vmatmul.f32.gmra.mxu0 %v620
      %v684 = vpop.f32.mrf.mxu0
      %v685 = vadd.f32 0.0, %v684
      %686 = vmatmul.f32.gmra.mxu0 %v623
      %v687 = vpop.f32.mrf.mxu0
      %v688 = vadd.f32 0.0, %v687
      %689 = vmatmul.f32.gmra.mxu0 %v626
      %v690 = vpop.f32.mrf.mxu0
      %v691 = vadd.f32 0.0, %v690
      %692 = vmatmul.f32.gmra.mxu0 %v629
      %v693 = vpop.f32.mrf.mxu0
      %v694 = vadd.f32 0.0, %v693
      %695 = vmatmul.f32.gmra.mxu0 %v632
      %v696 = vpop.f32.mrf.mxu0
      %v697 = vadd.f32 0.0, %v696
      %698 = vmatmul.f32.gmra.mxu0 %v635
      %v699 = vpop.f32.mrf.mxu0
      %v700 = vadd.f32 0.0, %v699
      %701 = vmatmul.f32.gmra.mxu0 %v638
      %v702 = vpop.f32.mrf.mxu0
      %v703 = vadd.f32 0.0, %v702
      %704 = vmatmul.f32.gmra.mxu0 %v641
      %v705 = vpop.f32.mrf.mxu0
      %v706 = vadd.f32 0.0, %v705
      %707 = vdwg.mxu0
      %v708 = vadd.f32 %v594, %v685
      %v709 = vadd.f32 %v597, %v688
      %v710 = vadd.f32 %v600, %v691
      %v711 = vadd.f32 %v603, %v694
      %v712 = vadd.f32 %v606, %v697
      %v713 = vadd.f32 %v609, %v700
      %v714 = vadd.f32 %v612, %v703
      %v715 = vadd.f32 %v615, %v706
      %s716 = scalar_lea.vmem %s4, 384
      %v717 = vld [vmem:[%s716] sm:$0xff]
      %v718 = vld [vmem:[%s716 + $0x8] sm:$0xff]
      %v719 = vld [vmem:[%s716 + $0x10] sm:$0xff]
      %v720 = vld [vmem:[%s716 + $0x18] sm:$0xff]
      %v721 = vld [vmem:[%s716 + $0x20] sm:$0xff]
      %v722 = vld [vmem:[%s716 + $0x28] sm:$0xff]
      %v723 = vld [vmem:[%s716 + $0x30] sm:$0xff]
      %v724 = vld [vmem:[%s716 + $0x38] sm:$0xff]
      %v725 = vld [vmem:[%s716 + $0x40] sm:$0xff]
      %v726 = vld [vmem:[%s716 + $0x48] sm:$0xff]
      %v727 = vld [vmem:[%s716 + $0x50] sm:$0xff]
      %v728 = vld [vmem:[%s716 + $0x58] sm:$0xff]
      %v729 = vld [vmem:[%s716 + $0x60] sm:$0xff]
      %v730 = vld [vmem:[%s716 + $0x68] sm:$0xff]
      %v731 = vld [vmem:[%s716 + $0x70] sm:$0xff]
      %v732 = vld [vmem:[%s716 + $0x78] sm:$0xff]
      %733 = vmatpush.msra.mxu0 %v732
      %734 = vmatpush.msra.mxu0 %v731
      %735 = vmatpush.msra.mxu0 %v730
      %736 = vmatpush.msra.mxu0 %v729
      %737 = vmatpush.msra.mxu0 %v728
      %738 = vmatpush.msra.mxu0 %v727
      %739 = vmatpush.msra.mxu0 %v726
      %740 = vmatpush.msra.mxu0 %v725
      %741 = vmatpush.msra.mxu0 %v724
      %742 = vmatpush.msra.mxu0 %v723
      %743 = vmatpush.msra.mxu0 %v722
      %744 = vmatpush.msra.mxu0 %v721
      %745 = vmatpush.msra.mxu0 %v720
      %746 = vmatpush.msra.mxu0 %v719
      %747 = vmatpush.msra.mxu0 %v718
      %748 = vmatpush.msra.mxu0 %v717
      %749 = vmatmul.f32.gmra.mxu0 %v435
      %v750 = vpop.f32.mrf.mxu0
      %v751 = vadd.f32 0.0, %v750
      %752 = vmatmul.f32.gmra.mxu0 %v437
      %v753 = vpop.f32.mrf.mxu0
      %v754 = vadd.f32 0.0, %v753
      %755 = vmatmul.f32.gmra.mxu0 %v439
      %v756 = vpop.f32.mrf.mxu0
      %v757 = vadd.f32 0.0, %v756
      %758 = vmatmul.f32.gmra.mxu0 %v441
      %v759 = vpop.f32.mrf.mxu0
      %v760 = vadd.f32 0.0, %v759
      %761 = vmatmul.f32.gmra.mxu0 %v443
      %v762 = vpop.f32.mrf.mxu0
      %v763 = vadd.f32 0.0, %v762
      %764 = vmatmul.f32.gmra.mxu0 %v445
      %v765 = vpop.f32.mrf.mxu0
      %v766 = vadd.f32 0.0, %v765
      %767 = vmatmul.f32.gmra.mxu0 %v447
      %v768 = vpop.f32.mrf.mxu0
      %v769 = vadd.f32 0.0, %v768
      %770 = vmatmul.f32.gmra.mxu0 %v449
      %v771 = vpop.f32.mrf.mxu0
      %v772 = vadd.f32 0.0, %v771
      %773 = vdwg.mxu0
      %v774 = vadd.f32 %v708, %v751
      %v775 = vadd.f32 %v709, %v754
      %v776 = vadd.f32 %v710, %v757
      %v777 = vadd.f32 %v711, %v760
      %v778 = vadd.f32 %v712, %v763
      %v779 = vadd.f32 %v713, %v766
      %v780 = vadd.f32 %v714, %v769
      %v781 = vadd.f32 %v715, %v772
      %v784 = vrot.slane %v449, 1
      %v785 = vrot.slane %v450, 1
      %v786 = vsel %vm485, %v784, %v785
      %s788 = scalar_lea.vmem %s4, 512
      %v789 = vld [vmem:[%s788] sm:$0xff]
      %v790 = vld [vmem:[%s788 + $0x8] sm:$0xff]
      %v791 = vld [vmem:[%s788 + $0x10] sm:$0xff]
      %v792 = vld [vmem:[%s788 + $0x18] sm:$0xff]
      %v793 = vld [vmem:[%s788 + $0x20] sm:$0xff]
      %v794 = vld [vmem:[%s788 + $0x28] sm:$0xff]
      %v795 = vld [vmem:[%s788 + $0x30] sm:$0xff]
      %v796 = vld [vmem:[%s788 + $0x38] sm:$0xff]
      %v797 = vld [vmem:[%s788 + $0x40] sm:$0xff]
      %v798 = vld [vmem:[%s788 + $0x48] sm:$0xff]
      %v799 = vld [vmem:[%s788 + $0x50] sm:$0xff]
      %v800 = vld [vmem:[%s788 + $0x58] sm:$0xff]
      %v801 = vld [vmem:[%s788 + $0x60] sm:$0xff]
      %v802 = vld [vmem:[%s788 + $0x68] sm:$0xff]
      %v803 = vld [vmem:[%s788 + $0x70] sm:$0xff]
      %v804 = vld [vmem:[%s788 + $0x78] sm:$0xff]
      %805 = vmatpush.msra.mxu0 %v804
      %806 = vmatpush.msra.mxu0 %v803
      %807 = vmatpush.msra.mxu0 %v802
      %808 = vmatpush.msra.mxu0 %v801
      %809 = vmatpush.msra.mxu0 %v800
      %810 = vmatpush.msra.mxu0 %v799
      %811 = vmatpush.msra.mxu0 %v798
      %812 = vmatpush.msra.mxu0 %v797
      %813 = vmatpush.msra.mxu0 %v796
      %814 = vmatpush.msra.mxu0 %v795
      %815 = vmatpush.msra.mxu0 %v794
      %816 = vmatpush.msra.mxu0 %v793
      %817 = vmatpush.msra.mxu0 %v792
      %818 = vmatpush.msra.mxu0 %v791
      %819 = vmatpush.msra.mxu0 %v790
      %820 = vmatpush.msra.mxu0 %v789
      %821 = vmatmul.f32.gmra.mxu0 %v491
      %v822 = vpop.f32.mrf.mxu0
      %v823 = vadd.f32 0.0, %v822
      %824 = vmatmul.f32.gmra.mxu0 %v494
      %v825 = vpop.f32.mrf.mxu0
      %v826 = vadd.f32 0.0, %v825
      %827 = vmatmul.f32.gmra.mxu0 %v497
      %v828 = vpop.f32.mrf.mxu0
      %v829 = vadd.f32 0.0, %v828
      %830 = vmatmul.f32.gmra.mxu0 %v500
      %v831 = vpop.f32.mrf.mxu0
      %v832 = vadd.f32 0.0, %v831
      %833 = vmatmul.f32.gmra.mxu0 %v503
      %v834 = vpop.f32.mrf.mxu0
      %v835 = vadd.f32 0.0, %v834
      %836 = vmatmul.f32.gmra.mxu0 %v506
      %v837 = vpop.f32.mrf.mxu0
      %v838 = vadd.f32 0.0, %v837
      %839 = vmatmul.f32.gmra.mxu0 %v509
      %v840 = vpop.f32.mrf.mxu0
      %v841 = vadd.f32 0.0, %v840
      %842 = vmatmul.f32.gmra.mxu0 %v786
      %v843 = vpop.f32.mrf.mxu0
      %v844 = vadd.f32 0.0, %v843
      %845 = vdwg.mxu0
      %v846 = vadd.f32 %v774, %v823
      %v847 = vadd.f32 %v775, %v826
      %v848 = vadd.f32 %v776, %v829
      %v849 = vadd.f32 %v777, %v832
      %v850 = vadd.f32 %v778, %v835
      %v851 = vadd.f32 %v779, %v838
      %v852 = vadd.f32 %v780, %v841
      %v853 = vadd.f32 %v781, %v844
      %v854 = vrot.slane %v449, 2
      %v855 = vrot.slane %v450, 2
      %v856 = vsel %vm617, %v854, %v855
      %s858 = scalar_lea.vmem %s4, 640
      %v859 = vld [vmem:[%s858] sm:$0xff]
      %v860 = vld [vmem:[%s858 + $0x8] sm:$0xff]
      %v861 = vld [vmem:[%s858 + $0x10] sm:$0xff]
      %v862 = vld [vmem:[%s858 + $0x18] sm:$0xff]
      %v863 = vld [vmem:[%s858 + $0x20] sm:$0xff]
      %v864 = vld [vmem:[%s858 + $0x28] sm:$0xff]
      %v865 = vld [vmem:[%s858 + $0x30] sm:$0xff]
      %v866 = vld [vmem:[%s858 + $0x38] sm:$0xff]
      %v867 = vld [vmem:[%s858 + $0x40] sm:$0xff]
      %v868 = vld [vmem:[%s858 + $0x48] sm:$0xff]
      %v869 = vld [vmem:[%s858 + $0x50] sm:$0xff]
      %v870 = vld [vmem:[%s858 + $0x58] sm:$0xff]
      %v871 = vld [vmem:[%s858 + $0x60] sm:$0xff]
      %v872 = vld [vmem:[%s858 + $0x68] sm:$0xff]
      %v873 = vld [vmem:[%s858 + $0x70] sm:$0xff]
      %v874 = vld [vmem:[%s858 + $0x78] sm:$0xff]
      %875 = vmatpush.msra.mxu0 %v874
      %876 = vmatpush.msra.mxu0 %v873
      %877 = vmatpush.msra.mxu0 %v872
      %878 = vmatpush.msra.mxu0 %v871
      %879 = vmatpush.msra.mxu0 %v870
      %880 = vmatpush.msra.mxu0 %v869
      %881 = vmatpush.msra.mxu0 %v868
      %882 = vmatpush.msra.mxu0 %v867
      %883 = vmatpush.msra.mxu0 %v866
      %884 = vmatpush.msra.mxu0 %v865
      %885 = vmatpush.msra.mxu0 %v864
      %886 = vmatpush.msra.mxu0 %v863
      %887 = vmatpush.msra.mxu0 %v862
      %888 = vmatpush.msra.mxu0 %v861
      %889 = vmatpush.msra.mxu0 %v860
      %890 = vmatpush.msra.mxu0 %v859
      %891 = vmatmul.f32.gmra.mxu0 %v623
      %v892 = vpop.f32.mrf.mxu0
      %v893 = vadd.f32 0.0, %v892
      %894 = vmatmul.f32.gmra.mxu0 %v626
      %v895 = vpop.f32.mrf.mxu0
      %v896 = vadd.f32 0.0, %v895
      %897 = vmatmul.f32.gmra.mxu0 %v629
      %v898 = vpop.f32.mrf.mxu0
      %v899 = vadd.f32 0.0, %v898
      %900 = vmatmul.f32.gmra.mxu0 %v632
      %v901 = vpop.f32.mrf.mxu0
      %v902 = vadd.f32 0.0, %v901
      %903 = vmatmul.f32.gmra.mxu0 %v635
      %v904 = vpop.f32.mrf.mxu0
      %v905 = vadd.f32 0.0, %v904
      %906 = vmatmul.f32.gmra.mxu0 %v638
      %v907 = vpop.f32.mrf.mxu0
      %v908 = vadd.f32 0.0, %v907
      %909 = vmatmul.f32.gmra.mxu0 %v641
      %v910 = vpop.f32.mrf.mxu0
      %v911 = vadd.f32 0.0, %v910
      %912 = vmatmul.f32.gmra.mxu0 %v856
      %v913 = vpop.f32.mrf.mxu0
      %v914 = vadd.f32 0.0, %v913
      %915 = vdwg.mxu0
      %v916 = vadd.f32 %v846, %v893
      %v917 = vadd.f32 %v847, %v896
      %v918 = vadd.f32 %v848, %v899
      %v919 = vadd.f32 %v849, %v902
      %v920 = vadd.f32 %v850, %v905
      %v921 = vadd.f32 %v851, %v908
      %v922 = vadd.f32 %v852, %v911
      %v923 = vadd.f32 %v853, %v914
      %s924 = scalar_lea.vmem %s4, 768
      %v925 = vld [vmem:[%s924] sm:$0xff]
      %v926 = vld [vmem:[%s924 + $0x8] sm:$0xff]
      %v927 = vld [vmem:[%s924 + $0x10] sm:$0xff]
      %v928 = vld [vmem:[%s924 + $0x18] sm:$0xff]
      %v929 = vld [vmem:[%s924 + $0x20] sm:$0xff]
      %v930 = vld [vmem:[%s924 + $0x28] sm:$0xff]
      %v931 = vld [vmem:[%s924 + $0x30] sm:$0xff]
      %v932 = vld [vmem:[%s924 + $0x38] sm:$0xff]
      %v933 = vld [vmem:[%s924 + $0x40] sm:$0xff]
      %v934 = vld [vmem:[%s924 + $0x48] sm:$0xff]
      %v935 = vld [vmem:[%s924 + $0x50] sm:$0xff]
      %v936 = vld [vmem:[%s924 + $0x58] sm:$0xff]
      %v937 = vld [vmem:[%s924 + $0x60] sm:$0xff]
      %v938 = vld [vmem:[%s924 + $0x68] sm:$0xff]
      %v939 = vld [vmem:[%s924 + $0x70] sm:$0xff]
      %v940 = vld [vmem:[%s924 + $0x78] sm:$0xff]
      %941 = vmatpush.msra.mxu0 %v940
      %942 = vmatpush.msra.mxu0 %v939
      %943 = vmatpush.msra.mxu0 %v938
      %944 = vmatpush.msra.mxu0 %v937
      %945 = vmatpush.msra.mxu0 %v936
      %946 = vmatpush.msra.mxu0 %v935
      %947 = vmatpush.msra.mxu0 %v934
      %948 = vmatpush.msra.mxu0 %v933
      %949 = vmatpush.msra.mxu0 %v932
      %950 = vmatpush.msra.mxu0 %v931
      %951 = vmatpush.msra.mxu0 %v930
      %952 = vmatpush.msra.mxu0 %v929
      %953 = vmatpush.msra.mxu0 %v928
      %954 = vmatpush.msra.mxu0 %v927
      %955 = vmatpush.msra.mxu0 %v926
      %956 = vmatpush.msra.mxu0 %v925
      %957 = vmatmul.f32.gmra.mxu0 %v437
      %v958 = vpop.f32.mrf.mxu0
      %v959 = vadd.f32 0.0, %v958
      %960 = vmatmul.f32.gmra.mxu0 %v439
      %v961 = vpop.f32.mrf.mxu0
      %v962 = vadd.f32 0.0, %v961
      %963 = vmatmul.f32.gmra.mxu0 %v441
      %v964 = vpop.f32.mrf.mxu0
      %v965 = vadd.f32 0.0, %v964
      %966 = vmatmul.f32.gmra.mxu0 %v443
      %v967 = vpop.f32.mrf.mxu0
      %v968 = vadd.f32 0.0, %v967
      %969 = vmatmul.f32.gmra.mxu0 %v445
      %v970 = vpop.f32.mrf.mxu0
      %v971 = vadd.f32 0.0, %v970
      %972 = vmatmul.f32.gmra.mxu0 %v447
      %v973 = vpop.f32.mrf.mxu0
      %v974 = vadd.f32 0.0, %v973
      %975 = vmatmul.f32.gmra.mxu0 %v449
      %v976 = vpop.f32.mrf.mxu0
      %v977 = vadd.f32 0.0, %v976
      %978 = vmatmul.f32.gmra.mxu0 %v451
      %v979 = vpop.f32.mrf.mxu0
      %v980 = vadd.f32 0.0, %v979
      %981 = vdwg.mxu0
      %v982 = vadd.f32 %v916, %v959
      %v983 = vadd.f32 %v917, %v962
      %v984 = vadd.f32 %v918, %v965
      %v985 = vadd.f32 %v919, %v968
      %v986 = vadd.f32 %v920, %v971
      %v987 = vadd.f32 %v921, %v974
      %v988 = vadd.f32 %v922, %v977
      %v989 = vadd.f32 %v923, %v980
      %v992 = vrot.slane %v451, 1
      %v993 = vrot.slane %v452, 1
      %v994 = vsel %vm485, %v992, %v993
      %s996 = scalar_lea.vmem %s4, 896
      %v997 = vld [vmem:[%s996] sm:$0xff]
      %v998 = vld [vmem:[%s996 + $0x8] sm:$0xff]
      %v999 = vld [vmem:[%s996 + $0x10] sm:$0xff]
      %v1000 = vld [vmem:[%s996 + $0x18] sm:$0xff]
      %v1001 = vld [vmem:[%s996 + $0x20] sm:$0xff]
      %v1002 = vld [vmem:[%s996 + $0x28] sm:$0xff]
      %v1003 = vld [vmem:[%s996 + $0x30] sm:$0xff]
      %v1004 = vld [vmem:[%s996 + $0x38] sm:$0xff]
      %v1005 = vld [vmem:[%s996 + $0x40] sm:$0xff]
      %v1006 = vld [vmem:[%s996 + $0x48] sm:$0xff]
      %v1007 = vld [vmem:[%s996 + $0x50] sm:$0xff]
      %v1008 = vld [vmem:[%s996 + $0x58] sm:$0xff]
      %v1009 = vld [vmem:[%s996 + $0x60] sm:$0xff]
      %v1010 = vld [vmem:[%s996 + $0x68] sm:$0xff]
      %v1011 = vld [vmem:[%s996 + $0x70] sm:$0xff]
      %v1012 = vld [vmem:[%s996 + $0x78] sm:$0xff]
      %1013 = vmatpush.msra.mxu0 %v1012
      %1014 = vmatpush.msra.mxu0 %v1011
      %1015 = vmatpush.msra.mxu0 %v1010
      %1016 = vmatpush.msra.mxu0 %v1009
      %1017 = vmatpush.msra.mxu0 %v1008
      %1018 = vmatpush.msra.mxu0 %v1007
      %1019 = vmatpush.msra.mxu0 %v1006
      %1020 = vmatpush.msra.mxu0 %v1005
      %1021 = vmatpush.msra.mxu0 %v1004
      %1022 = vmatpush.msra.mxu0 %v1003
      %1023 = vmatpush.msra.mxu0 %v1002
      %1024 = vmatpush.msra.mxu0 %v1001
      %1025 = vmatpush.msra.mxu0 %v1000
      %1026 = vmatpush.msra.mxu0 %v999
      %1027 = vmatpush.msra.mxu0 %v998
      %1028 = vmatpush.msra.mxu0 %v997
      %1029 = vmatmul.f32.gmra.mxu0 %v494
      %v1030 = vpop.f32.mrf.mxu0
      %v1031 = vadd.f32 0.0, %v1030
      %1032 = vmatmul.f32.gmra.mxu0 %v497
      %v1033 = vpop.f32.mrf.mxu0
      %v1034 = vadd.f32 0.0, %v1033
      %1035 = vmatmul.f32.gmra.mxu0 %v500
      %v1036 = vpop.f32.mrf.mxu0
      %v1037 = vadd.f32 0.0, %v1036
      %1038 = vmatmul.f32.gmra.mxu0 %v503
      %v1039 = vpop.f32.mrf.mxu0
      %v1040 = vadd.f32 0.0, %v1039
      %1041 = vmatmul.f32.gmra.mxu0 %v506
      %v1042 = vpop.f32.mrf.mxu0
      %v1043 = vadd.f32 0.0, %v1042
      %1044 = vmatmul.f32.gmra.mxu0 %v509
      %v1045 = vpop.f32.mrf.mxu0
      %v1046 = vadd.f32 0.0, %v1045
      %1047 = vmatmul.f32.gmra.mxu0 %v786
      %v1048 = vpop.f32.mrf.mxu0
      %v1049 = vadd.f32 0.0, %v1048
      %1050 = vmatmul.f32.gmra.mxu0 %v994
      %v1051 = vpop.f32.mrf.mxu0
      %v1052 = vadd.f32 0.0, %v1051
      %1053 = vdwg.mxu0
      %v1054 = vadd.f32 %v982, %v1031
      %v1055 = vadd.f32 %v983, %v1034
      %v1056 = vadd.f32 %v984, %v1037
      %v1057 = vadd.f32 %v985, %v1040
      %v1058 = vadd.f32 %v986, %v1043
      %v1059 = vadd.f32 %v987, %v1046
      %v1060 = vadd.f32 %v988, %v1049
      %v1061 = vadd.f32 %v989, %v1052
      %v1062 = vrot.slane %v451, 2
      %v1063 = vrot.slane %v452, 2
      %v1064 = vsel %vm617, %v1062, %v1063
      %s1066 = scalar_lea.vmem %s4, 1024
      %v1067 = vld [vmem:[%s1066] sm:$0xff]
      %v1068 = vld [vmem:[%s1066 + $0x8] sm:$0xff]
      %v1069 = vld [vmem:[%s1066 + $0x10] sm:$0xff]
      %v1070 = vld [vmem:[%s1066 + $0x18] sm:$0xff]
      %v1071 = vld [vmem:[%s1066 + $0x20] sm:$0xff]
      %v1072 = vld [vmem:[%s1066 + $0x28] sm:$0xff]
      %v1073 = vld [vmem:[%s1066 + $0x30] sm:$0xff]
      %v1074 = vld [vmem:[%s1066 + $0x38] sm:$0xff]
      %v1075 = vld [vmem:[%s1066 + $0x40] sm:$0xff]
      %v1076 = vld [vmem:[%s1066 + $0x48] sm:$0xff]
      %v1077 = vld [vmem:[%s1066 + $0x50] sm:$0xff]
      %v1078 = vld [vmem:[%s1066 + $0x58] sm:$0xff]
      %v1079 = vld [vmem:[%s1066 + $0x60] sm:$0xff]
      %v1080 = vld [vmem:[%s1066 + $0x68] sm:$0xff]
      %v1081 = vld [vmem:[%s1066 + $0x70] sm:$0xff]
      %v1082 = vld [vmem:[%s1066 + $0x78] sm:$0xff]
      %1083 = vmatpush.msra.mxu0 %v1082
      %1084 = vmatpush.msra.mxu0 %v1081
      %1085 = vmatpush.msra.mxu0 %v1080
      %1086 = vmatpush.msra.mxu0 %v1079
      %1087 = vmatpush.msra.mxu0 %v1078
      %1088 = vmatpush.msra.mxu0 %v1077
      %1089 = vmatpush.msra.mxu0 %v1076
      %1090 = vmatpush.msra.mxu0 %v1075
      %1091 = vmatpush.msra.mxu0 %v1074
      %1092 = vmatpush.msra.mxu0 %v1073
      %1093 = vmatpush.msra.mxu0 %v1072
      %1094 = vmatpush.msra.mxu0 %v1071
      %1095 = vmatpush.msra.mxu0 %v1070
      %1096 = vmatpush.msra.mxu0 %v1069
      %1097 = vmatpush.msra.mxu0 %v1068
      %1098 = vmatpush.msra.mxu0 %v1067
      %1099 = vmatmul.f32.gmra.mxu0 %v626
      %v1100 = vpop.f32.mrf.mxu0
      %v1101 = vadd.f32 0.0, %v1100
      %1102 = vmatmul.f32.gmra.mxu0 %v629
      %v1103 = vpop.f32.mrf.mxu0
      %v1104 = vadd.f32 0.0, %v1103
      %1105 = vmatmul.f32.gmra.mxu0 %v632
      %v1106 = vpop.f32.mrf.mxu0
      %v1107 = vadd.f32 0.0, %v1106
      %1108 = vmatmul.f32.gmra.mxu0 %v635
      %v1109 = vpop.f32.mrf.mxu0
      %v1110 = vadd.f32 0.0, %v1109
      %1111 = vmatmul.f32.gmra.mxu0 %v638
      %v1112 = vpop.f32.mrf.mxu0
      %v1113 = vadd.f32 0.0, %v1112
      %1114 = vmatmul.f32.gmra.mxu0 %v641
      %v1115 = vpop.f32.mrf.mxu0
      %v1116 = vadd.f32 0.0, %v1115
      %1117 = vmatmul.f32.gmra.mxu0 %v856
      %v1118 = vpop.f32.mrf.mxu0
      %v1119 = vadd.f32 0.0, %v1118
      %1120 = vmatmul.f32.gmra.mxu0 %v1064
      %v1121 = vpop.f32.mrf.mxu0
      %v1122 = vadd.f32 0.0, %v1121
      %1123 = vdwg.mxu0
      %v1124 = vadd.f32 %v1054, %v1101
      %v1125 = vadd.f32 %v1055, %v1104
      %v1126 = vadd.f32 %v1056, %v1107
      %v1127 = vadd.f32 %v1057, %v1110
      %v1128 = vadd.f32 %v1058, %v1113
      %v1129 = vadd.f32 %v1059, %v1116
      %v1130 = vadd.f32 %v1060, %v1119
      %v1131 = vadd.f32 %v1061, %v1122
      %1132 = vst [vmem:[%s224] sm:$0xff] %v1124
      %1133 = vst [vmem:[%s224 + $0x8] sm:$0xff] %v1125
      %1134 = vst [vmem:[%s224 + $0x10] sm:$0xff] %v1126
      %1135 = vst [vmem:[%s224 + $0x18] sm:$0xff] %v1127
      %1136 = vst [vmem:[%s224 + $0x20] sm:$0xff] %v1128
      %1137 = vst [vmem:[%s224 + $0x28] sm:$0xff] %v1129
      %1138 = vst [vmem:[%s224 + $0x30] sm:$0xff] %v1130
      %1139 = vst [vmem:[%s224 + $0x38] sm:$0xff] %v1131
      %p1140 = scmp.lt.s32.totalorder %s16, 1
      %s1141 = scalar_select %p1140, %s16, 1
      %s1142 = smul.addr %s1141, 8
      %s1143 = smul.addr %s1142, 8
      %s1144 = scalar_lea.vmem %s5, %s1143
      // Predicated region
      $region41: #{run.11} parent=39 // pred_check
        %p1145 = pneg %p144
      $region42: #{run.11} parent=39 // pred_check_branch
        %1147 = sbr.rel (%p1145) target = $region44
      $region43: #{run.11} parent=39 // pred_region
        _
      $region44: #{run.11} parent=39 // pred_fallthru
        _
    $region40: #{run.11} parent=5 // pred_fallthru
      _
    %p1148 = scmp.le.s32.totalorder 2, %s11
    // Predicated region
    $region45: #{run.11} parent=5 // pred_check
      %p1149 = pneg %p1148
    $region46: #{run.11} parent=5 // pred_check_branch
      %1151 = sbr.rel (%p1149) target = $region48
    $region47: #{run.11} parent=5 // pred_region
      %s1152 = ssub.s32 %s11, 2
      // Predicated region
      $region49: #{run.11} parent=47 // pred_check
        %p1153 = pneg %p150
      $region50: #{run.11} parent=47 // pred_check_branch
        %1155 = sbr.rel (%p1153) target = $region52
      $region51: #{run.11} parent=47 // pred_region
        %p1156 = scmp.lt.s32.totalorder %s17, 1
        %s1157 = scalar_select %p1156, %s17, 1
        %s1158 = smul.addr %s1157, 8
        %s1159 = smul.addr %s1158, 8
        %s1160 = scalar_lea.vmem %s5, %s1159
      $region52: #{run.11} parent=47 // pred_fallthru
        _
    $region48: #{run.11} parent=5 // pred_fallthru
      _
  $region6: #{run.11} parent=0 // loop_footer
    %s15 = sadd.s32 1, %s11
  $region7: #{run.11} parent=0 // loop_footer_branch
    %10 = sbr.rel target = $region3
  $region8: #{run.11} parent=0 // loop_exit
    _

// kernel: run.15
$region0: #{run.15}
  #allocation0 [shape = 'u32[]', space=smem, size = 0x4, offset = 0x4, fixed_abs, tag = 'smem constant byte address 0x4 - core index']
  #allocation1 [shape = 'u32[72,128]{1,0:T(1,128)}', space=vmem, size = 0x9000, scoped, tag = 'internal scratch']
  %s0 = inlined_call_operand.vmem [shape: f32[2,64,128], index: 0, kind: input, shape index: {}]
  %s1 = inlined_call_operand.vmem [shape: f32[2,64,128], index: 1, kind: input, shape index: {}]
  %s2 = inlined_call_operand.vmem [shape: f32[2,1,128], index: 2, kind: input, shape index: {}]
  %s3 = inlined_call_operand.vmem [shape: f32[2,64,128], index: 3, kind: output, shape index: {}]
  %s4 = sld [smem:[#allocation0]]
  $region45: #{run.15} parent=0
    _
  %s6 = ssub.s32 1, %s4
  %s7 = scalar_select 0, %s6, %s4
  loop: start=0, step=1, limit=4
  $region2: #{run.15} parent=0 // loop_pre_header
    _
  $region3: #{run.15} parent=0 // loop_header
    %s9 = sphi 0, %s13
    %p10 = scmp.ge.s32.totalorder %s9, 4
    %s16 = sphi 0, %s28
    %s17 = sphi 0, %s24
    %s18 = sphi 0, %s16
    %s19 = sphi 0, %s17
    %s20 = sphi 0, %s18
    %s21 = sphi 0, %s19
    %s33 = sphi 0, %s35
    %s36 = sphi 0, %s33
    %s37 = sphi 0, %s36
    %s53 = sphi 0, %s37
    %s61 = sphi 0, %s63
    %s64 = sphi 0, %s61
    %s65 = sphi 0, %s64
    %s81 = sphi 0, %s65
    %s87 = sphi 0, %s89
    %s90 = sphi 0, %s87
    %s91 = sphi 0, %s90
    %s107 = sphi 0, %s91
    %s115 = sphi 0, %s117
    %s118 = sphi 0, %s115
    %s119 = sphi 0, %s118
    %s135 = sphi 0, %s119
  $region4: #{run.15} parent=0 // loop_header_branch
    %12 = sbr.rel (%p10) target = $region8
  $region5: #{run.15} parent=0 // loop_body
    %s14 = ssub.s32 %s9, 1
    %s15 = ssub.s32 %s9, 2
    %s22 = sadd.s32 1, %s17
    %p23 = scmp.ge.s32.totalorder %s22, 1
    %s24 = scalar_select %p23, 0, %s22
    %s25 = sadd.s32 1, %s16
    %s26 = scalar_select %p23, %s25, %s16
    %p27 = scmp.ge.s32.totalorder %s26, 2
    %s28 = scalar_select %p27, 0, %s26
    %s29 = ssub.s32 %s16, %s28
    %s30 = ssub.s32 %s17, %s24
    %s31 = sor.u32 %s29, %s30
    %p32 = scmp.eq.s32.totalorder %s31, 0
    %s34 = sadd.s32 %s33, 1
    %s35 = scalar_select %p32, %s33, %s34
    %p38 = pneg %p32
    %p39 = scmp.eq.s32.totalorder %s9, 1
    %p40 = por %p38, %p39
    %p41 = scmp.ne.s32.totalorder %s33, %s36
    %p42 = scmp.eq.s32.totalorder %s9, 0
    %p43 = por %p41, %p42
    %p44 = scmp.ne.s32.totalorder %s33, %s36
    %p45 = scmp.eq.s32.totalorder %s14, 1
    %p46 = por %p44, %p45
    %p47 = scmp.ne.s32.totalorder %s36, %s37
    %p48 = scmp.eq.s32.totalorder %s14, 0
    %p49 = por %p47, %p48
    %p50 = scmp.ne.s32.totalorder %s36, %s37
    %p51 = scmp.eq.s32.totalorder %s15, 1
    %p52 = por %p50, %p51
    %p54 = scmp.ne.s32.totalorder %s37, %s53
    %p55 = scmp.eq.s32.totalorder %s15, 0
    %p56 = por %p54, %p55
    %s57 = ssub.s32 %s16, %s28
    %s58 = ssub.s32 %s17, %s24
    %s59 = sor.u32 %s57, %s58
    %p60 = scmp.eq.s32.totalorder %s59, 0
    %s62 = sadd.s32 %s61, 1
    %s63 = scalar_select %p60, %s61, %s62
    %p66 = pneg %p60
    %p67 = scmp.eq.s32.totalorder %s9, 1
    %p68 = por %p66, %p67
    %p69 = scmp.ne.s32.totalorder %s61, %s64
    %p70 = scmp.eq.s32.totalorder %s9, 0
    %p71 = por %p69, %p70
    %p72 = scmp.ne.s32.totalorder %s61, %s64
    %p73 = scmp.eq.s32.totalorder %s14, 1
    %p74 = por %p72, %p73
    %p75 = scmp.ne.s32.totalorder %s64, %s65
    %p76 = scmp.eq.s32.totalorder %s14, 0
    %p77 = por %p75, %p76
    %p78 = scmp.ne.s32.totalorder %s64, %s65
    %p79 = scmp.eq.s32.totalorder %s15, 1
    %p80 = por %p78, %p79
    %p82 = scmp.ne.s32.totalorder %s65, %s81
    %p83 = scmp.eq.s32.totalorder %s15, 0
    %p84 = por %p82, %p83
    %s85 = ssub.s32 %s16, %s28
    %p86 = scmp.eq.s32.totalorder %s85, 0
    %s88 = sadd.s32 %s87, 1
    %s89 = scalar_select %p86, %s87, %s88
    %p92 = pneg %p86
    %p93 = scmp.eq.s32.totalorder %s9, 1
    %p94 = por %p92, %p93
    %p95 = scmp.ne.s32.totalorder %s87, %s90
    %p96 = scmp.eq.s32.totalorder %s9, 0
    %p97 = por %p95, %p96
    %p98 = scmp.ne.s32.totalorder %s87, %s90
    %p99 = scmp.eq.s32.totalorder %s14, 1
    %p100 = por %p98, %p99
    %p101 = scmp.ne.s32.totalorder %s90, %s91
    %p102 = scmp.eq.s32.totalorder %s14, 0
    %p103 = por %p101, %p102
    %p104 = scmp.ne.s32.totalorder %s90, %s91
    %p105 = scmp.eq.s32.totalorder %s15, 1
    %p106 = por %p104, %p105
    %p108 = scmp.ne.s32.totalorder %s91, %s107
    %p109 = scmp.eq.s32.totalorder %s15, 0
    %p110 = por %p108, %p109
    %s111 = ssub.s32 %s16, %s28
    %s112 = ssub.s32 %s17, %s24
    %s113 = sor.u32 %s111, %s112
    %p114 = scmp.eq.s32.totalorder %s113, 0
    %s116 = sadd.s32 %s115, 1
    %s117 = scalar_select %p114, %s115, %s116
    %p120 = pneg %p114
    %p121 = scmp.eq.s32.totalorder %s9, 1
    %p122 = por %p120, %p121
    %p123 = scmp.ne.s32.totalorder %s115, %s118
    %p124 = scmp.eq.s32.totalorder %s9, 0
    %p125 = por %p123, %p124
    %p126 = scmp.ne.s32.totalorder %s115, %s118
    %p127 = scmp.eq.s32.totalorder %s14, 1
    %p128 = por %p126, %p127
    %p129 = scmp.ne.s32.totalorder %s118, %s119
    %p130 = scmp.eq.s32.totalorder %s14, 0
    %p131 = por %p129, %p130
    %p132 = scmp.ne.s32.totalorder %s118, %s119
    %p133 = scmp.eq.s32.totalorder %s15, 1
    %p134 = por %p132, %p133
    %p136 = scmp.ne.s32.totalorder %s119, %s135
    %p137 = scmp.eq.s32.totalorder %s15, 0
    %p138 = por %p136, %p137
    %p139 = scmp.le.s32.totalorder 1, %s9
    %p140 = scmp.lt.s32.totalorder %s9, 3
    %p141 = pnand %p139, %p140
    %p142 = pneg %p141
    // Predicated region
    $region9: #{run.15} parent=5 // pred_check
      _
    $region10: #{run.15} parent=5 // pred_check_branch
      %144 = sbr.rel (%p141) target = $region12
    $region11: #{run.15} parent=5 // pred_region
      %s145 = ssub.s32 %s9, 1
    $region12: #{run.15} parent=5 // pred_fallthru
      _
    %p146 = scmp.lt.s32.totalorder %s9, 2
    // Predicated region
    $region13: #{run.15} parent=5 // pred_check
      %p147 = pneg %p146
    $region14: #{run.15} parent=5 // pred_check_branch
      %149 = sbr.rel (%p147) target = $region16
    $region15: #{run.15} parent=5 // pred_region
      // Predicated region
      $region17: #{run.15} parent=15 // pred_check
        %p150 = pneg %p43
      $region18: #{run.15} parent=15 // pred_check_branch
        %152 = sbr.rel (%p150) target = $region20
      $region19: #{run.15} parent=15 // pred_region
        %s153 = smul.u32 8, %s17
        %p154 = scmp.lt.s32.totalorder %s16, 1
        %s155 = scalar_select %p154, %s16, 1
        %p156 = scmp.lt.s32.totalorder %s153, 7
        %s157 = scalar_select %p156, %s153, 7
        %s158 = smul.addr %s155, 8
        %s159 = sadd.s32 %s157, %s158
        %s160 = smul.addr %s159, 8
        %s161 = scalar_lea.vmem %s0, %s160
        %s162 = smul.u32 8, %s17
      $region20: #{run.15} parent=15 // pred_fallthru
        _
      // Predicated region
      $region21: #{run.15} parent=15 // pred_check
        %p163 = pneg %p71
      $region22: #{run.15} parent=15 // pred_check_branch
        %165 = sbr.rel (%p163) target = $region24
      $region23: #{run.15} parent=15 // pred_region
        %s166 = smul.u32 8, %s17
        %p167 = scmp.lt.s32.totalorder %s16, 1
        %s168 = scalar_select %p167, %s16, 1
        %p169 = scmp.lt.s32.totalorder %s166, 7
        %s170 = scalar_select %p169, %s166, 7
        %s171 = smul.addr %s168, 8
        %s172 = sadd.s32 %s170, %s171
        %s173 = smul.addr %s172, 8
        %s174 = scalar_lea.vmem %s1, %s173
        %s175 = smul.u32 8, %s17
      $region24: #{run.15} parent=15 // pred_fallthru
        _
      // Predicated region
      $region25: #{run.15} parent=15 // pred_check
        %p176 = pneg %p97
      $region26: #{run.15} parent=15 // pred_check_branch
        %178 = sbr.rel (%p176) target = $region28
      $region27: #{run.15} parent=15 // pred_region
        %p179 = scmp.lt.s32.totalorder %s16, 1
        %s180 = scalar_select %p179, %s16, 1
        %s181 = scalar_lea.vmem %s2, %s180
      $region28: #{run.15} parent=15 // pred_fallthru
        _
    $region16: #{run.15} parent=5 // pred_fallthru
      _
    %p182 = scmp.le.s32.totalorder 1, %s9
    %p183 = scmp.lt.s32.totalorder %s9, 3
    %p184 = pnand %p182, %p183
    %p185 = pneg %p184
    // Predicated region
    $region29: #{run.15} parent=5 // pred_check
      _
    $region30: #{run.15} parent=5 // pred_check_branch
      %187 = sbr.rel (%p184) target = $region32
    $region31: #{run.15} parent=5 // pred_region
      %s188 = ssub.s32 %s9, 1
      %s189 = smul.u32 8, %s19
      %p190 = scmp.lt.s32.totalorder %s18, 1
      %s191 = scalar_select %p190, %s18, 1
      %p192 = scmp.lt.s32.totalorder %s189, 7
      %s193 = scalar_select %p192, %s189, 7
      %s194 = smul.addr %s191, 8
      %s195 = sadd.s32 %s193, %s194
      %s196 = smul.addr %s195, 8
      %s197 = scalar_lea.vmem %s0, %s196
      %p198 = pneg %p49
      %p199 = pneg %p46
      %s200 = smul.u32 8, %s19
      %p201 = scmp.lt.s32.totalorder %s18, 1
      %s202 = scalar_select %p201, %s18, 1
      %p203 = scmp.lt.s32.totalorder %s200, 7
      %s204 = scalar_select %p203, %s200, 7
      %s205 = smul.addr %s202, 8
      %s206 = sadd.s32 %s204, %s205
      %s207 = smul.addr %s206, 8
      %s208 = scalar_lea.vmem %s1, %s207
      %p209 = pneg %p77
      %p210 = pneg %p74
      %p211 = scmp.lt.s32.totalorder %s18, 1
      %s212 = scalar_select %p211, %s18, 1
      %s213 = scalar_lea.vmem %s2, %s212
      %p214 = pneg %p103
      %p215 = pneg %p100
      %p216 = pneg %p131
      %p217 = pneg %p128
      %s218 = smul.u32 8, %s19
      %p219 = scmp.lt.s32.totalorder %s18, 1
      %s220 = scalar_select %p219, %s18, 1
      %p221 = scmp.lt.s32.totalorder %s218, 7
      %s222 = scalar_select %p221, %s218, 7
      %s223 = smul.addr %s220, 8
      %s224 = sadd.s32 %s222, %s223
      %s225 = smul.addr %s224, 8
      %s226 = scalar_lea.vmem %s3, %s225
      %s227 = smul.u32 8, %s19
      %p228 = scmp.lt.s32.totalorder %s18, 1
      %s229 = scalar_select %p228, %s18, 1
      %p230 = scmp.lt.s32.totalorder %s227, 7
      %s231 = scalar_select %p230, %s227, 7
      %s232 = smul.addr %s229, 8
      %s233 = sadd.s32 %s231, %s232
      %s234 = smul.addr %s233, 8
      %s235 = scalar_lea.vmem %s0, %s234
      %s236 = smul.u32 8, %s19
      %s237 = smul.u32 8, %s19
      %p238 = scmp.lt.s32.totalorder %s18, 1
      %s239 = scalar_select %p238, %s18, 1
      %p240 = scmp.lt.s32.totalorder %s237, 7
      %s241 = scalar_select %p240, %s237, 7
      %s242 = smul.addr %s239, 8
      %s243 = sadd.s32 %s241, %s242
      %s244 = smul.addr %s243, 8
      %s245 = scalar_lea.vmem %s1, %s244
      %s246 = smul.u32 8, %s19
      %p247 = scmp.lt.s32.totalorder %s18, 1
      %s248 = scalar_select %p247, %s18, 1
      %s249 = scalar_lea.vmem %s2, %s248
      %s250 = smul.u32 8, %s19
      %p251 = scmp.lt.s32.totalorder %s18, 1
      %s252 = scalar_select %p251, %s18, 1
      %p253 = scmp.lt.s32.totalorder %s250, 7
      %s254 = scalar_select %p253, %s250, 7
      %s255 = smul.addr %s252, 8
      %s256 = sadd.s32 %s254, %s255
      %s257 = smul.addr %s256, 8
      %s258 = scalar_lea.vmem %s3, %s257
      %s259 = smul.u32 8, %s19
      %v260 = vld [vmem:[%s235] sm:$0xff]
      %v261 = vld [vmem:[%s235 + $0x8] sm:$0xff]
      %v262 = vld [vmem:[%s235 + $0x10] sm:$0xff]
      %v263 = vld [vmem:[%s235 + $0x18] sm:$0xff]
      %v264 = vld [vmem:[%s235 + $0x20] sm:$0xff]
      %v265 = vld [vmem:[%s235 + $0x28] sm:$0xff]
      %v266 = vld [vmem:[%s235 + $0x30] sm:$0xff]
      %v267 = vld [vmem:[%s235 + $0x38] sm:$0xff]
      %v268 = vld [vmem:[%s249] sm:$0x1]
      %v270 = vperm.slane %v268, 0
      %v272 = vmul.f32 %v260, %v270
      %v273 = vmul.f32 %v261, %v270
      %v274 = vmul.f32 %v262, %v270
      %v275 = vmul.f32 %v263, %v270
      %v276 = vmul.f32 %v264, %v270
      %v277 = vmul.f32 %v265, %v270
      %v278 = vmul.f32 %v266, %v270
      %v279 = vmul.f32 %v267, %v270
      %v280 = vld [vmem:[%s245] sm:$0xff]
      %v281 = vld [vmem:[%s245 + $0x8] sm:$0xff]
      %v282 = vld [vmem:[%s245 + $0x10] sm:$0xff]
      %v283 = vld [vmem:[%s245 + $0x18] sm:$0xff]
      %v284 = vld [vmem:[%s245 + $0x20] sm:$0xff]
      %v285 = vld [vmem:[%s245 + $0x28] sm:$0xff]
      %v286 = vld [vmem:[%s245 + $0x30] sm:$0xff]
      %v287 = vld [vmem:[%s245 + $0x38] sm:$0xff]
      %v288 = vadd.f32 %v272, %v280
      %v289 = vadd.f32 %v273, %v281
      %v290 = vadd.f32 %v274, %v282
      %v291 = vadd.f32 %v275, %v283
      %v292 = vadd.f32 %v276, %v284
      %v293 = vadd.f32 %v277, %v285
      %v294 = vadd.f32 %v278, %v286
      %v295 = vadd.f32 %v279, %v287
      %296 = vst [vmem:[%s258] sm:$0xff] %v288
      %297 = vst [vmem:[%s258 + $0x8] sm:$0xff] %v289
      %298 = vst [vmem:[%s258 + $0x10] sm:$0xff] %v290
      %299 = vst [vmem:[%s258 + $0x18] sm:$0xff] %v291
      %300 = vst [vmem:[%s258 + $0x20] sm:$0xff] %v292
      %301 = vst [vmem:[%s258 + $0x28] sm:$0xff] %v293
      %302 = vst [vmem:[%s258 + $0x30] sm:$0xff] %v294
      %303 = vst [vmem:[%s258 + $0x38] sm:$0xff] %v295
      %s304 = smul.u32 8, %s19
      %p305 = scmp.lt.s32.totalorder %s18, 1
      %s306 = scalar_select %p305, %s18, 1
      %p307 = scmp.lt.s32.totalorder %s304, 7
      %s308 = scalar_select %p307, %s304, 7
      %s309 = smul.addr %s306, 8
      %s310 = sadd.s32 %s308, %s309
      %s311 = smul.addr %s310, 8
      %s312 = scalar_lea.vmem %s3, %s311
      // Predicated region
      $region33: #{run.15} parent=31 // pred_check
        %p313 = pneg %p128
      $region34: #{run.15} parent=31 // pred_check_branch
        %315 = sbr.rel (%p313) target = $region36
      $region35: #{run.15} parent=31 // pred_region
        %s316 = smul.u32 8, %s19
      $region36: #{run.15} parent=31 // pred_fallthru
        _
    $region32: #{run.15} parent=5 // pred_fallthru
      _
    %p317 = scmp.le.s32.totalorder 2, %s9
    // Predicated region
    $region37: #{run.15} parent=5 // pred_check
      %p318 = pneg %p317
    $region38: #{run.15} parent=5 // pred_check_branch
      %320 = sbr.rel (%p318) target = $region40
    $region39: #{run.15} parent=5 // pred_region
      %s321 = ssub.s32 %s9, 2
      // Predicated region
      $region41: #{run.15} parent=39 // pred_check
        %p322 = pneg %p134
      $region42: #{run.15} parent=39 // pred_check_branch
        %324 = sbr.rel (%p322) target = $region44
      $region43: #{run.15} parent=39 // pred_region
        %s325 = smul.u32 8, %s21
        %p326 = scmp.lt.s32.totalorder %s20, 1
        %s327 = scalar_select %p326, %s20, 1
        %p328 = scmp.lt.s32.totalorder %s325, 7
        %s329 = scalar_select %p328, %s325, 7
        %s330 = smul.addr %s327, 8
        %s331 = sadd.s32 %s329, %s330
        %s332 = smul.addr %s331, 8
        %s333 = scalar_lea.vmem %s3, %s332
      $region44: #{run.15} parent=39 // pred_fallthru
        _
    $region40: #{run.15} parent=5 // pred_fallthru
      _
  $region6: #{run.15} parent=0 // loop_footer
    %s13 = sadd.s32 1, %s9
  $region7: #{run.15} parent=0 // loop_footer_branch
    %8 = sbr.rel target = $region3
  $region8: #{run.15} parent=0 // loop_exit
    _

// kernel: run.14
$region0: #{run.14}
  #allocation0 [shape = 'u32[]', space=smem, size = 0x4, offset = 0x4, fixed_abs, tag = 'smem constant byte address 0x4 - core index']
  #allocation1 [shape = 'u32[72,128]{1,0:T(1,128)}', space=vmem, size = 0x9000, scoped, tag = 'internal scratch']
  #allocation2 [shape = 'f32[2,128]{1,0:T(2,128)}', space=vmem, size = 0x400, scoped, tag = 'scratch operand']
  %s0 = inlined_call_operand.vmem [shape: f32[2,64,128], index: 0, kind: input, shape index: {}]
  %s1 = inlined_call_operand.vmem [shape: f32[1,64,1], index: 1, kind: input, shape index: {}]
  %s2 = inlined_call_operand.vmem [shape: f32[128,128], index: 2, kind: input, shape index: {}]
  %s3 = inlined_call_operand.vmem [shape: f32[128,128], index: 3, kind: input, shape index: {}]
  %s4 = inlined_call_operand.vmem [shape: f32[2,128], index: 4, kind: output, shape index: {}]
  %s5 = sld [smem:[#allocation0]]
  $region34: #{run.14} parent=0
    _
  %s7 = ssub.s32 1, %s5
  %s8 = scalar_select 0, %s7, %s5
  // Predicated region
  $region2: #{run.14} parent=0 // pred_check
    _
  $region3: #{run.14} parent=0 // pred_check_branch
    %10 = sbr.rel (0) target = $region5
  $region4: #{run.14} parent=0 // pred_region
    _
  $region5: #{run.14} parent=0 // pred_fallthru
    _
  // Predicated region
  $region6: #{run.14} parent=0 // pred_check
    _
  $region7: #{run.14} parent=0 // pred_check_branch
    %12 = sbr.rel (0) target = $region9
  $region8: #{run.14} parent=0 // pred_region
    _
  $region9: #{run.14} parent=0 // pred_fallthru
    _
  // Predicated region
  $region10: #{run.14} parent=0 // pred_check
    _
  $region11: #{run.14} parent=0 // pred_check_branch
    %14 = sbr.rel (0) target = $region13
  $region12: #{run.14} parent=0 // pred_region
    _
  $region13: #{run.14} parent=0 // pred_fallthru
    _
  // Predicated region
  $region14: #{run.14} parent=0 // pred_check
    _
  $region15: #{run.14} parent=0 // pred_check_branch
    %16 = sbr.rel (0) target = $region17
  $region16: #{run.14} parent=0 // pred_region
    _
  $region17: #{run.14} parent=0 // pred_fallthru
    _
  %p17 = scmp.eq.s32.totalorder 0, 0
  // Predicated region
  $region18: #{run.14} parent=0 // pred_check
    %p18 = pneg %p17
  $region19: #{run.14} parent=0 // pred_check_branch
    %20 = sbr.rel (%p18) target = $region21
  $region20: #{run.14} parent=0 // pred_region
    %21 = vst [vmem:[#allocation2] sm:$0x3] 0.0
  $region21: #{run.14} parent=0 // pred_fallthru
    _
  %v22 = vld [vmem:[#allocation2] sm:$0x3]
  %v23 = vld [vmem:[%s0] sm:$0xff]
  %v24 = vld [vmem:[%s0 + $0x8] sm:$0xff]
  %v25 = vld [vmem:[%s0 + $0x10] sm:$0xff]
  %v26 = vld [vmem:[%s0 + $0x18] sm:$0xff]
  %v27 = vld [vmem:[%s0 + $0x20] sm:$0xff]
  %v28 = vld [vmem:[%s0 + $0x28] sm:$0xff]
  %v29 = vld [vmem:[%s0 + $0x30] sm:$0xff]
  %v30 = vld [vmem:[%s0 + $0x38] sm:$0xff]
  %v31 = vld [vmem:[%s0 + $0x40] sm:$0xff]
  %v32 = vld [vmem:[%s0 + $0x48] sm:$0xff]
  %v33 = vld [vmem:[%s0 + $0x50] sm:$0xff]
  %v34 = vld [vmem:[%s0 + $0x58] sm:$0xff]
  %v35 = vld [vmem:[%s0 + $0x60] sm:$0xff]
  %v36 = vld [vmem:[%s0 + $0x68] sm:$0xff]
  %v37 = vld [vmem:[%s0 + $0x70] sm:$0xff]
  %v38 = vld [vmem:[%s0 + $0x78] sm:$0xff]
  %v39 = vld [vmem:[%s1] sm:$0xff]
  %v40 = vld [vmem:[%s1 + $0x8] sm:$0xff]
  %v41 = vld [vmem:[%s1 + $0x10] sm:$0xff]
  %v42 = vld [vmem:[%s1 + $0x18] sm:$0xff]
  %v43 = vld [vmem:[%s1 + $0x20] sm:$0xff]
  %v44 = vld [vmem:[%s1 + $0x28] sm:$0xff]
  %v45 = vld [vmem:[%s1 + $0x30] sm:$0xff]
  %v46 = vld [vmem:[%s1 + $0x38] sm:$0xff]
  %48 = vset.pattern.permute.xlu0 0
  %49 = vperm.xlu0 %48, %v39
  %v50 = vpop.permute.xlu0 %49
  %53 = vset.pattern.permute.xlu0 0
  %54 = vperm.xlu0 %53, %v40
  %v55 = vpop.permute.xlu0 %54
  %58 = vset.pattern.permute.xlu0 0
  %59 = vperm.xlu0 %58, %v41
  %v60 = vpop.permute.xlu0 %59
  %63 = vset.pattern.permute.xlu0 0
  %64 = vperm.xlu0 %63, %v42
  %v65 = vpop.permute.xlu0 %64
  %68 = vset.pattern.permute.xlu0 0
  %69 = vperm.xlu0 %68, %v43
  %v70 = vpop.permute.xlu0 %69
  %73 = vset.pattern.permute.xlu0 0
  %74 = vperm.xlu0 %73, %v44
  %v75 = vpop.permute.xlu0 %74
  %78 = vset.pattern.permute.xlu0 0
  %79 = vperm.xlu0 %78, %v45
  %v80 = vpop.permute.xlu0 %79
  %83 = vset.pattern.permute.xlu0 0
  %84 = vperm.xlu0 %83, %v46
  %v85 = vpop.permute.xlu0 %84
  %v87 = vmul.f32 %v23, %v50
  %v88 = vmul.f32 %v24, %v55
  %v89 = vmul.f32 %v25, %v60
  %v90 = vmul.f32 %v26, %v65
  %v91 = vmul.f32 %v27, %v70
  %v92 = vmul.f32 %v28, %v75
  %v93 = vmul.f32 %v29, %v80
  %v94 = vmul.f32 %v30, %v85
  %v95 = vmul.f32 %v31, %v50
  %v96 = vmul.f32 %v32, %v55
  %v97 = vmul.f32 %v33, %v60
  %v98 = vmul.f32 %v34, %v65
  %v99 = vmul.f32 %v35, %v70
  %v100 = vmul.f32 %v36, %v75
  %v101 = vmul.f32 %v37, %v80
  %v102 = vmul.f32 %v38, %v85
  %v103 = vadd.f32 %v87, %v88
  %v104 = vadd.f32 %v103, %v89
  %v105 = vadd.f32 %v104, %v90
  %v106 = vadd.f32 %v105, %v91
  %v107 = vadd.f32 %v106, %v92
  %v108 = vadd.f32 %v107, %v93
  %v109 = vadd.f32 %v108, %v94
  %v110 = vrot.slane %v109, 4
  %v111 = vadd.f32 %v109, %v110
  %v112 = vrot.slane %v111, 2
  %v113 = vadd.f32 %v111, %v112
  %v114 = vrot.slane %v113, 1
  %v115 = vadd.f32 %v113, %v114
  %v116 = vadd.f32 %v95, %v96
  %v117 = vadd.f32 %v116, %v97
  %v118 = vadd.f32 %v117, %v98
  %v119 = vadd.f32 %v118, %v99
  %v120 = vadd.f32 %v119, %v100
  %v121 = vadd.f32 %v120, %v101
  %v122 = vadd.f32 %v121, %v102
  %v123 = vrot.slane %v122, 4
  %v124 = vadd.f32 %v122, %v123
  %v125 = vrot.slane %v124, 2
  %v126 = vadd.f32 %v124, %v125
  %v127 = vrot.slane %v126, 1
  %v128 = vadd.f32 %v126, %v127
  %vm131 = vcmask 1041409
  %v132 = vsel %vm131, %v128, %v115
  %v134 = vadd.f32 %v22, %v132
  %135 = vst [vmem:[#allocation2] sm:$0x3] %v134
  // Predicated region
  $region22: #{run.14} parent=0 // pred_check
    %p136 = pneg %p17
  $region23: #{run.14} parent=0 // pred_check_branch
    %138 = sbr.rel (%p136) target = $region25
  $region24: #{run.14} parent=0 // pred_region
    %v139 = vld [vmem:[#allocation2] sm:$0x3]
    %v140 = vld [vmem:[%s2] sm:$0xff]
    %v141 = vld [vmem:[%s2 + $0x8] sm:$0xff]
    %v142 = vld [vmem:[%s2 + $0x10] sm:$0xff]
    %v143 = vld [vmem:[%s2 + $0x18] sm:$0xff]
    %v144 = vld [vmem:[%s2 + $0x20] sm:$0xff]
    %v145 = vld [vmem:[%s2 + $0x28] sm:$0xff]
    %v146 = vld [vmem:[%s2 + $0x30] sm:$0xff]
    %v147 = vld [vmem:[%s2 + $0x38] sm:$0xff]
    %v148 = vld [vmem:[%s2 + $0x40] sm:$0xff]
    %v149 = vld [vmem:[%s2 + $0x48] sm:$0xff]
    %v150 = vld [vmem:[%s2 + $0x50] sm:$0xff]
    %v151 = vld [vmem:[%s2 + $0x58] sm:$0xff]
    %v152 = vld [vmem:[%s2 + $0x60] sm:$0xff]
    %v153 = vld [vmem:[%s2 + $0x68] sm:$0xff]
    %v154 = vld [vmem:[%s2 + $0x70] sm:$0xff]
    %v155 = vld [vmem:[%s2 + $0x78] sm:$0xff]
    %156 = vmatpush.msra.mxu0 %v155
    %157 = vmatpush.msra.mxu0 %v154
    %158 = vmatpush.msra.mxu0 %v153
    %159 = vmatpush.msra.mxu0 %v152
    %160 = vmatpush.msra.mxu0 %v151
    %161 = vmatpush.msra.mxu0 %v150
    %162 = vmatpush.msra.mxu0 %v149
    %163 = vmatpush.msra.mxu0 %v148
    %164 = vmatpush.msra.mxu0 %v147
    %165 = vmatpush.msra.mxu0 %v146
    %166 = vmatpush.msra.mxu0 %v145
    %167 = vmatpush.msra.mxu0 %v144
    %168 = vmatpush.msra.mxu0 %v143
    %169 = vmatpush.msra.mxu0 %v142
    %170 = vmatpush.msra.mxu0 %v141
    %171 = vmatpush.msra.mxu0 %v140
    %172 = vmatmul.f32.gmra.mxu0 %v139
    %v173 = vpop.f32.mrf.mxu0
    %v174 = vadd.f32 0.0, %v173
    %175 = vdwg.mxu0
    %v176 = vmax.f32 %v174, 0.0
    %v177 = vld [vmem:[%s3] sm:$0xff]
    %v178 = vld [vmem:[%s3 + $0x8] sm:$0xff]
    %v179 = vld [vmem:[%s3 + $0x10] sm:$0xff]
    %v180 = vld [vmem:[%s3 + $0x18] sm:$0xff]
    %v181 = vld [vmem:[%s3 + $0x20] sm:$0xff]
    %v182 = vld [vmem:[%s3 + $0x28] sm:$0xff]
    %v183 = vld [vmem:[%s3 + $0x30] sm:$0xff]
    %v184 = vld [vmem:[%s3 + $0x38] sm:$0xff]
    %v185 = vld [vmem:[%s3 + $0x40] sm:$0xff]
    %v186 = vld [vmem:[%s3 + $0x48] sm:$0xff]
    %v187 = vld [vmem:[%s3 + $0x50] sm:$0xff]
    %v188 = vld [vmem:[%s3 + $0x58] sm:$0xff]
    %v189 = vld [vmem:[%s3 + $0x60] sm:$0xff]
    %v190 = vld [vmem:[%s3 + $0x68] sm:$0xff]
    %v191 = vld [vmem:[%s3 + $0x70] sm:$0xff]
    %v192 = vld [vmem:[%s3 + $0x78] sm:$0xff]
    %193 = vmatpush.msra.mxu0 %v192
    %194 = vmatpush.msra.mxu0 %v191
    %195 = vmatpush.msra.mxu0 %v190
    %196 = vmatpush.msra.mxu0 %v189
    %197 = vmatpush.msra.mxu0 %v188
    %198 = vmatpush.msra.mxu0 %v187
    %199 = vmatpush.msra.mxu0 %v186
    %200 = vmatpush.msra.mxu0 %v185
    %201 = vmatpush.msra.mxu0 %v184
    %202 = vmatpush.msra.mxu0 %v183
    %203 = vmatpush.msra.mxu0 %v182
    %204 = vmatpush.msra.mxu0 %v181
    %205 = vmatpush.msra.mxu0 %v180
    %206 = vmatpush.msra.mxu0 %v179
    %207 = vmatpush.msra.mxu0 %v178
    %208 = vmatpush.msra.mxu0 %v177
    %209 = vmatmul.f32.gmra.mxu0 %v176
    %v210 = vpop.f32.mrf.mxu0
    %v211 = vadd.f32 0.0, %v210
    %212 = vdwg.mxu0
    %v213 = vxor.u32 %v211, 2147483648
    %v214 = vmul.f32 %v213, 1.442695
    %v215 = vpow.pop %v214
    %v216 = vadd.f32 %v215, 1.0
    %v217 = vrcp.pop %v216
    %v218 = vmul.f32 %v216, %v217
    %v219 = vsub.f32 1.0, %v218
    %v220 = vmul.f32 %v217, %v219
    %v221 = vadd.f32 %v217, %v220
    %vm222 = vweird.f32 %v216
    %vm223 = vweird.f32 %v217
    %vm224 = vmor %vm222, %vm223
    %v225 = vsel %vm224, %v217, %v221
    %v226 = vand.u32 2147483647, %v216
    %vm227 = vcmp.eq.f32.partialorder %v226, 8.507059e+37
    %v228 = vand.u32 %v216, 2147483648
    %v229 = vor.u32 1.1754944e-38, %v228
    %v230 = vsel %vm227, %v229, %v225
    %v231 = vmul.f32 1.0, %v230
    %232 = vst [vmem:[%s4] sm:$0x3] %v231
  $region25: #{run.14} parent=0 // pred_fallthru
    _
  // Predicated region
  $region26: #{run.14} parent=0 // pred_check
    _
  $region27: #{run.14} parent=0 // pred_check_branch
    %234 = sbr.rel (0) target = $region29
  $region28: #{run.14} parent=0 // pred_region
    _
  $region29: #{run.14} parent=0 // pred_fallthru
    _
  // Predicated region
  $region30: #{run.14} parent=0 // pred_check
    _
  $region31: #{run.14} parent=0 // pred_check_branch
    %236 = sbr.rel (0) target = $region33
  $region32: #{run.14} parent=0 // pred_region
    _
  $region33: #{run.14} parent=0 // pred_fallthru
    _

</llo_original>
